<compile_context>
chip_gen: v5e
topology: v5e:2x2
jax: 0.10.0
libtpu: 0.0.40
codegen_flags: <defaults>
</compile_context>

<pallas_src>
import functools

import jax
import jax.numpy as jnp
from jax import lax
from jax.experimental import pallas as pl
from jax.experimental.pallas import tpu as pltpu

# ----------------------------- static config -------------------------------
RATIO = 0.5
HARRIS_K = 0.04
BN_EPS = 1e-5

# 3x3x3 filter taps (reference only), indexed [kd][kh][kw] (conv3d = cross-correlation).
_SLAB_X = ((-1, 0, 1), (-2, 0, 2), (-1, 0, 1))
SOBEL_X = (_SLAB_X, _SLAB_X, _SLAB_X)
_SLAB_Y = ((-1, -2, -1), (0, 0, 0), (1, 2, 1))
SOBEL_Y = (_SLAB_Y, _SLAB_Y, _SLAB_Y)
SOBEL_Z = (((-1, -1, -1), (-1, -1, -1), (-1, -1, -1)),
           ((0, 0, 0), (0, 0, 0), (0, 0, 0)),
           ((1, 1, 1), (1, 1, 1), (1, 1, 1)))
LAPLACIAN = (((0, 1, 0), (1, -6, 1), (0, 1, 0)),
             ((1, -6, 1), (-6, 24, -6), (1, -6, 1)),
             ((0, 1, 0), (1, -6, 1), (0, 1, 0)))


# ======================= Kernel 1: channel edge scores ======================

def _edge_score_kernel(x_ref, scores_ref, *, C, D, H, W, k_harris):
    """One batch element per grid step.

    x_ref:      (1, C, D, H*W) lane-dense input block (VMEM)
    scores_ref: (1, 2, C)      scores_ref[0,0,c] = Harris, scores_ref[0,1,c] = |lap|
    """
    HW = H * W

    # Per-lane coordinate masks for zero-padded shifts (built once, reused everywhere).
    lane = lax.broadcasted_iota(jnp.int32, (D, HW), 1)
    if (W & (W - 1)) == 0:
        w_in_row = lane & (W - 1)        # power-of-two fast path, no vector division
    else:
        w_in_row = lane % W
    keep_w = {1: w_in_row < (W - 1), -1: w_in_row > 0}
    keep_h = {1: lane < (H - 1) * W, -1: lane >= W}
    zrow = jnp.zeros((1, HW), jnp.float32)

    def shift_w(v, s):                   # out[d,h,w] = v[d,h,w+s], zero outside
        r = pltpu.roll(v, shift=(-s) % HW, axis=1)
        return jnp.where(keep_w[s], r, 0.0)

    def shift_h(v, s):                   # out[d,h,w] = v[d,h+s,w], zero outside
        r = pltpu.roll(v, shift=(-s * W) % HW, axis=1)
        return jnp.where(keep_h[s], r, 0.0)

    def shift_d(v, s):                   # out[d,h,w] = v[d+s,h,w], zero outside
        if s > 0:
            return jnp.concatenate([v[1:, :], zrow], axis=0)
        return jnp.concatenate([zrow, v[:-1, :]], axis=0)

    def box(m):                          # 3x3x3 box filter (zero padded), separable
        t = shift_w(m, 1) + shift_w(m, -1) + m
        t = shift_h(t, 1) + shift_h(t, -1) + t
        t = shift_d(t, 1) + shift_d(t, -1) + t
        return t * (1.0 / 27.0)

    for c in range(C):                   # static unroll; every map is only 2 vregs
        xc = x_ref[0, c]                 # (D, HW)

        sw = shift_w(xc, 1) + shift_w(xc, -1)            # Sw(x)
        sh = shift_h(xc, 1) + shift_h(xc, -1)            # Sh(x)
        sd = shift_d(xc, 1) + shift_d(xc, -1)            # Sd(x)
        corners = shift_h(sw, 1) + shift_h(sw, -1)       # Sh(Sw(x))

        # Laplacian: +-1-depth planes carry the 2-D cross, centre plane carries
        # corners - 6*edges + 24*centre (matches the 27-tap LAPLACIAN table).
        cross = sh + sw - 6.0 * xc
        lap = (shift_d(cross, 1) + shift_d(cross, -1)
               + corners - 6.0 * sh - 6.0 * sw + 24.0 * xc)
        lap_score = jnp.sum(jnp.abs(lap))

        # Separable Sobel: sobel_x = [1,1,1]_d x [1,2,1]_h x [-1,0,1]_w, etc.
        zsum = sd + xc                                   # [1,1,1] along d
        smh = shift_h(zsum, 1) + shift_h(zsum, -1) + 2.0 * zsum
        gx = shift_w(smh, 1) - shift_w(smh, -1)
        smw = shift_w(zsum, 1) + shift_w(zsum, -1) + 2.0 * zsum
        gy = shift_h(smw, 1) - shift_h(smw, -1)
        shw = corners + sh + sw + xc                     # in-plane 3x3 box sum
        gz = shift_d(shw, 1) - shift_d(shw, -1)

        sxx = box(gx * gx)
        syy = box(gy * gy)
        szz = box(gz * gz)
        sxy = box(gx * gy)
        sxz = box(gx * gz)
        syz = box(gy * gz)

        det = (sxx * (syy * szz - syz * syz)
               - sxy * (sxy * szz - syz * sxz)
               + sxz * (sxy * syz - syy * sxz))
        trace = sxx + syy + szz
        harris_score = jnp.sum(det - k_harris * trace * trace)

        scores_ref[0, 0:1, c:c + 1] = harris_score.reshape(1, 1)
        scores_ref[0, 1:2, c:c + 1] = lap_score.reshape(1, 1)


def edge_scores(x):
    """Per-channel Harris / |Laplacian| scores. x: (B, C, D, H, W) -> (B, 2, C)."""
    B, C, D, H, W = x.shape
    x4 = x.reshape(B, C, D, H * W)       # free reshape, lane-dense last dim
    return pl.pallas_call(
        functools.partial(_edge_score_kernel, C=C, D=D, H=H, W=W,
                          k_harris=HARRIS_K),
        out_shape=jax.ShapeDtypeStruct((B, 2, C), jnp.float32),
        grid=(B,),
        in_specs=[pl.BlockSpec((1, C, D, H * W), lambda b: (b, 0, 0, 0))],
        out_specs=pl.BlockSpec((1, 2, C), lambda b: (b, 0, 0)),
        compiler_params=pltpu.CompilerParams(dimension_semantics=("parallel",)),
    )(x4)


# =============== Kernel 2: fused channel gather + BatchNorm3d ===============

def _gather_bn_kernel(idx_ref, *refs, n_batch, n_out, eps):
    """Single grid step: the B*n_out gathered rows were already DMA'd by the
    scalar-prefetch index_maps; apply train-mode BatchNorm3d (batch stats + affine)."""
    del idx_ref                                   # consumed by the index_maps only
    x_refs = refs[:n_batch * n_out]
    gamma_ref, beta_ref, o_ref = refs[n_batch * n_out:]

    for j in range(n_out):
        rows = [x_refs[b * n_out + j][0] for b in range(n_batch)]   # each (1, L)
        inv_n = jnp.float32(1.0 / (n_batch * rows[0].shape[-1]))

        total = rows[0]
        for r in rows[1:]:
            total = total + r
        mean = jnp.sum(total) * inv_n

        ssq = jnp.sum(jnp.square(rows[0] - mean))
        for r in rows[1:]:
            ssq = ssq + jnp.sum(jnp.square(r - mean))
        inv_std = lax.rsqrt(ssq * inv_n + eps)

        scale = inv_std * gamma_ref[j]
        shift = beta_ref[j] - mean * scale
        for b in range(n_batch):
            o_ref[b, j:j + 1, :] = rows[b] * scale + shift


def gather_batchnorm(x, flat_idx, gamma, beta):
    """Fused per-batch channel gather (torch.index_select) + BatchNorm3d (train mode).

    x: (B, C, D, H, W); flat_idx: (B*C_out,) int32 with flat_idx[b*C_out+j] = b*C + c;
    gamma, beta: (C_out,).  Returns (B, C_out, D, H, W).
    """
    B, C, D, H, W = x.shape
    L = D * H * W
    n_rows = int(flat_idx.shape[0])
    C_out = n_rows // B

    x2 = x.reshape(B * C, 1, L)                   # free reshape, lane-dense rows

    def row_map(i, idx_ref, *, r):
        return (idx_ref[r], 0, 0)

    in_specs = [pl.BlockSpec((1, 1, L), functools.partial(row_map, r=r))
                for r in range(n_rows)]
    in_specs += [pl.BlockSpec(memory_space=pltpu.MemorySpace.SMEM),   # gamma
                 pl.BlockSpec(memory_space=pltpu.MemorySpace.SMEM)]   # beta

    out = pl.pallas_call(
        functools.partial(_gather_bn_kernel, n_batch=B, n_out=C_out, eps=BN_EPS),
        out_shape=jax.ShapeDtypeStruct((B, C_out, L), jnp.float32),
        grid_spec=pltpu.PrefetchScalarGridSpec(
            num_scalar_prefetch=1,
            grid=(1,),
            in_specs=in_specs,
            out_specs=pl.BlockSpec((B, C_out, L), lambda i, idx_ref: (0, 0, 0)),
        ),
    )(flat_idx, *([x2] * n_rows), gamma, beta)

    return out.reshape(B, C_out, D, H, W)


# ============================ module forward ================================

@jax.jit
def edge_enhancement_forward(x, bn_gamma, bn_beta):
    B, C, D, H, W = x.shape
    K = int(RATIO * C)

    scores = edge_scores(x)                            # (B, 2, C)
    _, idx_h = lax.top_k(scores[:, 0, :], K)           # Harris branch (torch.topk)
    _, idx_l = lax.top_k(scores[:, 1, :], K)           # Laplacian branch
    idx_all = jnp.concatenate([idx_h, idx_l], axis=1).astype(jnp.int32)   # (B, 2K)
    flat_idx = (jnp.arange(B, dtype=jnp.int32)[:, None] * C + idx_all).reshape(-1)

    return gather_batchnorm(x, flat_idx, bn_gamma, bn_beta)


# ============================ pure-JAX reference ============================

def _conv3(xp, weight, D, H, W):
    out = jnp.zeros(xp.shape[:2] + (D, H, W), jnp.float32)
    for kd in range(3):
        for kh in range(3):
            for kw in range(3):
                w = weight[kd][kh][kw]
                if w == 0:
                    continue
                out = out + float(w) * xp[:, :, kd:kd + D, kh:kh + H, kw:kw + W]
    return out


@jax.jit
def _reference_forward(x, gamma, beta):
    B, C, D, H, W = x.shape
    xp = jnp.pad(x, ((0, 0), (0, 0), (1, 1), (1, 1), (1, 1)))
    gx = _conv3(xp, SOBEL_X, D, H, W)
    gy = _conv3(xp, SOBEL_Y, D, H, W)
    gz = _conv3(xp, SOBEL_Z, D, H, W)
    lap = _conv3(xp, LAPLACIAN, D, H, W)

    def box(m):
        mp = jnp.pad(m, ((0, 0), (0, 0), (1, 1), (1, 1), (1, 1)))
        acc = jnp.zeros_like(m)
        for kd in range(3):
            for kh in range(3):
                for kw in range(3):
                    acc = acc + mp[:, :, kd:kd + D, kh:kh + H, kw:kw + W]
        return acc / 27.0

    sxx, syy, szz = box(gx * gx), box(gy * gy), box(gz * gz)
    sxy, sxz, syz = box(gx * gy), box(gx * gz), box(gy * gz)
    det = (sxx * (syy * szz - syz * syz)
           - sxy * (sxy * szz - syz * sxz)
           + sxz * (sxy * syz - syy * sxz))
    trace = sxx + syy + szz
    p_har = jnp.sum(det - HARRIS_K * trace * trace, axis=(-1, -2, -3))
    p_lap = jnp.sum(jnp.abs(lap), axis=(-1, -2, -3))

    K = int(RATIO * C)
    _, ih = lax.top_k(p_har, K)
    _, il = lax.top_k(p_lap, K)
    idx = jnp.concatenate([ih, il], axis=1)
    sel = jnp.take_along_axis(x, idx[:, :, None, None, None], axis=1)

    mean = jnp.mean(sel, axis=(0, 2, 3, 4), keepdims=True)
    var = jnp.mean(jnp.square(sel - mean), axis=(0, 2, 3, 4), keepdims=True)
    return ((sel - mean) / jnp.sqrt(var + BN_EPS)
            * gamma.reshape(1, -1, 1, 1, 1) + beta.reshape(1, -1, 1, 1, 1))


# ================================== main ====================================

if __name__ == "__main__":
    key = jax.random.PRNGKey(0)
    kx, kg, kb = jax.random.split(key, 3)

    B, C, D, H, W = 2, 4, 8, 16, 16          # ratio=0.5 -> 2+2 selected channels = C
    x = jax.random.normal(kx, (B, C, D, H, W), dtype=jnp.float32)
    bn_gamma = 1.0 + 0.05 * jax.random.normal(kg, (C,), dtype=jnp.float32)
    bn_beta = 0.05 * jax.random.normal(kb, (C,), dtype=jnp.float32)

    out = jax.block_until_ready(edge_enhancement_forward(x, bn_gamma, bn_beta))

    assert out.shape == (B, C, D, H, W), out.shape
    assert bool(jnp.all(jnp.isfinite(out)))

    ref = jax.block_until_ready(_reference_forward(x, bn_gamma, bn_beta))
    err = float(jnp.max(jnp.abs(out - ref)))
    assert err < 1e-3, f"max abs err vs reference: {err}"

    print("KERNEL_OK")
</pallas_src>

<mosaic_0001>
module attributes {stable_mosaic.version = 11 : i64} {
  func.func @_edge_score_kernel(%arg0: i32, %arg1: memref<1x4x8x256xf32, #tpu.memory_space<vmem>>, %arg2: memref<1x2x4xf32, #tpu.memory_space<vmem>>) attributes {dimension_semantics = [#tpu.dimension_semantics<parallel>], iteration_bounds = array<i64: 2>, scalar_prefetch = 0 : i64, scratch_operands = 0 : i64, tpu.core_type = #tpu.core_type<tc>, window_params = [{transform_indices = @transform_0, window_bounds = array<i64: 1, 4, 8, 256>}, {transform_indices = @transform_1, window_bounds = array<i64: 1, 2, 4>}]} {
    %0 = tpu.iota {dimensions = array<i32: 1>} : vector<8x256xi32>
    %c15_i32 = arith.constant 15 : i32
    %1 = vector.broadcast %c15_i32 : i32 to vector<8x256xi32>
    %2 = arith.andi %0, %1 : vector<8x256xi32>
    %c15_i32_0 = arith.constant 15 : i32
    %3 = vector.broadcast %c15_i32_0 : i32 to vector<8x256xi32>
    %4 = arith.cmpi slt, %2, %3 : vector<8x256xi32>
    %c0_i32 = arith.constant 0 : i32
    %5 = vector.broadcast %c0_i32 : i32 to vector<8x256xi32>
    %6 = arith.cmpi sgt, %2, %5 : vector<8x256xi32>
    %c240_i32 = arith.constant 240 : i32
    %7 = vector.broadcast %c240_i32 : i32 to vector<8x256xi32>
    %8 = arith.cmpi slt, %0, %7 : vector<8x256xi32>
    %c16_i32 = arith.constant 16 : i32
    %9 = vector.broadcast %c16_i32 : i32 to vector<8x256xi32>
    %10 = arith.cmpi sge, %0, %9 : vector<8x256xi32>
    %cst = arith.constant 0.000000e+00 : f32
    %11 = vector.broadcast %cst : f32 to vector<1x256xf32>
    %c0 = arith.constant 0 : index
    %c0_1 = arith.constant 0 : index
    %c0_2 = arith.constant 0 : index
    %c0_3 = arith.constant 0 : index
    %12 = vector.load %arg1[%c0, %c0_1, %c0_2, %c0_3] : memref<1x4x8x256xf32, #tpu.memory_space<vmem>>, vector<1x1x8x256xf32>
    %13 = vector.shape_cast %12 : vector<1x1x8x256xf32> to vector<8x256xf32>
    %c255_i32 = arith.constant 255 : i32
    %14 = tpu.dynamic_rotate %13 by %c255_i32 dim 1 : vector<8x256xf32>, i32 -> vector<8x256xf32>
    %cst_4 = arith.constant 0.000000e+00 : f32
    %15 = vector.broadcast %cst_4 : f32 to vector<8x256xf32>
    %16 = arith.select %4, %14, %15 : vector<8x256xi1>, vector<8x256xf32>
    %c1_i32 = arith.constant 1 : i32
    %17 = tpu.dynamic_rotate %13 by %c1_i32 dim 1 : vector<8x256xf32>, i32 -> vector<8x256xf32>
    %cst_5 = arith.constant 0.000000e+00 : f32
    %18 = vector.broadcast %cst_5 : f32 to vector<8x256xf32>
    %19 = arith.select %6, %17, %18 : vector<8x256xi1>, vector<8x256xf32>
    %20 = arith.addf %16, %19 : vector<8x256xf32>
    %c240_i32_6 = arith.constant 240 : i32
    %21 = tpu.dynamic_rotate %13 by %c240_i32_6 dim 1 : vector<8x256xf32>, i32 -> vector<8x256xf32>
    %cst_7 = arith.constant 0.000000e+00 : f32
    %22 = vector.broadcast %cst_7 : f32 to vector<8x256xf32>
    %23 = arith.select %8, %21, %22 : vector<8x256xi1>, vector<8x256xf32>
    %c16_i32_8 = arith.constant 16 : i32
    %24 = tpu.dynamic_rotate %13 by %c16_i32_8 dim 1 : vector<8x256xf32>, i32 -> vector<8x256xf32>
    %cst_9 = arith.constant 0.000000e+00 : f32
    %25 = vector.broadcast %cst_9 : f32 to vector<8x256xf32>
    %26 = arith.select %10, %24, %25 : vector<8x256xi1>, vector<8x256xf32>
    %27 = arith.addf %23, %26 : vector<8x256xf32>
    %28 = vector.extract_strided_slice %13 {offsets = [1, 0], sizes = [7, 256], strides = [1, 1]} : vector<8x256xf32> to vector<7x256xf32>
    %29 = tpu.concatenate %28, %11 in 0 : vector<7x256xf32>, vector<1x256xf32> -> vector<8x256xf32>
    %30 = vector.extract_strided_slice %13 {offsets = [0, 0], sizes = [7, 256], strides = [1, 1]} : vector<8x256xf32> to vector<7x256xf32>
    %31 = tpu.concatenate %11, %30 in 0 : vector<1x256xf32>, vector<7x256xf32> -> vector<8x256xf32>
    %32 = arith.addf %29, %31 : vector<8x256xf32>
    %c240_i32_10 = arith.constant 240 : i32
    %33 = tpu.dynamic_rotate %20 by %c240_i32_10 dim 1 : vector<8x256xf32>, i32 -> vector<8x256xf32>
    %cst_11 = arith.constant 0.000000e+00 : f32
    %34 = vector.broadcast %cst_11 : f32 to vector<8x256xf32>
    %35 = arith.select %8, %33, %34 : vector<8x256xi1>, vector<8x256xf32>
    %c16_i32_12 = arith.constant 16 : i32
    %36 = tpu.dynamic_rotate %20 by %c16_i32_12 dim 1 : vector<8x256xf32>, i32 -> vector<8x256xf32>
    %cst_13 = arith.constant 0.000000e+00 : f32
    %37 = vector.broadcast %cst_13 : f32 to vector<8x256xf32>
    %38 = arith.select %10, %36, %37 : vector<8x256xi1>, vector<8x256xf32>
    %39 = arith.addf %35, %38 : vector<8x256xf32>
    %40 = arith.addf %27, %20 : vector<8x256xf32>
    %cst_14 = arith.constant 6.000000e+00 : f32
    %41 = vector.broadcast %cst_14 : f32 to vector<8x256xf32>
    %42 = arith.mulf %41, %13 : vector<8x256xf32>
    %43 = arith.subf %40, %42 : vector<8x256xf32>
    %44 = vector.extract_strided_slice %43 {offsets = [1, 0], sizes = [7, 256], strides = [1, 1]} : vector<8x256xf32> to vector<7x256xf32>
    %45 = tpu.concatenate %44, %11 in 0 : vector<7x256xf32>, vector<1x256xf32> -> vector<8x256xf32>
    %46 = vector.extract_strided_slice %43 {offsets = [0, 0], sizes = [7, 256], strides = [1, 1]} : vector<8x256xf32> to vector<7x256xf32>
    %47 = tpu.concatenate %11, %46 in 0 : vector<1x256xf32>, vector<7x256xf32> -> vector<8x256xf32>
    %48 = arith.addf %45, %47 : vector<8x256xf32>
    %49 = arith.addf %48, %39 : vector<8x256xf32>
    %cst_15 = arith.constant 6.000000e+00 : f32
    %50 = vector.broadcast %cst_15 : f32 to vector<8x256xf32>
    %51 = arith.mulf %50, %27 : vector<8x256xf32>
    %52 = arith.subf %49, %51 : vector<8x256xf32>
    %cst_16 = arith.constant 6.000000e+00 : f32
    %53 = vector.broadcast %cst_16 : f32 to vector<8x256xf32>
    %54 = arith.mulf %53, %20 : vector<8x256xf32>
    %55 = arith.subf %52, %54 : vector<8x256xf32>
    %cst_17 = arith.constant 2.400000e+01 : f32
    %56 = vector.broadcast %cst_17 : f32 to vector<8x256xf32>
    %57 = arith.mulf %56, %13 : vector<8x256xf32>
    %58 = arith.addf %55, %57 : vector<8x256xf32>
    %59 = math.absf %58 : vector<8x256xf32>
    %60 = vector.shape_cast %59 : vector<8x256xf32> to vector<1x8x256xf32>
    %cst_18 = arith.constant dense<0.000000e+00> : vector<1xf32>
    %61 = vector.multi_reduction <add>, %60, %cst_18 [1, 2] : vector<1x8x256xf32> to vector<1xf32>
    %62 = vector.shape_cast %61 : vector<1xf32> to vector<1x1x1xf32>
    %63 = vector.extract %62[0, 0, 0] : f32 from vector<1x1x1xf32>
    %64 = arith.addf %32, %13 : vector<8x256xf32>
    %c240_i32_19 = arith.constant 240 : i32
    %65 = tpu.dynamic_rotate %64 by %c240_i32_19 dim 1 : vector<8x256xf32>, i32 -> vector<8x256xf32>
    %cst_20 = arith.constant 0.000000e+00 : f32
    %66 = vector.broadcast %cst_20 : f32 to vector<8x256xf32>
    %67 = arith.select %8, %65, %66 : vector<8x256xi1>, vector<8x256xf32>
    %c16_i32_21 = arith.constant 16 : i32
    %68 = tpu.dynamic_rotate %64 by %c16_i32_21 dim 1 : vector<8x256xf32>, i32 -> vector<8x256xf32>
    %cst_22 = arith.constant 0.000000e+00 : f32
    %69 = vector.broadcast %cst_22 : f32 to vector<8x256xf32>
    %70 = arith.select %10, %68, %69 : vector<8x256xi1>, vector<8x256xf32>
    %71 = arith.addf %67, %70 : vector<8x256xf32>
    %cst_23 = arith.constant 2.000000e+00 : f32
    %72 = vector.broadcast %cst_23 : f32 to vector<8x256xf32>
    %73 = arith.mulf %72, %64 : vector<8x256xf32>
    %74 = arith.addf %71, %73 : vector<8x256xf32>
    %c255_i32_24 = arith.constant 255 : i32
    %75 = tpu.dynamic_rotate %74 by %c255_i32_24 dim 1 : vector<8x256xf32>, i32 -> vector<8x256xf32>
    %cst_25 = arith.constant 0.000000e+00 : f32
    %76 = vector.broadcast %cst_25 : f32 to vector<8x256xf32>
    %77 = arith.select %4, %75, %76 : vector<8x256xi1>, vector<8x256xf32>
    %c1_i32_26 = arith.constant 1 : i32
    %78 = tpu.dynamic_rotate %74 by %c1_i32_26 dim 1 : vector<8x256xf32>, i32 -> vector<8x256xf32>
    %cst_27 = arith.constant 0.000000e+00 : f32
    %79 = vector.broadcast %cst_27 : f32 to vector<8x256xf32>
    %80 = arith.select %6, %78, %79 : vector<8x256xi1>, vector<8x256xf32>
    %81 = arith.subf %77, %80 : vector<8x256xf32>
    %c255_i32_28 = arith.constant 255 : i32
    %82 = tpu.dynamic_rotate %64 by %c255_i32_28 dim 1 : vector<8x256xf32>, i32 -> vector<8x256xf32>
    %cst_29 = arith.constant 0.000000e+00 : f32
    %83 = vector.broadcast %cst_29 : f32 to vector<8x256xf32>
    %84 = arith.select %4, %82, %83 : vector<8x256xi1>, vector<8x256xf32>
    %c1_i32_30 = arith.constant 1 : i32
    %85 = tpu.dynamic_rotate %64 by %c1_i32_30 dim 1 : vector<8x256xf32>, i32 -> vector<8x256xf32>
    %cst_31 = arith.constant 0.000000e+00 : f32
    %86 = vector.broadcast %cst_31 : f32 to vector<8x256xf32>
    %87 = arith.select %6, %85, %86 : vector<8x256xi1>, vector<8x256xf32>
    %88 = arith.addf %84, %87 : vector<8x256xf32>
    %cst_32 = arith.constant 2.000000e+00 : f32
    %89 = vector.broadcast %cst_32 : f32 to vector<8x256xf32>
    %90 = arith.mulf %89, %64 : vector<8x256xf32>
    %91 = arith.addf %88, %90 : vector<8x256xf32>
    %c240_i32_33 = arith.constant 240 : i32
    %92 = tpu.dynamic_rotate %91 by %c240_i32_33 dim 1 : vector<8x256xf32>, i32 -> vector<8x256xf32>
    %cst_34 = arith.constant 0.000000e+00 : f32
    %93 = vector.broadcast %cst_34 : f32 to vector<8x256xf32>
    %94 = arith.select %8, %92, %93 : vector<8x256xi1>, vector<8x256xf32>
    %c16_i32_35 = arith.constant 16 : i32
    %95 = tpu.dynamic_rotate %91 by %c16_i32_35 dim 1 : vector<8x256xf32>, i32 -> vector<8x256xf32>
    %cst_36 = arith.constant 0.000000e+00 : f32
    %96 = vector.broadcast %cst_36 : f32 to vector<8x256xf32>
    %97 = arith.select %10, %95, %96 : vector<8x256xi1>, vector<8x256xf32>
    %98 = arith.subf %94, %97 : vector<8x256xf32>
    %99 = arith.addf %39, %27 : vector<8x256xf32>
    %100 = arith.addf %99, %20 : vector<8x256xf32>
    %101 = arith.addf %100, %13 : vector<8x256xf32>
    %102 = vector.extract_strided_slice %101 {offsets = [1, 0], sizes = [7, 256], strides = [1, 1]} : vector<8x256xf32> to vector<7x256xf32>
    %103 = tpu.concatenate %102, %11 in 0 : vector<7x256xf32>, vector<1x256xf32> -> vector<8x256xf32>
    %104 = vector.extract_strided_slice %101 {offsets = [0, 0], sizes = [7, 256], strides = [1, 1]} : vector<8x256xf32> to vector<7x256xf32>
    %105 = tpu.concatenate %11, %104 in 0 : vector<1x256xf32>, vector<7x256xf32> -> vector<8x256xf32>
    %106 = arith.subf %103, %105 : vector<8x256xf32>
    %107 = arith.mulf %81, %81 : vector<8x256xf32>
    %c255_i32_37 = arith.constant 255 : i32
    %108 = tpu.dynamic_rotate %107 by %c255_i32_37 dim 1 : vector<8x256xf32>, i32 -> vector<8x256xf32>
    %cst_38 = arith.constant 0.000000e+00 : f32
    %109 = vector.broadcast %cst_38 : f32 to vector<8x256xf32>
    %110 = arith.select %4, %108, %109 : vector<8x256xi1>, vector<8x256xf32>
    %c1_i32_39 = arith.constant 1 : i32
    %111 = tpu.dynamic_rotate %107 by %c1_i32_39 dim 1 : vector<8x256xf32>, i32 -> vector<8x256xf32>
    %cst_40 = arith.constant 0.000000e+00 : f32
    %112 = vector.broadcast %cst_40 : f32 to vector<8x256xf32>
    %113 = arith.select %6, %111, %112 : vector<8x256xi1>, vector<8x256xf32>
    %114 = arith.addf %110, %113 : vector<8x256xf32>
    %115 = arith.addf %114, %107 : vector<8x256xf32>
    %c240_i32_41 = arith.constant 240 : i32
    %116 = tpu.dynamic_rotate %115 by %c240_i32_41 dim 1 : vector<8x256xf32>, i32 -> vector<8x256xf32>
    %cst_42 = arith.constant 0.000000e+00 : f32
    %117 = vector.broadcast %cst_42 : f32 to vector<8x256xf32>
    %118 = arith.select %8, %116, %117 : vector<8x256xi1>, vector<8x256xf32>
    %c16_i32_43 = arith.constant 16 : i32
    %119 = tpu.dynamic_rotate %115 by %c16_i32_43 dim 1 : vector<8x256xf32>, i32 -> vector<8x256xf32>
    %cst_44 = arith.constant 0.000000e+00 : f32
    %120 = vector.broadcast %cst_44 : f32 to vector<8x256xf32>
    %121 = arith.select %10, %119, %120 : vector<8x256xi1>, vector<8x256xf32>
    %122 = arith.addf %118, %121 : vector<8x256xf32>
    %123 = arith.addf %122, %115 : vector<8x256xf32>
    %124 = vector.extract_strided_slice %123 {offsets = [1, 0], sizes = [7, 256], strides = [1, 1]} : vector<8x256xf32> to vector<7x256xf32>
    %125 = tpu.concatenate %124, %11 in 0 : vector<7x256xf32>, vector<1x256xf32> -> vector<8x256xf32>
    %126 = vector.extract_strided_slice %123 {offsets = [0, 0], sizes = [7, 256], strides = [1, 1]} : vector<8x256xf32> to vector<7x256xf32>
    %127 = tpu.concatenate %11, %126 in 0 : vector<1x256xf32>, vector<7x256xf32> -> vector<8x256xf32>
    %128 = arith.addf %125, %127 : vector<8x256xf32>
    %129 = arith.addf %128, %123 : vector<8x256xf32>
    %cst_45 = arith.constant 0.0370370373 : f32
    %130 = vector.broadcast %cst_45 : f32 to vector<8x256xf32>
    %131 = arith.mulf %129, %130 : vector<8x256xf32>
    %132 = arith.mulf %98, %98 : vector<8x256xf32>
    %c255_i32_46 = arith.constant 255 : i32
    %133 = tpu.dynamic_rotate %132 by %c255_i32_46 dim 1 : vector<8x256xf32>, i32 -> vector<8x256xf32>
    %cst_47 = arith.constant 0.000000e+00 : f32
    %134 = vector.broadcast %cst_47 : f32 to vector<8x256xf32>
    %135 = arith.select %4, %133, %134 : vector<8x256xi1>, vector<8x256xf32>
    %c1_i32_48 = arith.constant 1 : i32
    %136 = tpu.dynamic_rotate %132 by %c1_i32_48 dim 1 : vector<8x256xf32>, i32 -> vector<8x256xf32>
    %cst_49 = arith.constant 0.000000e+00 : f32
    %137 = vector.broadcast %cst_49 : f32 to vector<8x256xf32>
    %138 = arith.select %6, %136, %137 : vector<8x256xi1>, vector<8x256xf32>
    %139 = arith.addf %135, %138 : vector<8x256xf32>
    %140 = arith.addf %139, %132 : vector<8x256xf32>
    %c240_i32_50 = arith.constant 240 : i32
    %141 = tpu.dynamic_rotate %140 by %c240_i32_50 dim 1 : vector<8x256xf32>, i32 -> vector<8x256xf32>
    %cst_51 = arith.constant 0.000000e+00 : f32
    %142 = vector.broadcast %cst_51 : f32 to vector<8x256xf32>
    %143 = arith.select %8, %141, %142 : vector<8x256xi1>, vector<8x256xf32>
    %c16_i32_52 = arith.constant 16 : i32
    %144 = tpu.dynamic_rotate %140 by %c16_i32_52 dim 1 : vector<8x256xf32>, i32 -> vector<8x256xf32>
    %cst_53 = arith.constant 0.000000e+00 : f32
    %145 = vector.broadcast %cst_53 : f32 to vector<8x256xf32>
    %146 = arith.select %10, %144, %145 : vector<8x256xi1>, vector<8x256xf32>
    %147 = arith.addf %143, %146 : vector<8x256xf32>
    %148 = arith.addf %147, %140 : vector<8x256xf32>
    %149 = vector.extract_strided_slice %148 {offsets = [1, 0], sizes = [7, 256], strides = [1, 1]} : vector<8x256xf32> to vector<7x256xf32>
    %150 = tpu.concatenate %149, %11 in 0 : vector<7x256xf32>, vector<1x256xf32> -> vector<8x256xf32>
    %151 = vector.extract_strided_slice %148 {offsets = [0, 0], sizes = [7, 256], strides = [1, 1]} : vector<8x256xf32> to vector<7x256xf32>
    %152 = tpu.concatenate %11, %151 in 0 : vector<1x256xf32>, vector<7x256xf32> -> vector<8x256xf32>
    %153 = arith.addf %150, %152 : vector<8x256xf32>
    %154 = arith.addf %153, %148 : vector<8x256xf32>
    %cst_54 = arith.constant 0.0370370373 : f32
    %155 = vector.broadcast %cst_54 : f32 to vector<8x256xf32>
    %156 = arith.mulf %154, %155 : vector<8x256xf32>
    %157 = arith.mulf %106, %106 : vector<8x256xf32>
    %c255_i32_55 = arith.constant 255 : i32
    %158 = tpu.dynamic_rotate %157 by %c255_i32_55 dim 1 : vector<8x256xf32>, i32 -> vector<8x256xf32>
    %cst_56 = arith.constant 0.000000e+00 : f32
    %159 = vector.broadcast %cst_56 : f32 to vector<8x256xf32>
    %160 = arith.select %4, %158, %159 : vector<8x256xi1>, vector<8x256xf32>
    %c1_i32_57 = arith.constant 1 : i32
    %161 = tpu.dynamic_rotate %157 by %c1_i32_57 dim 1 : vector<8x256xf32>, i32 -> vector<8x256xf32>
    %cst_58 = arith.constant 0.000000e+00 : f32
    %162 = vector.broadcast %cst_58 : f32 to vector<8x256xf32>
    %163 = arith.select %6, %161, %162 : vector<8x256xi1>, vector<8x256xf32>
    %164 = arith.addf %160, %163 : vector<8x256xf32>
    %165 = arith.addf %164, %157 : vector<8x256xf32>
    %c240_i32_59 = arith.constant 240 : i32
    %166 = tpu.dynamic_rotate %165 by %c240_i32_59 dim 1 : vector<8x256xf32>, i32 -> vector<8x256xf32>
    %cst_60 = arith.constant 0.000000e+00 : f32
    %167 = vector.broadcast %cst_60 : f32 to vector<8x256xf32>
    %168 = arith.select %8, %166, %167 : vector<8x256xi1>, vector<8x256xf32>
    %c16_i32_61 = arith.constant 16 : i32
    %169 = tpu.dynamic_rotate %165 by %c16_i32_61 dim 1 : vector<8x256xf32>, i32 -> vector<8x256xf32>
    %cst_62 = arith.constant 0.000000e+00 : f32
    %170 = vector.broadcast %cst_62 : f32 to vector<8x256xf32>
    %171 = arith.select %10, %169, %170 : vector<8x256xi1>, vector<8x256xf32>
    %172 = arith.addf %168, %171 : vector<8x256xf32>
    %173 = arith.addf %172, %165 : vector<8x256xf32>
    %174 = vector.extract_strided_slice %173 {offsets = [1, 0], sizes = [7, 256], strides = [1, 1]} : vector<8x256xf32> to vector<7x256xf32>
    %175 = tpu.concatenate %174, %11 in 0 : vector<7x256xf32>, vector<1x256xf32> -> vector<8x256xf32>
    %176 = vector.extract_strided_slice %173 {offsets = [0, 0], sizes = [7, 256], strides = [1, 1]} : vector<8x256xf32> to vector<7x256xf32>
    %177 = tpu.concatenate %11, %176 in 0 : vector<1x256xf32>, vector<7x256xf32> -> vector<8x256xf32>
    %178 = arith.addf %175, %177 : vector<8x256xf32>
    %179 = arith.addf %178, %173 : vector<8x256xf32>
    %cst_63 = arith.constant 0.0370370373 : f32
    %180 = vector.broadcast %cst_63 : f32 to vector<8x256xf32>
    %181 = arith.mulf %179, %180 : vector<8x256xf32>
    %182 = arith.mulf %81, %98 : vector<8x256xf32>
    %c255_i32_64 = arith.constant 255 : i32
    %183 = tpu.dynamic_rotate %182 by %c255_i32_64 dim 1 : vector<8x256xf32>, i32 -> vector<8x256xf32>
    %cst_65 = arith.constant 0.000000e+00 : f32
    %184 = vector.broadcast %cst_65 : f32 to vector<8x256xf32>
    %185 = arith.select %4, %183, %184 : vector<8x256xi1>, vector<8x256xf32>
    %c1_i32_66 = arith.constant 1 : i32
    %186 = tpu.dynamic_rotate %182 by %c1_i32_66 dim 1 : vector<8x256xf32>, i32 -> vector<8x256xf32>
    %cst_67 = arith.constant 0.000000e+00 : f32
    %187 = vector.broadcast %cst_67 : f32 to vector<8x256xf32>
    %188 = arith.select %6, %186, %187 : vector<8x256xi1>, vector<8x256xf32>
    %189 = arith.addf %185, %188 : vector<8x256xf32>
    %190 = arith.addf %189, %182 : vector<8x256xf32>
    %c240_i32_68 = arith.constant 240 : i32
    %191 = tpu.dynamic_rotate %190 by %c240_i32_68 dim 1 : vector<8x256xf32>, i32 -> vector<8x256xf32>
    %cst_69 = arith.constant 0.000000e+00 : f32
    %192 = vector.broadcast %cst_69 : f32 to vector<8x256xf32>
    %193 = arith.select %8, %191, %192 : vector<8x256xi1>, vector<8x256xf32>
    %c16_i32_70 = arith.constant 16 : i32
    %194 = tpu.dynamic_rotate %190 by %c16_i32_70 dim 1 : vector<8x256xf32>, i32 -> vector<8x256xf32>
    %cst_71 = arith.constant 0.000000e+00 : f32
    %195 = vector.broadcast %cst_71 : f32 to vector<8x256xf32>
    %196 = arith.select %10, %194, %195 : vector<8x256xi1>, vector<8x256xf32>
    %197 = arith.addf %193, %196 : vector<8x256xf32>
    %198 = arith.addf %197, %190 : vector<8x256xf32>
    %199 = vector.extract_strided_slice %198 {offsets = [1, 0], sizes = [7, 256], strides = [1, 1]} : vector<8x256xf32> to vector<7x256xf32>
    %200 = tpu.concatenate %199, %11 in 0 : vector<7x256xf32>, vector<1x256xf32> -> vector<8x256xf32>
    %201 = vector.extract_strided_slice %198 {offsets = [0, 0], sizes = [7, 256], strides = [1, 1]} : vector<8x256xf32> to vector<7x256xf32>
    %202 = tpu.concatenate %11, %201 in 0 : vector<1x256xf32>, vector<7x256xf32> -> vector<8x256xf32>
    %203 = arith.addf %200, %202 : vector<8x256xf32>
    %204 = arith.addf %203, %198 : vector<8x256xf32>
    %cst_72 = arith.constant 0.0370370373 : f32
    %205 = vector.broadcast %cst_72 : f32 to vector<8x256xf32>
    %206 = arith.mulf %204, %205 : vector<8x256xf32>
    %207 = arith.mulf %81, %106 : vector<8x256xf32>
    %c255_i32_73 = arith.constant 255 : i32
    %208 = tpu.dynamic_rotate %207 by %c255_i32_73 dim 1 : vector<8x256xf32>, i32 -> vector<8x256xf32>
    %cst_74 = arith.constant 0.000000e+00 : f32
    %209 = vector.broadcast %cst_74 : f32 to vector<8x256xf32>
    %210 = arith.select %4, %208, %209 : vector<8x256xi1>, vector<8x256xf32>
    %c1_i32_75 = arith.constant 1 : i32
    %211 = tpu.dynamic_rotate %207 by %c1_i32_75 dim 1 : vector<8x256xf32>, i32 -> vector<8x256xf32>
    %cst_76 = arith.constant 0.000000e+00 : f32
    %212 = vector.broadcast %cst_76 : f32 to vector<8x256xf32>
    %213 = arith.select %6, %211, %212 : vector<8x256xi1>, vector<8x256xf32>
    %214 = arith.addf %210, %213 : vector<8x256xf32>
    %215 = arith.addf %214, %207 : vector<8x256xf32>
    %c240_i32_77 = arith.constant 240 : i32
    %216 = tpu.dynamic_rotate %215 by %c240_i32_77 dim 1 : vector<8x256xf32>, i32 -> vector<8x256xf32>
    %cst_78 = arith.constant 0.000000e+00 : f32
    %217 = vector.broadcast %cst_78 : f32 to vector<8x256xf32>
    %218 = arith.select %8, %216, %217 : vector<8x256xi1>, vector<8x256xf32>
    %c16_i32_79 = arith.constant 16 : i32
    %219 = tpu.dynamic_rotate %215 by %c16_i32_79 dim 1 : vector<8x256xf32>, i32 -> vector<8x256xf32>
    %cst_80 = arith.constant 0.000000e+00 : f32
    %220 = vector.broadcast %cst_80 : f32 to vector<8x256xf32>
    %221 = arith.select %10, %219, %220 : vector<8x256xi1>, vector<8x256xf32>
    %222 = arith.addf %218, %221 : vector<8x256xf32>
    %223 = arith.addf %222, %215 : vector<8x256xf32>
    %224 = vector.extract_strided_slice %223 {offsets = [1, 0], sizes = [7, 256], strides = [1, 1]} : vector<8x256xf32> to vector<7x256xf32>
    %225 = tpu.concatenate %224, %11 in 0 : vector<7x256xf32>, vector<1x256xf32> -> vector<8x256xf32>
    %226 = vector.extract_strided_slice %223 {offsets = [0, 0], sizes = [7, 256], strides = [1, 1]} : vector<8x256xf32> to vector<7x256xf32>
    %227 = tpu.concatenate %11, %226 in 0 : vector<1x256xf32>, vector<7x256xf32> -> vector<8x256xf32>
    %228 = arith.addf %225, %227 : vector<8x256xf32>
    %229 = arith.addf %228, %223 : vector<8x256xf32>
    %cst_81 = arith.constant 0.0370370373 : f32
    %230 = vector.broadcast %cst_81 : f32 to vector<8x256xf32>
    %231 = arith.mulf %229, %230 : vector<8x256xf32>
    %232 = arith.mulf %98, %106 : vector<8x256xf32>
    %c255_i32_82 = arith.constant 255 : i32
    %233 = tpu.dynamic_rotate %232 by %c255_i32_82 dim 1 : vector<8x256xf32>, i32 -> vector<8x256xf32>
    %cst_83 = arith.constant 0.000000e+00 : f32
    %234 = vector.broadcast %cst_83 : f32 to vector<8x256xf32>
    %235 = arith.select %4, %233, %234 : vector<8x256xi1>, vector<8x256xf32>
    %c1_i32_84 = arith.constant 1 : i32
    %236 = tpu.dynamic_rotate %232 by %c1_i32_84 dim 1 : vector<8x256xf32>, i32 -> vector<8x256xf32>
    %cst_85 = arith.constant 0.000000e+00 : f32
    %237 = vector.broadcast %cst_85 : f32 to vector<8x256xf32>
    %238 = arith.select %6, %236, %237 : vector<8x256xi1>, vector<8x256xf32>
    %239 = arith.addf %235, %238 : vector<8x256xf32>
    %240 = arith.addf %239, %232 : vector<8x256xf32>
    %c240_i32_86 = arith.constant 240 : i32
    %241 = tpu.dynamic_rotate %240 by %c240_i32_86 dim 1 : vector<8x256xf32>, i32 -> vector<8x256xf32>
    %cst_87 = arith.constant 0.000000e+00 : f32
    %242 = vector.broadcast %cst_87 : f32 to vector<8x256xf32>
    %243 = arith.select %8, %241, %242 : vector<8x256xi1>, vector<8x256xf32>
    %c16_i32_88 = arith.constant 16 : i32
    %244 = tpu.dynamic_rotate %240 by %c16_i32_88 dim 1 : vector<8x256xf32>, i32 -> vector<8x256xf32>
    %cst_89 = arith.constant 0.000000e+00 : f32
    %245 = vector.broadcast %cst_89 : f32 to vector<8x256xf32>
    %246 = arith.select %10, %244, %245 : vector<8x256xi1>, vector<8x256xf32>
    %247 = arith.addf %243, %246 : vector<8x256xf32>
    %248 = arith.addf %247, %240 : vector<8x256xf32>
    %249 = vector.extract_strided_slice %248 {offsets = [1, 0], sizes = [7, 256], strides = [1, 1]} : vector<8x256xf32> to vector<7x256xf32>
    %250 = tpu.concatenate %249, %11 in 0 : vector<7x256xf32>, vector<1x256xf32> -> vector<8x256xf32>
    %251 = vector.extract_strided_slice %248 {offsets = [0, 0], sizes = [7, 256], strides = [1, 1]} : vector<8x256xf32> to vector<7x256xf32>
    %252 = tpu.concatenate %11, %251 in 0 : vector<1x256xf32>, vector<7x256xf32> -> vector<8x256xf32>
    %253 = arith.addf %250, %252 : vector<8x256xf32>
    %254 = arith.addf %253, %248 : vector<8x256xf32>
    %cst_90 = arith.constant 0.0370370373 : f32
    %255 = vector.broadcast %cst_90 : f32 to vector<8x256xf32>
    %256 = arith.mulf %254, %255 : vector<8x256xf32>
    %257 = arith.mulf %156, %181 : vector<8x256xf32>
    %258 = arith.mulf %256, %256 : vector<8x256xf32>
    %259 = arith.subf %257, %258 : vector<8x256xf32>
    %260 = arith.mulf %131, %259 : vector<8x256xf32>
    %261 = arith.mulf %206, %181 : vector<8x256xf32>
    %262 = arith.mulf %256, %231 : vector<8x256xf32>
    %263 = arith.subf %261, %262 : vector<8x256xf32>
    %264 = arith.mulf %206, %263 : vector<8x256xf32>
    %265 = arith.subf %260, %264 : vector<8x256xf32>
    %266 = arith.mulf %206, %256 : vector<8x256xf32>
    %267 = arith.mulf %156, %231 : vector<8x256xf32>
    %268 = arith.subf %266, %267 : vector<8x256xf32>
    %269 = arith.mulf %231, %268 : vector<8x256xf32>
    %270 = arith.addf %265, %269 : vector<8x256xf32>
    %271 = arith.addf %131, %156 : vector<8x256xf32>
    %272 = arith.addf %271, %181 : vector<8x256xf32>
    %cst_91 = arith.constant 4.000000e-02 : f32
    %273 = vector.broadcast %cst_91 : f32 to vector<8x256xf32>
    %274 = arith.mulf %273, %272 : vector<8x256xf32>
    %275 = arith.mulf %274, %272 : vector<8x256xf32>
    %276 = arith.subf %270, %275 : vector<8x256xf32>
    %277 = vector.shape_cast %276 : vector<8x256xf32> to vector<1x8x256xf32>
    %cst_92 = arith.constant dense<0.000000e+00> : vector<1xf32>
    %278 = vector.multi_reduction <add>, %277, %cst_92 [1, 2] : vector<1x8x256xf32> to vector<1xf32>
    %279 = vector.shape_cast %278 : vector<1xf32> to vector<1x1x1xf32>
    %280 = vector.extract %279[0, 0, 0] : f32 from vector<1x1x1xf32>
    %281 = vector.broadcast %280 : f32 to vector<1x1xf32>
    %c0_93 = arith.constant 0 : index
    %c0_94 = arith.constant 0 : index
    %c0_95 = arith.constant 0 : index
    %282 = vector.load %arg2[%c0_93, %c0_94, %c0_95] : memref<1x2x4xf32, #tpu.memory_space<vmem>>, vector<1x1x1xf32>
    %283 = vector.shape_cast %282 : vector<1x1x1xf32> to vector<1x1xf32>
    %284 = vector.shape_cast %281 : vector<1x1xf32> to vector<1x1x1xf32>
    tpu.vector_store %arg2[%c0_93, %c0_94, %c0_95], %284 {strides = array<i32>} : memref<1x2x4xf32, #tpu.memory_space<vmem>>, vector<1x1x1xf32>,
    %285 = vector.broadcast %63 : f32 to vector<1x1xf32>
    %c0_96 = arith.constant 0 : index
    %c1 = arith.constant 1 : index
    %c0_97 = arith.constant 0 : index
    %286 = vector.load %arg2[%c0_96, %c1, %c0_97] : memref<1x2x4xf32, #tpu.memory_space<vmem>>, vector<1x1x1xf32>
    %287 = vector.shape_cast %286 : vector<1x1x1xf32> to vector<1x1xf32>
    %288 = vector.shape_cast %285 : vector<1x1xf32> to vector<1x1x1xf32>
    tpu.vector_store %arg2[%c0_96, %c1, %c0_97], %288 {strides = array<i32>} : memref<1x2x4xf32, #tpu.memory_space<vmem>>, vector<1x1x1xf32>,
    %c0_98 = arith.constant 0 : index
    %c1_99 = arith.constant 1 : index
    %c0_100 = arith.constant 0 : index
    %c0_101 = arith.constant 0 : index
    %289 = vector.load %arg1[%c0_98, %c1_99, %c0_100, %c0_101] : memref<1x4x8x256xf32, #tpu.memory_space<vmem>>, vector<1x1x8x256xf32>
    %290 = vector.shape_cast %289 : vector<1x1x8x256xf32> to vector<8x256xf32>
    %c255_i32_102 = arith.constant 255 : i32
    %291 = tpu.dynamic_rotate %290 by %c255_i32_102 dim 1 : vector<8x256xf32>, i32 -> vector<8x256xf32>
    %cst_103 = arith.constant 0.000000e+00 : f32
    %292 = vector.broadcast %cst_103 : f32 to vector<8x256xf32>
    %293 = arith.select %4, %291, %292 : vector<8x256xi1>, vector<8x256xf32>
    %c1_i32_104 = arith.constant 1 : i32
    %294 = tpu.dynamic_rotate %290 by %c1_i32_104 dim 1 : vector<8x256xf32>, i32 -> vector<8x256xf32>
    %cst_105 = arith.constant 0.000000e+00 : f32
    %295 = vector.broadcast %cst_105 : f32 to vector<8x256xf32>
    %296 = arith.select %6, %294, %295 : vector<8x256xi1>, vector<8x256xf32>
    %297 = arith.addf %293, %296 : vector<8x256xf32>
    %c240_i32_106 = arith.constant 240 : i32
    %298 = tpu.dynamic_rotate %290 by %c240_i32_106 dim 1 : vector<8x256xf32>, i32 -> vector<8x256xf32>
    %cst_107 = arith.constant 0.000000e+00 : f32
    %299 = vector.broadcast %cst_107 : f32 to vector<8x256xf32>
    %300 = arith.select %8, %298, %299 : vector<8x256xi1>, vector<8x256xf32>
    %c16_i32_108 = arith.constant 16 : i32
    %301 = tpu.dynamic_rotate %290 by %c16_i32_108 dim 1 : vector<8x256xf32>, i32 -> vector<8x256xf32>
    %cst_109 = arith.constant 0.000000e+00 : f32
    %302 = vector.broadcast %cst_109 : f32 to vector<8x256xf32>
    %303 = arith.select %10, %301, %302 : vector<8x256xi1>, vector<8x256xf32>
    %304 = arith.addf %300, %303 : vector<8x256xf32>
    %305 = vector.extract_strided_slice %290 {offsets = [1, 0], sizes = [7, 256], strides = [1, 1]} : vector<8x256xf32> to vector<7x256xf32>
    %306 = tpu.concatenate %305, %11 in 0 : vector<7x256xf32>, vector<1x256xf32> -> vector<8x256xf32>
    %307 = vector.extract_strided_slice %290 {offsets = [0, 0], sizes = [7, 256], strides = [1, 1]} : vector<8x256xf32> to vector<7x256xf32>
    %308 = tpu.concatenate %11, %307 in 0 : vector<1x256xf32>, vector<7x256xf32> -> vector<8x256xf32>
    %309 = arith.addf %306, %308 : vector<8x256xf32>
    %c240_i32_110 = arith.constant 240 : i32
    %310 = tpu.dynamic_rotate %297 by %c240_i32_110 dim 1 : vector<8x256xf32>, i32 -> vector<8x256xf32>
    %cst_111 = arith.constant 0.000000e+00 : f32
    %311 = vector.broadcast %cst_111 : f32 to vector<8x256xf32>
    %312 = arith.select %8, %310, %311 : vector<8x256xi1>, vector<8x256xf32>
    %c16_i32_112 = arith.constant 16 : i32
    %313 = tpu.dynamic_rotate %297 by %c16_i32_112 dim 1 : vector<8x256xf32>, i32 -> vector<8x256xf32>
    %cst_113 = arith.constant 0.000000e+00 : f32
    %314 = vector.broadcast %cst_113 : f32 to vector<8x256xf32>
    %315 = arith.select %10, %313, %314 : vector<8x256xi1>, vector<8x256xf32>
    %316 = arith.addf %312, %315 : vector<8x256xf32>
    %317 = arith.addf %304, %297 : vector<8x256xf32>
    %cst_114 = arith.constant 6.000000e+00 : f32
    %318 = vector.broadcast %cst_114 : f32 to vector<8x256xf32>
    %319 = arith.mulf %318, %290 : vector<8x256xf32>
    %320 = arith.subf %317, %319 : vector<8x256xf32>
    %321 = vector.extract_strided_slice %320 {offsets = [1, 0], sizes = [7, 256], strides = [1, 1]} : vector<8x256xf32> to vector<7x256xf32>
    %322 = tpu.concatenate %321, %11 in 0 : vector<7x256xf32>, vector<1x256xf32> -> vector<8x256xf32>
    %323 = vector.extract_strided_slice %320 {offsets = [0, 0], sizes = [7, 256], strides = [1, 1]} : vector<8x256xf32> to vector<7x256xf32>
    %324 = tpu.concatenate %11, %323 in 0 : vector<1x256xf32>, vector<7x256xf32> -> vector<8x256xf32>
    %325 = arith.addf %322, %324 : vector<8x256xf32>
    %326 = arith.addf %325, %316 : vector<8x256xf32>
    %cst_115 = arith.constant 6.000000e+00 : f32
    %327 = vector.broadcast %cst_115 : f32 to vector<8x256xf32>
    %328 = arith.mulf %327, %304 : vector<8x256xf32>
    %329 = arith.subf %326, %328 : vector<8x256xf32>
    %cst_116 = arith.constant 6.000000e+00 : f32
    %330 = vector.broadcast %cst_116 : f32 to vector<8x256xf32>
    %331 = arith.mulf %330, %297 : vector<8x256xf32>
    %332 = arith.subf %329, %331 : vector<8x256xf32>
    %cst_117 = arith.constant 2.400000e+01 : f32
    %333 = vector.broadcast %cst_117 : f32 to vector<8x256xf32>
    %334 = arith.mulf %333, %290 : vector<8x256xf32>
    %335 = arith.addf %332, %334 : vector<8x256xf32>
    %336 = math.absf %335 : vector<8x256xf32>
    %337 = vector.shape_cast %336 : vector<8x256xf32> to vector<1x8x256xf32>
    %cst_118 = arith.constant dense<0.000000e+00> : vector<1xf32>
    %338 = vector.multi_reduction <add>, %337, %cst_118 [1, 2] : vector<1x8x256xf32> to vector<1xf32>
    %339 = vector.shape_cast %338 : vector<1xf32> to vector<1x1x1xf32>
    %340 = vector.extract %339[0, 0, 0] : f32 from vector<1x1x1xf32>
    %341 = arith.addf %309, %290 : vector<8x256xf32>
    %c240_i32_119 = arith.constant 240 : i32
    %342 = tpu.dynamic_rotate %341 by %c240_i32_119 dim 1 : vector<8x256xf32>, i32 -> vector<8x256xf32>
    %cst_120 = arith.constant 0.000000e+00 : f32
    %343 = vector.broadcast %cst_120 : f32 to vector<8x256xf32>
    %344 = arith.select %8, %342, %343 : vector<8x256xi1>, vector<8x256xf32>
    %c16_i32_121 = arith.constant 16 : i32
    %345 = tpu.dynamic_rotate %341 by %c16_i32_121 dim 1 : vector<8x256xf32>, i32 -> vector<8x256xf32>
    %cst_122 = arith.constant 0.000000e+00 : f32
    %346 = vector.broadcast %cst_122 : f32 to vector<8x256xf32>
    %347 = arith.select %10, %345, %346 : vector<8x256xi1>, vector<8x256xf32>
    %348 = arith.addf %344, %347 : vector<8x256xf32>
    %cst_123 = arith.constant 2.000000e+00 : f32
    %349 = vector.broadcast %cst_123 : f32 to vector<8x256xf32>
    %350 = arith.mulf %349, %341 : vector<8x256xf32>
    %351 = arith.addf %348, %350 : vector<8x256xf32>
    %c255_i32_124 = arith.constant 255 : i32
    %352 = tpu.dynamic_rotate %351 by %c255_i32_124 dim 1 : vector<8x256xf32>, i32 -> vector<8x256xf32>
    %cst_125 = arith.constant 0.000000e+00 : f32
    %353 = vector.broadcast %cst_125 : f32 to vector<8x256xf32>
    %354 = arith.select %4, %352, %353 : vector<8x256xi1>, vector<8x256xf32>
    %c1_i32_126 = arith.constant 1 : i32
    %355 = tpu.dynamic_rotate %351 by %c1_i32_126 dim 1 : vector<8x256xf32>, i32 -> vector<8x256xf32>
    %cst_127 = arith.constant 0.000000e+00 : f32
    %356 = vector.broadcast %cst_127 : f32 to vector<8x256xf32>
    %357 = arith.select %6, %355, %356 : vector<8x256xi1>, vector<8x256xf32>
    %358 = arith.subf %354, %357 : vector<8x256xf32>
    %c255_i32_128 = arith.constant 255 : i32
    %359 = tpu.dynamic_rotate %341 by %c255_i32_128 dim 1 : vector<8x256xf32>, i32 -> vector<8x256xf32>
    %cst_129 = arith.constant 0.000000e+00 : f32
    %360 = vector.broadcast %cst_129 : f32 to vector<8x256xf32>
    %361 = arith.select %4, %359, %360 : vector<8x256xi1>, vector<8x256xf32>
    %c1_i32_130 = arith.constant 1 : i32
    %362 = tpu.dynamic_rotate %341 by %c1_i32_130 dim 1 : vector<8x256xf32>, i32 -> vector<8x256xf32>
    %cst_131 = arith.constant 0.000000e+00 : f32
    %363 = vector.broadcast %cst_131 : f32 to vector<8x256xf32>
    %364 = arith.select %6, %362, %363 : vector<8x256xi1>, vector<8x256xf32>
    %365 = arith.addf %361, %364 : vector<8x256xf32>
    %cst_132 = arith.constant 2.000000e+00 : f32
    %366 = vector.broadcast %cst_132 : f32 to vector<8x256xf32>
    %367 = arith.mulf %366, %341 : vector<8x256xf32>
    %368 = arith.addf %365, %367 : vector<8x256xf32>
    %c240_i32_133 = arith.constant 240 : i32
    %369 = tpu.dynamic_rotate %368 by %c240_i32_133 dim 1 : vector<8x256xf32>, i32 -> vector<8x256xf32>
    %cst_134 = arith.constant 0.000000e+00 : f32
    %370 = vector.broadcast %cst_134 : f32 to vector<8x256xf32>
    %371 = arith.select %8, %369, %370 : vector<8x256xi1>, vector<8x256xf32>
    %c16_i32_135 = arith.constant 16 : i32
    %372 = tpu.dynamic_rotate %368 by %c16_i32_135 dim 1 : vector<8x256xf32>, i32 -> vector<8x256xf32>
    %cst_136 = arith.constant 0.000000e+00 : f32
    %373 = vector.broadcast %cst_136 : f32 to vector<8x256xf32>
    %374 = arith.select %10, %372, %373 : vector<8x256xi1>, vector<8x256xf32>
    %375 = arith.subf %371, %374 : vector<8x256xf32>
    %376 = arith.addf %316, %304 : vector<8x256xf32>
    %377 = arith.addf %376, %297 : vector<8x256xf32>
    %378 = arith.addf %377, %290 : vector<8x256xf32>
    %379 = vector.extract_strided_slice %378 {offsets = [1, 0], sizes = [7, 256], strides = [1, 1]} : vector<8x256xf32> to vector<7x256xf32>
    %380 = tpu.concatenate %379, %11 in 0 : vector<7x256xf32>, vector<1x256xf32> -> vector<8x256xf32>
    %381 = vector.extract_strided_slice %378 {offsets = [0, 0], sizes = [7, 256], strides = [1, 1]} : vector<8x256xf32> to vector<7x256xf32>
    %382 = tpu.concatenate %11, %381 in 0 : vector<1x256xf32>, vector<7x256xf32> -> vector<8x256xf32>
    %383 = arith.subf %380, %382 : vector<8x256xf32>
    %384 = arith.mulf %358, %358 : vector<8x256xf32>
    %c255_i32_137 = arith.constant 255 : i32
    %385 = tpu.dynamic_rotate %384 by %c255_i32_137 dim 1 : vector<8x256xf32>, i32 -> vector<8x256xf32>
    %cst_138 = arith.constant 0.000000e+00 : f32
    %386 = vector.broadcast %cst_138 : f32 to vector<8x256xf32>
    %387 = arith.select %4, %385, %386 : vector<8x256xi1>, vector<8x256xf32>
    %c1_i32_139 = arith.constant 1 : i32
    %388 = tpu.dynamic_rotate %384 by %c1_i32_139 dim 1 : vector<8x256xf32>, i32 -> vector<8x256xf32>
    %cst_140 = arith.constant 0.000000e+00 : f32
    %389 = vector.broadcast %cst_140 : f32 to vector<8x256xf32>
    %390 = arith.select %6, %388, %389 : vector<8x256xi1>, vector<8x256xf32>
    %391 = arith.addf %387, %390 : vector<8x256xf32>
    %392 = arith.addf %391, %384 : vector<8x256xf32>
    %c240_i32_141 = arith.constant 240 : i32
    %393 = tpu.dynamic_rotate %392 by %c240_i32_141 dim 1 : vector<8x256xf32>, i32 -> vector<8x256xf32>
    %cst_142 = arith.constant 0.000000e+00 : f32
    %394 = vector.broadcast %cst_142 : f32 to vector<8x256xf32>
    %395 = arith.select %8, %393, %394 : vector<8x256xi1>, vector<8x256xf32>
    %c16_i32_143 = arith.constant 16 : i32
    %396 = tpu.dynamic_rotate %392 by %c16_i32_143 dim 1 : vector<8x256xf32>, i32 -> vector<8x256xf32>
    %cst_144 = arith.constant 0.000000e+00 : f32
    %397 = vector.broadcast %cst_144 : f32 to vector<8x256xf32>
    %398 = arith.select %10, %396, %397 : vector<8x256xi1>, vector<8x256xf32>
    %399 = arith.addf %395, %398 : vector<8x256xf32>
    %400 = arith.addf %399, %392 : vector<8x256xf32>
    %401 = vector.extract_strided_slice %400 {offsets = [1, 0], sizes = [7, 256], strides = [1, 1]} : vector<8x256xf32> to vector<7x256xf32>
    %402 = tpu.concatenate %401, %11 in 0 : vector<7x256xf32>, vector<1x256xf32> -> vector<8x256xf32>
    %403 = vector.extract_strided_slice %400 {offsets = [0, 0], sizes = [7, 256], strides = [1, 1]} : vector<8x256xf32> to vector<7x256xf32>
    %404 = tpu.concatenate %11, %403 in 0 : vector<1x256xf32>, vector<7x256xf32> -> vector<8x256xf32>
    %405 = arith.addf %402, %404 : vector<8x256xf32>
    %406 = arith.addf %405, %400 : vector<8x256xf32>
    %cst_145 = arith.constant 0.0370370373 : f32
    %407 = vector.broadcast %cst_145 : f32 to vector<8x256xf32>
    %408 = arith.mulf %406, %407 : vector<8x256xf32>
    %409 = arith.mulf %375, %375 : vector<8x256xf32>
    %c255_i32_146 = arith.constant 255 : i32
    %410 = tpu.dynamic_rotate %409 by %c255_i32_146 dim 1 : vector<8x256xf32>, i32 -> vector<8x256xf32>
    %cst_147 = arith.constant 0.000000e+00 : f32
    %411 = vector.broadcast %cst_147 : f32 to vector<8x256xf32>
    %412 = arith.select %4, %410, %411 : vector<8x256xi1>, vector<8x256xf32>
    %c1_i32_148 = arith.constant 1 : i32
    %413 = tpu.dynamic_rotate %409 by %c1_i32_148 dim 1 : vector<8x256xf32>, i32 -> vector<8x256xf32>
    %cst_149 = arith.constant 0.000000e+00 : f32
    %414 = vector.broadcast %cst_149 : f32 to vector<8x256xf32>
    %415 = arith.select %6, %413, %414 : vector<8x256xi1>, vector<8x256xf32>
    %416 = arith.addf %412, %415 : vector<8x256xf32>
    %417 = arith.addf %416, %409 : vector<8x256xf32>
    %c240_i32_150 = arith.constant 240 : i32
    %418 = tpu.dynamic_rotate %417 by %c240_i32_150 dim 1 : vector<8x256xf32>, i32 -> vector<8x256xf32>
    %cst_151 = arith.constant 0.000000e+00 : f32
    %419 = vector.broadcast %cst_151 : f32 to vector<8x256xf32>
    %420 = arith.select %8, %418, %419 : vector<8x256xi1>, vector<8x256xf32>
    %c16_i32_152 = arith.constant 16 : i32
    %421 = tpu.dynamic_rotate %417 by %c16_i32_152 dim 1 : vector<8x256xf32>, i32 -> vector<8x256xf32>
    %cst_153 = arith.constant 0.000000e+00 : f32
    %422 = vector.broadcast %cst_153 : f32 to vector<8x256xf32>
    %423 = arith.select %10, %421, %422 : vector<8x256xi1>, vector<8x256xf32>
    %424 = arith.addf %420, %423 : vector<8x256xf32>
    %425 = arith.addf %424, %417 : vector<8x256xf32>
    %426 = vector.extract_strided_slice %425 {offsets = [1, 0], sizes = [7, 256], strides = [1, 1]} : vector<8x256xf32> to vector<7x256xf32>
    %427 = tpu.concatenate %426, %11 in 0 : vector<7x256xf32>, vector<1x256xf32> -> vector<8x256xf32>
    %428 = vector.extract_strided_slice %425 {offsets = [0, 0], sizes = [7, 256], strides = [1, 1]} : vector<8x256xf32> to vector<7x256xf32>
    %429 = tpu.concatenate %11, %428 in 0 : vector<1x256xf32>, vector<7x256xf32> -> vector<8x256xf32>
    %430 = arith.addf %427, %429 : vector<8x256xf32>
    %431 = arith.addf %430, %425 : vector<8x256xf32>
    %cst_154 = arith.constant 0.0370370373 : f32
    %432 = vector.broadcast %cst_154 : f32 to vector<8x256xf32>
    %433 = arith.mulf %431, %432 : vector<8x256xf32>
    %434 = arith.mulf %383, %383 : vector<8x256xf32>
    %c255_i32_155 = arith.constant 255 : i32
    %435 = tpu.dynamic_rotate %434 by %c255_i32_155 dim 1 : vector<8x256xf32>, i32 -> vector<8x256xf32>
    %cst_156 = arith.constant 0.000000e+00 : f32
    %436 = vector.broadcast %cst_156 : f32 to vector<8x256xf32>
    %437 = arith.select %4, %435, %436 : vector<8x256xi1>, vector<8x256xf32>
    %c1_i32_157 = arith.constant 1 : i32
    %438 = tpu.dynamic_rotate %434 by %c1_i32_157 dim 1 : vector<8x256xf32>, i32 -> vector<8x256xf32>
    %cst_158 = arith.constant 0.000000e+00 : f32
    %439 = vector.broadcast %cst_158 : f32 to vector<8x256xf32>
    %440 = arith.select %6, %438, %439 : vector<8x256xi1>, vector<8x256xf32>
    %441 = arith.addf %437, %440 : vector<8x256xf32>
    %442 = arith.addf %441, %434 : vector<8x256xf32>
    %c240_i32_159 = arith.constant 240 : i32
    %443 = tpu.dynamic_rotate %442 by %c240_i32_159 dim 1 : vector<8x256xf32>, i32 -> vector<8x256xf32>
    %cst_160 = arith.constant 0.000000e+00 : f32
    %444 = vector.broadcast %cst_160 : f32 to vector<8x256xf32>
    %445 = arith.select %8, %443, %444 : vector<8x256xi1>, vector<8x256xf32>
    %c16_i32_161 = arith.constant 16 : i32
    %446 = tpu.dynamic_rotate %442 by %c16_i32_161 dim 1 : vector<8x256xf32>, i32 -> vector<8x256xf32>
    %cst_162 = arith.constant 0.000000e+00 : f32
    %447 = vector.broadcast %cst_162 : f32 to vector<8x256xf32>
    %448 = arith.select %10, %446, %447 : vector<8x256xi1>, vector<8x256xf32>
    %449 = arith.addf %445, %448 : vector<8x256xf32>
    %450 = arith.addf %449, %442 : vector<8x256xf32>
    %451 = vector.extract_strided_slice %450 {offsets = [1, 0], sizes = [7, 256], strides = [1, 1]} : vector<8x256xf32> to vector<7x256xf32>
    %452 = tpu.concatenate %451, %11 in 0 : vector<7x256xf32>, vector<1x256xf32> -> vector<8x256xf32>
    %453 = vector.extract_strided_slice %450 {offsets = [0, 0], sizes = [7, 256], strides = [1, 1]} : vector<8x256xf32> to vector<7x256xf32>
    %454 = tpu.concatenate %11, %453 in 0 : vector<1x256xf32>, vector<7x256xf32> -> vector<8x256xf32>
    %455 = arith.addf %452, %454 : vector<8x256xf32>
    %456 = arith.addf %455, %450 : vector<8x256xf32>
    %cst_163 = arith.constant 0.0370370373 : f32
    %457 = vector.broadcast %cst_163 : f32 to vector<8x256xf32>
    %458 = arith.mulf %456, %457 : vector<8x256xf32>
    %459 = arith.mulf %358, %375 : vector<8x256xf32>
    %c255_i32_164 = arith.constant 255 : i32
    %460 = tpu.dynamic_rotate %459 by %c255_i32_164 dim 1 : vector<8x256xf32>, i32 -> vector<8x256xf32>
    %cst_165 = arith.constant 0.000000e+00 : f32
    %461 = vector.broadcast %cst_165 : f32 to vector<8x256xf32>
    %462 = arith.select %4, %460, %461 : vector<8x256xi1>, vector<8x256xf32>
    %c1_i32_166 = arith.constant 1 : i32
    %463 = tpu.dynamic_rotate %459 by %c1_i32_166 dim 1 : vector<8x256xf32>, i32 -> vector<8x256xf32>
    %cst_167 = arith.constant 0.000000e+00 : f32
    %464 = vector.broadcast %cst_167 : f32 to vector<8x256xf32>
    %465 = arith.select %6, %463, %464 : vector<8x256xi1>, vector<8x256xf32>
    %466 = arith.addf %462, %465 : vector<8x256xf32>
    %467 = arith.addf %466, %459 : vector<8x256xf32>
    %c240_i32_168 = arith.constant 240 : i32
    %468 = tpu.dynamic_rotate %467 by %c240_i32_168 dim 1 : vector<8x256xf32>, i32 -> vector<8x256xf32>
    %cst_169 = arith.constant 0.000000e+00 : f32
    %469 = vector.broadcast %cst_169 : f32 to vector<8x256xf32>
    %470 = arith.select %8, %468, %469 : vector<8x256xi1>, vector<8x256xf32>
    %c16_i32_170 = arith.constant 16 : i32
    %471 = tpu.dynamic_rotate %467 by %c16_i32_170 dim 1 : vector<8x256xf32>, i32 -> vector<8x256xf32>
    %cst_171 = arith.constant 0.000000e+00 : f32
    %472 = vector.broadcast %cst_171 : f32 to vector<8x256xf32>
    %473 = arith.select %10, %471, %472 : vector<8x256xi1>, vector<8x256xf32>
    %474 = arith.addf %470, %473 : vector<8x256xf32>
    %475 = arith.addf %474, %467 : vector<8x256xf32>
    %476 = vector.extract_strided_slice %475 {offsets = [1, 0], sizes = [7, 256], strides = [1, 1]} : vector<8x256xf32> to vector<7x256xf32>
    %477 = tpu.concatenate %476, %11 in 0 : vector<7x256xf32>, vector<1x256xf32> -> vector<8x256xf32>
    %478 = vector.extract_strided_slice %475 {offsets = [0, 0], sizes = [7, 256], strides = [1, 1]} : vector<8x256xf32> to vector<7x256xf32>
    %479 = tpu.concatenate %11, %478 in 0 : vector<1x256xf32>, vector<7x256xf32> -> vector<8x256xf32>
    %480 = arith.addf %477, %479 : vector<8x256xf32>
    %481 = arith.addf %480, %475 : vector<8x256xf32>
    %cst_172 = arith.constant 0.0370370373 : f32
    %482 = vector.broadcast %cst_172 : f32 to vector<8x256xf32>
    %483 = arith.mulf %481, %482 : vector<8x256xf32>
    %484 = arith.mulf %358, %383 : vector<8x256xf32>
    %c255_i32_173 = arith.constant 255 : i32
    %485 = tpu.dynamic_rotate %484 by %c255_i32_173 dim 1 : vector<8x256xf32>, i32 -> vector<8x256xf32>
    %cst_174 = arith.constant 0.000000e+00 : f32
    %486 = vector.broadcast %cst_174 : f32 to vector<8x256xf32>
    %487 = arith.select %4, %485, %486 : vector<8x256xi1>, vector<8x256xf32>
    %c1_i32_175 = arith.constant 1 : i32
    %488 = tpu.dynamic_rotate %484 by %c1_i32_175 dim 1 : vector<8x256xf32>, i32 -> vector<8x256xf32>
    %cst_176 = arith.constant 0.000000e+00 : f32
    %489 = vector.broadcast %cst_176 : f32 to vector<8x256xf32>
    %490 = arith.select %6, %488, %489 : vector<8x256xi1>, vector<8x256xf32>
    %491 = arith.addf %487, %490 : vector<8x256xf32>
    %492 = arith.addf %491, %484 : vector<8x256xf32>
    %c240_i32_177 = arith.constant 240 : i32
    %493 = tpu.dynamic_rotate %492 by %c240_i32_177 dim 1 : vector<8x256xf32>, i32 -> vector<8x256xf32>
    %cst_178 = arith.constant 0.000000e+00 : f32
    %494 = vector.broadcast %cst_178 : f32 to vector<8x256xf32>
    %495 = arith.select %8, %493, %494 : vector<8x256xi1>, vector<8x256xf32>
    %c16_i32_179 = arith.constant 16 : i32
    %496 = tpu.dynamic_rotate %492 by %c16_i32_179 dim 1 : vector<8x256xf32>, i32 -> vector<8x256xf32>
    %cst_180 = arith.constant 0.000000e+00 : f32
    %497 = vector.broadcast %cst_180 : f32 to vector<8x256xf32>
    %498 = arith.select %10, %496, %497 : vector<8x256xi1>, vector<8x256xf32>
    %499 = arith.addf %495, %498 : vector<8x256xf32>
    %500 = arith.addf %499, %492 : vector<8x256xf32>
    %501 = vector.extract_strided_slice %500 {offsets = [1, 0], sizes = [7, 256], strides = [1, 1]} : vector<8x256xf32> to vector<7x256xf32>
    %502 = tpu.concatenate %501, %11 in 0 : vector<7x256xf32>, vector<1x256xf32> -> vector<8x256xf32>
    %503 = vector.extract_strided_slice %500 {offsets = [0, 0], sizes = [7, 256], strides = [1, 1]} : vector<8x256xf32> to vector<7x256xf32>
    %504 = tpu.concatenate %11, %503 in 0 : vector<1x256xf32>, vector<7x256xf32> -> vector<8x256xf32>
    %505 = arith.addf %502, %504 : vector<8x256xf32>
    %506 = arith.addf %505, %500 : vector<8x256xf32>
    %cst_181 = arith.constant 0.0370370373 : f32
    %507 = vector.broadcast %cst_181 : f32 to vector<8x256xf32>
    %508 = arith.mulf %506, %507 : vector<8x256xf32>
    %509 = arith.mulf %375, %383 : vector<8x256xf32>
    %c255_i32_182 = arith.constant 255 : i32
    %510 = tpu.dynamic_rotate %509 by %c255_i32_182 dim 1 : vector<8x256xf32>, i32 -> vector<8x256xf32>
    %cst_183 = arith.constant 0.000000e+00 : f32
    %511 = vector.broadcast %cst_183 : f32 to vector<8x256xf32>
    %512 = arith.select %4, %510, %511 : vector<8x256xi1>, vector<8x256xf32>
    %c1_i32_184 = arith.constant 1 : i32
    %513 = tpu.dynamic_rotate %509 by %c1_i32_184 dim 1 : vector<8x256xf32>, i32 -> vector<8x256xf32>
    %cst_185 = arith.constant 0.000000e+00 : f32
    %514 = vector.broadcast %cst_185 : f32 to vector<8x256xf32>
    %515 = arith.select %6, %513, %514 : vector<8x256xi1>, vector<8x256xf32>
    %516 = arith.addf %512, %515 : vector<8x256xf32>
    %517 = arith.addf %516, %509 : vector<8x256xf32>
    %c240_i32_186 = arith.constant 240 : i32
    %518 = tpu.dynamic_rotate %517 by %c240_i32_186 dim 1 : vector<8x256xf32>, i32 -> vector<8x256xf32>
    %cst_187 = arith.constant 0.000000e+00 : f32
    %519 = vector.broadcast %cst_187 : f32 to vector<8x256xf32>
    %520 = arith.select %8, %518, %519 : vector<8x256xi1>, vector<8x256xf32>
    %c16_i32_188 = arith.constant 16 : i32
    %521 = tpu.dynamic_rotate %517 by %c16_i32_188 dim 1 : vector<8x256xf32>, i32 -> vector<8x256xf32>
    %cst_189 = arith.constant 0.000000e+00 : f32
    %522 = vector.broadcast %cst_189 : f32 to vector<8x256xf32>
    %523 = arith.select %10, %521, %522 : vector<8x256xi1>, vector<8x256xf32>
    %524 = arith.addf %520, %523 : vector<8x256xf32>
    %525 = arith.addf %524, %517 : vector<8x256xf32>
    %526 = vector.extract_strided_slice %525 {offsets = [1, 0], sizes = [7, 256], strides = [1, 1]} : vector<8x256xf32> to vector<7x256xf32>
    %527 = tpu.concatenate %526, %11 in 0 : vector<7x256xf32>, vector<1x256xf32> -> vector<8x256xf32>
    %528 = vector.extract_strided_slice %525 {offsets = [0, 0], sizes = [7, 256], strides = [1, 1]} : vector<8x256xf32> to vector<7x256xf32>
    %529 = tpu.concatenate %11, %528 in 0 : vector<1x256xf32>, vector<7x256xf32> -> vector<8x256xf32>
    %530 = arith.addf %527, %529 : vector<8x256xf32>
    %531 = arith.addf %530, %525 : vector<8x256xf32>
    %cst_190 = arith.constant 0.0370370373 : f32
    %532 = vector.broadcast %cst_190 : f32 to vector<8x256xf32>
    %533 = arith.mulf %531, %532 : vector<8x256xf32>
    %534 = arith.mulf %433, %458 : vector<8x256xf32>
    %535 = arith.mulf %533, %533 : vector<8x256xf32>
    %536 = arith.subf %534, %535 : vector<8x256xf32>
    %537 = arith.mulf %408, %536 : vector<8x256xf32>
    %538 = arith.mulf %483, %458 : vector<8x256xf32>
    %539 = arith.mulf %533, %508 : vector<8x256xf32>
    %540 = arith.subf %538, %539 : vector<8x256xf32>
    %541 = arith.mulf %483, %540 : vector<8x256xf32>
    %542 = arith.subf %537, %541 : vector<8x256xf32>
    %543 = arith.mulf %483, %533 : vector<8x256xf32>
    %544 = arith.mulf %433, %508 : vector<8x256xf32>
    %545 = arith.subf %543, %544 : vector<8x256xf32>
    %546 = arith.mulf %508, %545 : vector<8x256xf32>
    %547 = arith.addf %542, %546 : vector<8x256xf32>
    %548 = arith.addf %408, %433 : vector<8x256xf32>
    %549 = arith.addf %548, %458 : vector<8x256xf32>
    %cst_191 = arith.constant 4.000000e-02 : f32
    %550 = vector.broadcast %cst_191 : f32 to vector<8x256xf32>
    %551 = arith.mulf %550, %549 : vector<8x256xf32>
    %552 = arith.mulf %551, %549 : vector<8x256xf32>
    %553 = arith.subf %547, %552 : vector<8x256xf32>
    %554 = vector.shape_cast %553 : vector<8x256xf32> to vector<1x8x256xf32>
    %cst_192 = arith.constant dense<0.000000e+00> : vector<1xf32>
    %555 = vector.multi_reduction <add>, %554, %cst_192 [1, 2] : vector<1x8x256xf32> to vector<1xf32>
    %556 = vector.shape_cast %555 : vector<1xf32> to vector<1x1x1xf32>
    %557 = vector.extract %556[0, 0, 0] : f32 from vector<1x1x1xf32>
    %558 = vector.broadcast %557 : f32 to vector<1x1xf32>
    %c0_193 = arith.constant 0 : index
    %c0_194 = arith.constant 0 : index
    %c1_195 = arith.constant 1 : index
    %559 = vector.load %arg2[%c0_193, %c0_194, %c1_195] : memref<1x2x4xf32, #tpu.memory_space<vmem>>, vector<1x1x1xf32>
    %560 = vector.shape_cast %559 : vector<1x1x1xf32> to vector<1x1xf32>
    %561 = vector.shape_cast %558 : vector<1x1xf32> to vector<1x1x1xf32>
    tpu.vector_store %arg2[%c0_193, %c0_194, %c1_195], %561 {strides = array<i32>} : memref<1x2x4xf32, #tpu.memory_space<vmem>>, vector<1x1x1xf32>,
    %562 = vector.broadcast %340 : f32 to vector<1x1xf32>
    %c0_196 = arith.constant 0 : index
    %c1_197 = arith.constant 1 : index
    %c1_198 = arith.constant 1 : index
    %563 = vector.load %arg2[%c0_196, %c1_197, %c1_198] : memref<1x2x4xf32, #tpu.memory_space<vmem>>, vector<1x1x1xf32>
    %564 = vector.shape_cast %563 : vector<1x1x1xf32> to vector<1x1xf32>
    %565 = vector.shape_cast %562 : vector<1x1xf32> to vector<1x1x1xf32>
    tpu.vector_store %arg2[%c0_196, %c1_197, %c1_198], %565 {strides = array<i32>} : memref<1x2x4xf32, #tpu.memory_space<vmem>>, vector<1x1x1xf32>,
    %c0_199 = arith.constant 0 : index
    %c2 = arith.constant 2 : index
    %c0_200 = arith.constant 0 : index
    %c0_201 = arith.constant 0 : index
    %566 = vector.load %arg1[%c0_199, %c2, %c0_200, %c0_201] : memref<1x4x8x256xf32, #tpu.memory_space<vmem>>, vector<1x1x8x256xf32>
    %567 = vector.shape_cast %566 : vector<1x1x8x256xf32> to vector<8x256xf32>
    %c255_i32_202 = arith.constant 255 : i32
    %568 = tpu.dynamic_rotate %567 by %c255_i32_202 dim 1 : vector<8x256xf32>, i32 -> vector<8x256xf32>
    %cst_203 = arith.constant 0.000000e+00 : f32
    %569 = vector.broadcast %cst_203 : f32 to vector<8x256xf32>
    %570 = arith.select %4, %568, %569 : vector<8x256xi1>, vector<8x256xf32>
    %c1_i32_204 = arith.constant 1 : i32
    %571 = tpu.dynamic_rotate %567 by %c1_i32_204 dim 1 : vector<8x256xf32>, i32 -> vector<8x256xf32>
    %cst_205 = arith.constant 0.000000e+00 : f32
    %572 = vector.broadcast %cst_205 : f32 to vector<8x256xf32>
    %573 = arith.select %6, %571, %572 : vector<8x256xi1>, vector<8x256xf32>
    %574 = arith.addf %570, %573 : vector<8x256xf32>
    %c240_i32_206 = arith.constant 240 : i32
    %575 = tpu.dynamic_rotate %567 by %c240_i32_206 dim 1 : vector<8x256xf32>, i32 -> vector<8x256xf32>
    %cst_207 = arith.constant 0.000000e+00 : f32
    %576 = vector.broadcast %cst_207 : f32 to vector<8x256xf32>
    %577 = arith.select %8, %575, %576 : vector<8x256xi1>, vector<8x256xf32>
    %c16_i32_208 = arith.constant 16 : i32
    %578 = tpu.dynamic_rotate %567 by %c16_i32_208 dim 1 : vector<8x256xf32>, i32 -> vector<8x256xf32>
    %cst_209 = arith.constant 0.000000e+00 : f32
    %579 = vector.broadcast %cst_209 : f32 to vector<8x256xf32>
    %580 = arith.select %10, %578, %579 : vector<8x256xi1>, vector<8x256xf32>
    %581 = arith.addf %577, %580 : vector<8x256xf32>
    %582 = vector.extract_strided_slice %567 {offsets = [1, 0], sizes = [7, 256], strides = [1, 1]} : vector<8x256xf32> to vector<7x256xf32>
    %583 = tpu.concatenate %582, %11 in 0 : vector<7x256xf32>, vector<1x256xf32> -> vector<8x256xf32>
    %584 = vector.extract_strided_slice %567 {offsets = [0, 0], sizes = [7, 256], strides = [1, 1]} : vector<8x256xf32> to vector<7x256xf32>
    %585 = tpu.concatenate %11, %584 in 0 : vector<1x256xf32>, vector<7x256xf32> -> vector<8x256xf32>
    %586 = arith.addf %583, %585 : vector<8x256xf32>
    %c240_i32_210 = arith.constant 240 : i32
    %587 = tpu.dynamic_rotate %574 by %c240_i32_210 dim 1 : vector<8x256xf32>, i32 -> vector<8x256xf32>
    %cst_211 = arith.constant 0.000000e+00 : f32
    %588 = vector.broadcast %cst_211 : f32 to vector<8x256xf32>
    %589 = arith.select %8, %587, %588 : vector<8x256xi1>, vector<8x256xf32>
    %c16_i32_212 = arith.constant 16 : i32
    %590 = tpu.dynamic_rotate %574 by %c16_i32_212 dim 1 : vector<8x256xf32>, i32 -> vector<8x256xf32>
    %cst_213 = arith.constant 0.000000e+00 : f32
    %591 = vector.broadcast %cst_213 : f32 to vector<8x256xf32>
    %592 = arith.select %10, %590, %591 : vector<8x256xi1>, vector<8x256xf32>
    %593 = arith.addf %589, %592 : vector<8x256xf32>
    %594 = arith.addf %581, %574 : vector<8x256xf32>
    %cst_214 = arith.constant 6.000000e+00 : f32
    %595 = vector.broadcast %cst_214 : f32 to vector<8x256xf32>
    %596 = arith.mulf %595, %567 : vector<8x256xf32>
    %597 = arith.subf %594, %596 : vector<8x256xf32>
    %598 = vector.extract_strided_slice %597 {offsets = [1, 0], sizes = [7, 256], strides = [1, 1]} : vector<8x256xf32> to vector<7x256xf32>
    %599 = tpu.concatenate %598, %11 in 0 : vector<7x256xf32>, vector<1x256xf32> -> vector<8x256xf32>
    %600 = vector.extract_strided_slice %597 {offsets = [0, 0], sizes = [7, 256], strides = [1, 1]} : vector<8x256xf32> to vector<7x256xf32>
    %601 = tpu.concatenate %11, %600 in 0 : vector<1x256xf32>, vector<7x256xf32> -> vector<8x256xf32>
    %602 = arith.addf %599, %601 : vector<8x256xf32>
    %603 = arith.addf %602, %593 : vector<8x256xf32>
    %cst_215 = arith.constant 6.000000e+00 : f32
    %604 = vector.broadcast %cst_215 : f32 to vector<8x256xf32>
    %605 = arith.mulf %604, %581 : vector<8x256xf32>
    %606 = arith.subf %603, %605 : vector<8x256xf32>
    %cst_216 = arith.constant 6.000000e+00 : f32
    %607 = vector.broadcast %cst_216 : f32 to vector<8x256xf32>
    %608 = arith.mulf %607, %574 : vector<8x256xf32>
    %609 = arith.subf %606, %608 : vector<8x256xf32>
    %cst_217 = arith.constant 2.400000e+01 : f32
    %610 = vector.broadcast %cst_217 : f32 to vector<8x256xf32>
    %611 = arith.mulf %610, %567 : vector<8x256xf32>
    %612 = arith.addf %609, %611 : vector<8x256xf32>
    %613 = math.absf %612 : vector<8x256xf32>
    %614 = vector.shape_cast %613 : vector<8x256xf32> to vector<1x8x256xf32>
    %cst_218 = arith.constant dense<0.000000e+00> : vector<1xf32>
    %615 = vector.multi_reduction <add>, %614, %cst_218 [1, 2] : vector<1x8x256xf32> to vector<1xf32>
    %616 = vector.shape_cast %615 : vector<1xf32> to vector<1x1x1xf32>
    %617 = vector.extract %616[0, 0, 0] : f32 from vector<1x1x1xf32>
    %618 = arith.addf %586, %567 : vector<8x256xf32>
    %c240_i32_219 = arith.constant 240 : i32
    %619 = tpu.dynamic_rotate %618 by %c240_i32_219 dim 1 : vector<8x256xf32>, i32 -> vector<8x256xf32>
    %cst_220 = arith.constant 0.000000e+00 : f32
    %620 = vector.broadcast %cst_220 : f32 to vector<8x256xf32>
    %621 = arith.select %8, %619, %620 : vector<8x256xi1>, vector<8x256xf32>
    %c16_i32_221 = arith.constant 16 : i32
    %622 = tpu.dynamic_rotate %618 by %c16_i32_221 dim 1 : vector<8x256xf32>, i32 -> vector<8x256xf32>
    %cst_222 = arith.constant 0.000000e+00 : f32
    %623 = vector.broadcast %cst_222 : f32 to vector<8x256xf32>
    %624 = arith.select %10, %622, %623 : vector<8x256xi1>, vector<8x256xf32>
    %625 = arith.addf %621, %624 : vector<8x256xf32>
    %cst_223 = arith.constant 2.000000e+00 : f32
    %626 = vector.broadcast %cst_223 : f32 to vector<8x256xf32>
    %627 = arith.mulf %626, %618 : vector<8x256xf32>
    %628 = arith.addf %625, %627 : vector<8x256xf32>
    %c255_i32_224 = arith.constant 255 : i32
    %629 = tpu.dynamic_rotate %628 by %c255_i32_224 dim 1 : vector<8x256xf32>, i32 -> vector<8x256xf32>
    %cst_225 = arith.constant 0.000000e+00 : f32
    %630 = vector.broadcast %cst_225 : f32 to vector<8x256xf32>
    %631 = arith.select %4, %629, %630 : vector<8x256xi1>, vector<8x256xf32>
    %c1_i32_226 = arith.constant 1 : i32
    %632 = tpu.dynamic_rotate %628 by %c1_i32_226 dim 1 : vector<8x256xf32>, i32 -> vector<8x256xf32>
    %cst_227 = arith.constant 0.000000e+00 : f32
    %633 = vector.broadcast %cst_227 : f32 to vector<8x256xf32>
    %634 = arith.select %6, %632, %633 : vector<8x256xi1>, vector<8x256xf32>
    %635 = arith.subf %631, %634 : vector<8x256xf32>
    %c255_i32_228 = arith.constant 255 : i32
    %636 = tpu.dynamic_rotate %618 by %c255_i32_228 dim 1 : vector<8x256xf32>, i32 -> vector<8x256xf32>
    %cst_229 = arith.constant 0.000000e+00 : f32
    %637 = vector.broadcast %cst_229 : f32 to vector<8x256xf32>
    %638 = arith.select %4, %636, %637 : vector<8x256xi1>, vector<8x256xf32>
    %c1_i32_230 = arith.constant 1 : i32
    %639 = tpu.dynamic_rotate %618 by %c1_i32_230 dim 1 : vector<8x256xf32>, i32 -> vector<8x256xf32>
    %cst_231 = arith.constant 0.000000e+00 : f32
    %640 = vector.broadcast %cst_231 : f32 to vector<8x256xf32>
    %641 = arith.select %6, %639, %640 : vector<8x256xi1>, vector<8x256xf32>
    %642 = arith.addf %638, %641 : vector<8x256xf32>
    %cst_232 = arith.constant 2.000000e+00 : f32
    %643 = vector.broadcast %cst_232 : f32 to vector<8x256xf32>
    %644 = arith.mulf %643, %618 : vector<8x256xf32>
    %645 = arith.addf %642, %644 : vector<8x256xf32>
    %c240_i32_233 = arith.constant 240 : i32
    %646 = tpu.dynamic_rotate %645 by %c240_i32_233 dim 1 : vector<8x256xf32>, i32 -> vector<8x256xf32>
    %cst_234 = arith.constant 0.000000e+00 : f32
    %647 = vector.broadcast %cst_234 : f32 to vector<8x256xf32>
    %648 = arith.select %8, %646, %647 : vector<8x256xi1>, vector<8x256xf32>
    %c16_i32_235 = arith.constant 16 : i32
    %649 = tpu.dynamic_rotate %645 by %c16_i32_235 dim 1 : vector<8x256xf32>, i32 -> vector<8x256xf32>
    %cst_236 = arith.constant 0.000000e+00 : f32
    %650 = vector.broadcast %cst_236 : f32 to vector<8x256xf32>
    %651 = arith.select %10, %649, %650 : vector<8x256xi1>, vector<8x256xf32>
    %652 = arith.subf %648, %651 : vector<8x256xf32>
    %653 = arith.addf %593, %581 : vector<8x256xf32>
    %654 = arith.addf %653, %574 : vector<8x256xf32>
    %655 = arith.addf %654, %567 : vector<8x256xf32>
    %656 = vector.extract_strided_slice %655 {offsets = [1, 0], sizes = [7, 256], strides = [1, 1]} : vector<8x256xf32> to vector<7x256xf32>
    %657 = tpu.concatenate %656, %11 in 0 : vector<7x256xf32>, vector<1x256xf32> -> vector<8x256xf32>
    %658 = vector.extract_strided_slice %655 {offsets = [0, 0], sizes = [7, 256], strides = [1, 1]} : vector<8x256xf32> to vector<7x256xf32>
    %659 = tpu.concatenate %11, %658 in 0 : vector<1x256xf32>, vector<7x256xf32> -> vector<8x256xf32>
    %660 = arith.subf %657, %659 : vector<8x256xf32>
    %661 = arith.mulf %635, %635 : vector<8x256xf32>
    %c255_i32_237 = arith.constant 255 : i32
    %662 = tpu.dynamic_rotate %661 by %c255_i32_237 dim 1 : vector<8x256xf32>, i32 -> vector<8x256xf32>
    %cst_238 = arith.constant 0.000000e+00 : f32
    %663 = vector.broadcast %cst_238 : f32 to vector<8x256xf32>
    %664 = arith.select %4, %662, %663 : vector<8x256xi1>, vector<8x256xf32>
    %c1_i32_239 = arith.constant 1 : i32
    %665 = tpu.dynamic_rotate %661 by %c1_i32_239 dim 1 : vector<8x256xf32>, i32 -> vector<8x256xf32>
    %cst_240 = arith.constant 0.000000e+00 : f32
    %666 = vector.broadcast %cst_240 : f32 to vector<8x256xf32>
    %667 = arith.select %6, %665, %666 : vector<8x256xi1>, vector<8x256xf32>
    %668 = arith.addf %664, %667 : vector<8x256xf32>
    %669 = arith.addf %668, %661 : vector<8x256xf32>
    %c240_i32_241 = arith.constant 240 : i32
    %670 = tpu.dynamic_rotate %669 by %c240_i32_241 dim 1 : vector<8x256xf32>, i32 -> vector<8x256xf32>
    %cst_242 = arith.constant 0.000000e+00 : f32
    %671 = vector.broadcast %cst_242 : f32 to vector<8x256xf32>
    %672 = arith.select %8, %670, %671 : vector<8x256xi1>, vector<8x256xf32>
    %c16_i32_243 = arith.constant 16 : i32
    %673 = tpu.dynamic_rotate %669 by %c16_i32_243 dim 1 : vector<8x256xf32>, i32 -> vector<8x256xf32>
    %cst_244 = arith.constant 0.000000e+00 : f32
    %674 = vector.broadcast %cst_244 : f32 to vector<8x256xf32>
    %675 = arith.select %10, %673, %674 : vector<8x256xi1>, vector<8x256xf32>
    %676 = arith.addf %672, %675 : vector<8x256xf32>
    %677 = arith.addf %676, %669 : vector<8x256xf32>
    %678 = vector.extract_strided_slice %677 {offsets = [1, 0], sizes = [7, 256], strides = [1, 1]} : vector<8x256xf32> to vector<7x256xf32>
    %679 = tpu.concatenate %678, %11 in 0 : vector<7x256xf32>, vector<1x256xf32> -> vector<8x256xf32>
    %680 = vector.extract_strided_slice %677 {offsets = [0, 0], sizes = [7, 256], strides = [1, 1]} : vector<8x256xf32> to vector<7x256xf32>
    %681 = tpu.concatenate %11, %680 in 0 : vector<1x256xf32>, vector<7x256xf32> -> vector<8x256xf32>
    %682 = arith.addf %679, %681 : vector<8x256xf32>
    %683 = arith.addf %682, %677 : vector<8x256xf32>
    %cst_245 = arith.constant 0.0370370373 : f32
    %684 = vector.broadcast %cst_245 : f32 to vector<8x256xf32>
    %685 = arith.mulf %683, %684 : vector<8x256xf32>
    %686 = arith.mulf %652, %652 : vector<8x256xf32>
    %c255_i32_246 = arith.constant 255 : i32
    %687 = tpu.dynamic_rotate %686 by %c255_i32_246 dim 1 : vector<8x256xf32>, i32 -> vector<8x256xf32>
    %cst_247 = arith.constant 0.000000e+00 : f32
    %688 = vector.broadcast %cst_247 : f32 to vector<8x256xf32>
    %689 = arith.select %4, %687, %688 : vector<8x256xi1>, vector<8x256xf32>
    %c1_i32_248 = arith.constant 1 : i32
    %690 = tpu.dynamic_rotate %686 by %c1_i32_248 dim 1 : vector<8x256xf32>, i32 -> vector<8x256xf32>
    %cst_249 = arith.constant 0.000000e+00 : f32
    %691 = vector.broadcast %cst_249 : f32 to vector<8x256xf32>
    %692 = arith.select %6, %690, %691 : vector<8x256xi1>, vector<8x256xf32>
    %693 = arith.addf %689, %692 : vector<8x256xf32>
    %694 = arith.addf %693, %686 : vector<8x256xf32>
    %c240_i32_250 = arith.constant 240 : i32
    %695 = tpu.dynamic_rotate %694 by %c240_i32_250 dim 1 : vector<8x256xf32>, i32 -> vector<8x256xf32>
    %cst_251 = arith.constant 0.000000e+00 : f32
    %696 = vector.broadcast %cst_251 : f32 to vector<8x256xf32>
    %697 = arith.select %8, %695, %696 : vector<8x256xi1>, vector<8x256xf32>
    %c16_i32_252 = arith.constant 16 : i32
    %698 = tpu.dynamic_rotate %694 by %c16_i32_252 dim 1 : vector<8x256xf32>, i32 -> vector<8x256xf32>
    %cst_253 = arith.constant 0.000000e+00 : f32
    %699 = vector.broadcast %cst_253 : f32 to vector<8x256xf32>
    %700 = arith.select %10, %698, %699 : vector<8x256xi1>, vector<8x256xf32>
    %701 = arith.addf %697, %700 : vector<8x256xf32>
    %702 = arith.addf %701, %694 : vector<8x256xf32>
    %703 = vector.extract_strided_slice %702 {offsets = [1, 0], sizes = [7, 256], strides = [1, 1]} : vector<8x256xf32> to vector<7x256xf32>
    %704 = tpu.concatenate %703, %11 in 0 : vector<7x256xf32>, vector<1x256xf32> -> vector<8x256xf32>
    %705 = vector.extract_strided_slice %702 {offsets = [0, 0], sizes = [7, 256], strides = [1, 1]} : vector<8x256xf32> to vector<7x256xf32>
    %706 = tpu.concatenate %11, %705 in 0 : vector<1x256xf32>, vector<7x256xf32> -> vector<8x256xf32>
    %707 = arith.addf %704, %706 : vector<8x256xf32>
    %708 = arith.addf %707, %702 : vector<8x256xf32>
    %cst_254 = arith.constant 0.0370370373 : f32
    %709 = vector.broadcast %cst_254 : f32 to vector<8x256xf32>
    %710 = arith.mulf %708, %709 : vector<8x256xf32>
    %711 = arith.mulf %660, %660 : vector<8x256xf32>
    %c255_i32_255 = arith.constant 255 : i32
    %712 = tpu.dynamic_rotate %711 by %c255_i32_255 dim 1 : vector<8x256xf32>, i32 -> vector<8x256xf32>
    %cst_256 = arith.constant 0.000000e+00 : f32
    %713 = vector.broadcast %cst_256 : f32 to vector<8x256xf32>
    %714 = arith.select %4, %712, %713 : vector<8x256xi1>, vector<8x256xf32>
    %c1_i32_257 = arith.constant 1 : i32
    %715 = tpu.dynamic_rotate %711 by %c1_i32_257 dim 1 : vector<8x256xf32>, i32 -> vector<8x256xf32>
    %cst_258 = arith.constant 0.000000e+00 : f32
    %716 = vector.broadcast %cst_258 : f32 to vector<8x256xf32>
    %717 = arith.select %6, %715, %716 : vector<8x256xi1>, vector<8x256xf32>
    %718 = arith.addf %714, %717 : vector<8x256xf32>
    %719 = arith.addf %718, %711 : vector<8x256xf32>
    %c240_i32_259 = arith.constant 240 : i32
    %720 = tpu.dynamic_rotate %719 by %c240_i32_259 dim 1 : vector<8x256xf32>, i32 -> vector<8x256xf32>
    %cst_260 = arith.constant 0.000000e+00 : f32
    %721 = vector.broadcast %cst_260 : f32 to vector<8x256xf32>
    %722 = arith.select %8, %720, %721 : vector<8x256xi1>, vector<8x256xf32>
    %c16_i32_261 = arith.constant 16 : i32
    %723 = tpu.dynamic_rotate %719 by %c16_i32_261 dim 1 : vector<8x256xf32>, i32 -> vector<8x256xf32>
    %cst_262 = arith.constant 0.000000e+00 : f32
    %724 = vector.broadcast %cst_262 : f32 to vector<8x256xf32>
    %725 = arith.select %10, %723, %724 : vector<8x256xi1>, vector<8x256xf32>
    %726 = arith.addf %722, %725 : vector<8x256xf32>
    %727 = arith.addf %726, %719 : vector<8x256xf32>
    %728 = vector.extract_strided_slice %727 {offsets = [1, 0], sizes = [7, 256], strides = [1, 1]} : vector<8x256xf32> to vector<7x256xf32>
    %729 = tpu.concatenate %728, %11 in 0 : vector<7x256xf32>, vector<1x256xf32> -> vector<8x256xf32>
    %730 = vector.extract_strided_slice %727 {offsets = [0, 0], sizes = [7, 256], strides = [1, 1]} : vector<8x256xf32> to vector<7x256xf32>
    %731 = tpu.concatenate %11, %730 in 0 : vector<1x256xf32>, vector<7x256xf32> -> vector<8x256xf32>
    %732 = arith.addf %729, %731 : vector<8x256xf32>
    %733 = arith.addf %732, %727 : vector<8x256xf32>
    %cst_263 = arith.constant 0.0370370373 : f32
    %734 = vector.broadcast %cst_263 : f32 to vector<8x256xf32>
    %735 = arith.mulf %733, %734 : vector<8x256xf32>
    %736 = arith.mulf %635, %652 : vector<8x256xf32>
    %c255_i32_264 = arith.constant 255 : i32
    %737 = tpu.dynamic_rotate %736 by %c255_i32_264 dim 1 : vector<8x256xf32>, i32 -> vector<8x256xf32>
    %cst_265 = arith.constant 0.000000e+00 : f32
    %738 = vector.broadcast %cst_265 : f32 to vector<8x256xf32>
    %739 = arith.select %4, %737, %738 : vector<8x256xi1>, vector<8x256xf32>
    %c1_i32_266 = arith.constant 1 : i32
    %740 = tpu.dynamic_rotate %736 by %c1_i32_266 dim 1 : vector<8x256xf32>, i32 -> vector<8x256xf32>
    %cst_267 = arith.constant 0.000000e+00 : f32
    %741 = vector.broadcast %cst_267 : f32 to vector<8x256xf32>
    %742 = arith.select %6, %740, %741 : vector<8x256xi1>, vector<8x256xf32>
    %743 = arith.addf %739, %742 : vector<8x256xf32>
    %744 = arith.addf %743, %736 : vector<8x256xf32>
    %c240_i32_268 = arith.constant 240 : i32
    %745 = tpu.dynamic_rotate %744 by %c240_i32_268 dim 1 : vector<8x256xf32>, i32 -> vector<8x256xf32>
    %cst_269 = arith.constant 0.000000e+00 : f32
    %746 = vector.broadcast %cst_269 : f32 to vector<8x256xf32>
    %747 = arith.select %8, %745, %746 : vector<8x256xi1>, vector<8x256xf32>
    %c16_i32_270 = arith.constant 16 : i32
    %748 = tpu.dynamic_rotate %744 by %c16_i32_270 dim 1 : vector<8x256xf32>, i32 -> vector<8x256xf32>
    %cst_271 = arith.constant 0.000000e+00 : f32
    %749 = vector.broadcast %cst_271 : f32 to vector<8x256xf32>
    %750 = arith.select %10, %748, %749 : vector<8x256xi1>, vector<8x256xf32>
    %751 = arith.addf %747, %750 : vector<8x256xf32>
    %752 = arith.addf %751, %744 : vector<8x256xf32>
    %753 = vector.extract_strided_slice %752 {offsets = [1, 0], sizes = [7, 256], strides = [1, 1]} : vector<8x256xf32> to vector<7x256xf32>
    %754 = tpu.concatenate %753, %11 in 0 : vector<7x256xf32>, vector<1x256xf32> -> vector<8x256xf32>
    %755 = vector.extract_strided_slice %752 {offsets = [0, 0], sizes = [7, 256], strides = [1, 1]} : vector<8x256xf32> to vector<7x256xf32>
    %756 = tpu.concatenate %11, %755 in 0 : vector<1x256xf32>, vector<7x256xf32> -> vector<8x256xf32>
    %757 = arith.addf %754, %756 : vector<8x256xf32>
    %758 = arith.addf %757, %752 : vector<8x256xf32>
    %cst_272 = arith.constant 0.0370370373 : f32
    %759 = vector.broadcast %cst_272 : f32 to vector<8x256xf32>
    %760 = arith.mulf %758, %759 : vector<8x256xf32>
    %761 = arith.mulf %635, %660 : vector<8x256xf32>
    %c255_i32_273 = arith.constant 255 : i32
    %762 = tpu.dynamic_rotate %761 by %c255_i32_273 dim 1 : vector<8x256xf32>, i32 -> vector<8x256xf32>
    %cst_274 = arith.constant 0.000000e+00 : f32
    %763 = vector.broadcast %cst_274 : f32 to vector<8x256xf32>
    %764 = arith.select %4, %762, %763 : vector<8x256xi1>, vector<8x256xf32>
    %c1_i32_275 = arith.constant 1 : i32
    %765 = tpu.dynamic_rotate %761 by %c1_i32_275 dim 1 : vector<8x256xf32>, i32 -> vector<8x256xf32>
    %cst_276 = arith.constant 0.000000e+00 : f32
    %766 = vector.broadcast %cst_276 : f32 to vector<8x256xf32>
    %767 = arith.select %6, %765, %766 : vector<8x256xi1>, vector<8x256xf32>
    %768 = arith.addf %764, %767 : vector<8x256xf32>
    %769 = arith.addf %768, %761 : vector<8x256xf32>
    %c240_i32_277 = arith.constant 240 : i32
    %770 = tpu.dynamic_rotate %769 by %c240_i32_277 dim 1 : vector<8x256xf32>, i32 -> vector<8x256xf32>
    %cst_278 = arith.constant 0.000000e+00 : f32
    %771 = vector.broadcast %cst_278 : f32 to vector<8x256xf32>
    %772 = arith.select %8, %770, %771 : vector<8x256xi1>, vector<8x256xf32>
    %c16_i32_279 = arith.constant 16 : i32
    %773 = tpu.dynamic_rotate %769 by %c16_i32_279 dim 1 : vector<8x256xf32>, i32 -> vector<8x256xf32>
    %cst_280 = arith.constant 0.000000e+00 : f32
    %774 = vector.broadcast %cst_280 : f32 to vector<8x256xf32>
    %775 = arith.select %10, %773, %774 : vector<8x256xi1>, vector<8x256xf32>
    %776 = arith.addf %772, %775 : vector<8x256xf32>
    %777 = arith.addf %776, %769 : vector<8x256xf32>
    %778 = vector.extract_strided_slice %777 {offsets = [1, 0], sizes = [7, 256], strides = [1, 1]} : vector<8x256xf32> to vector<7x256xf32>
    %779 = tpu.concatenate %778, %11 in 0 : vector<7x256xf32>, vector<1x256xf32> -> vector<8x256xf32>
    %780 = vector.extract_strided_slice %777 {offsets = [0, 0], sizes = [7, 256], strides = [1, 1]} : vector<8x256xf32> to vector<7x256xf32>
    %781 = tpu.concatenate %11, %780 in 0 : vector<1x256xf32>, vector<7x256xf32> -> vector<8x256xf32>
    %782 = arith.addf %779, %781 : vector<8x256xf32>
    %783 = arith.addf %782, %777 : vector<8x256xf32>
    %cst_281 = arith.constant 0.0370370373 : f32
    %784 = vector.broadcast %cst_281 : f32 to vector<8x256xf32>
    %785 = arith.mulf %783, %784 : vector<8x256xf32>
    %786 = arith.mulf %652, %660 : vector<8x256xf32>
    %c255_i32_282 = arith.constant 255 : i32
    %787 = tpu.dynamic_rotate %786 by %c255_i32_282 dim 1 : vector<8x256xf32>, i32 -> vector<8x256xf32>
    %cst_283 = arith.constant 0.000000e+00 : f32
    %788 = vector.broadcast %cst_283 : f32 to vector<8x256xf32>
    %789 = arith.select %4, %787, %788 : vector<8x256xi1>, vector<8x256xf32>
    %c1_i32_284 = arith.constant 1 : i32
    %790 = tpu.dynamic_rotate %786 by %c1_i32_284 dim 1 : vector<8x256xf32>, i32 -> vector<8x256xf32>
    %cst_285 = arith.constant 0.000000e+00 : f32
    %791 = vector.broadcast %cst_285 : f32 to vector<8x256xf32>
    %792 = arith.select %6, %790, %791 : vector<8x256xi1>, vector<8x256xf32>
    %793 = arith.addf %789, %792 : vector<8x256xf32>
    %794 = arith.addf %793, %786 : vector<8x256xf32>
    %c240_i32_286 = arith.constant 240 : i32
    %795 = tpu.dynamic_rotate %794 by %c240_i32_286 dim 1 : vector<8x256xf32>, i32 -> vector<8x256xf32>
    %cst_287 = arith.constant 0.000000e+00 : f32
    %796 = vector.broadcast %cst_287 : f32 to vector<8x256xf32>
    %797 = arith.select %8, %795, %796 : vector<8x256xi1>, vector<8x256xf32>
    %c16_i32_288 = arith.constant 16 : i32
    %798 = tpu.dynamic_rotate %794 by %c16_i32_288 dim 1 : vector<8x256xf32>, i32 -> vector<8x256xf32>
    %cst_289 = arith.constant 0.000000e+00 : f32
    %799 = vector.broadcast %cst_289 : f32 to vector<8x256xf32>
    %800 = arith.select %10, %798, %799 : vector<8x256xi1>, vector<8x256xf32>
    %801 = arith.addf %797, %800 : vector<8x256xf32>
    %802 = arith.addf %801, %794 : vector<8x256xf32>
    %803 = vector.extract_strided_slice %802 {offsets = [1, 0], sizes = [7, 256], strides = [1, 1]} : vector<8x256xf32> to vector<7x256xf32>
    %804 = tpu.concatenate %803, %11 in 0 : vector<7x256xf32>, vector<1x256xf32> -> vector<8x256xf32>
    %805 = vector.extract_strided_slice %802 {offsets = [0, 0], sizes = [7, 256], strides = [1, 1]} : vector<8x256xf32> to vector<7x256xf32>
    %806 = tpu.concatenate %11, %805 in 0 : vector<1x256xf32>, vector<7x256xf32> -> vector<8x256xf32>
    %807 = arith.addf %804, %806 : vector<8x256xf32>
    %808 = arith.addf %807, %802 : vector<8x256xf32>
    %cst_290 = arith.constant 0.0370370373 : f32
    %809 = vector.broadcast %cst_290 : f32 to vector<8x256xf32>
    %810 = arith.mulf %808, %809 : vector<8x256xf32>
    %811 = arith.mulf %710, %735 : vector<8x256xf32>
    %812 = arith.mulf %810, %810 : vector<8x256xf32>
    %813 = arith.subf %811, %812 : vector<8x256xf32>
    %814 = arith.mulf %685, %813 : vector<8x256xf32>
    %815 = arith.mulf %760, %735 : vector<8x256xf32>
    %816 = arith.mulf %810, %785 : vector<8x256xf32>
    %817 = arith.subf %815, %816 : vector<8x256xf32>
    %818 = arith.mulf %760, %817 : vector<8x256xf32>
    %819 = arith.subf %814, %818 : vector<8x256xf32>
    %820 = arith.mulf %760, %810 : vector<8x256xf32>
    %821 = arith.mulf %710, %785 : vector<8x256xf32>
    %822 = arith.subf %820, %821 : vector<8x256xf32>
    %823 = arith.mulf %785, %822 : vector<8x256xf32>
    %824 = arith.addf %819, %823 : vector<8x256xf32>
    %825 = arith.addf %685, %710 : vector<8x256xf32>
    %826 = arith.addf %825, %735 : vector<8x256xf32>
    %cst_291 = arith.constant 4.000000e-02 : f32
    %827 = vector.broadcast %cst_291 : f32 to vector<8x256xf32>
    %828 = arith.mulf %827, %826 : vector<8x256xf32>
    %829 = arith.mulf %828, %826 : vector<8x256xf32>
    %830 = arith.subf %824, %829 : vector<8x256xf32>
    %831 = vector.shape_cast %830 : vector<8x256xf32> to vector<1x8x256xf32>
    %cst_292 = arith.constant dense<0.000000e+00> : vector<1xf32>
    %832 = vector.multi_reduction <add>, %831, %cst_292 [1, 2] : vector<1x8x256xf32> to vector<1xf32>
    %833 = vector.shape_cast %832 : vector<1xf32> to vector<1x1x1xf32>
    %834 = vector.extract %833[0, 0, 0] : f32 from vector<1x1x1xf32>
    %835 = vector.broadcast %834 : f32 to vector<1x1xf32>
    %c0_293 = arith.constant 0 : index
    %c0_294 = arith.constant 0 : index
    %c2_295 = arith.constant 2 : index
    %836 = vector.load %arg2[%c0_293, %c0_294, %c2_295] : memref<1x2x4xf32, #tpu.memory_space<vmem>>, vector<1x1x1xf32>
    %837 = vector.shape_cast %836 : vector<1x1x1xf32> to vector<1x1xf32>
    %838 = vector.shape_cast %835 : vector<1x1xf32> to vector<1x1x1xf32>
    tpu.vector_store %arg2[%c0_293, %c0_294, %c2_295], %838 {strides = array<i32>} : memref<1x2x4xf32, #tpu.memory_space<vmem>>, vector<1x1x1xf32>,
    %839 = vector.broadcast %617 : f32 to vector<1x1xf32>
    %c0_296 = arith.constant 0 : index
    %c1_297 = arith.constant 1 : index
    %c2_298 = arith.constant 2 : index
    %840 = vector.load %arg2[%c0_296, %c1_297, %c2_298] : memref<1x2x4xf32, #tpu.memory_space<vmem>>, vector<1x1x1xf32>
    %841 = vector.shape_cast %840 : vector<1x1x1xf32> to vector<1x1xf32>
    %842 = vector.shape_cast %839 : vector<1x1xf32> to vector<1x1x1xf32>
    tpu.vector_store %arg2[%c0_296, %c1_297, %c2_298], %842 {strides = array<i32>} : memref<1x2x4xf32, #tpu.memory_space<vmem>>, vector<1x1x1xf32>,
    %c0_299 = arith.constant 0 : index
    %c3 = arith.constant 3 : index
    %c0_300 = arith.constant 0 : index
    %c0_301 = arith.constant 0 : index
    %843 = vector.load %arg1[%c0_299, %c3, %c0_300, %c0_301] : memref<1x4x8x256xf32, #tpu.memory_space<vmem>>, vector<1x1x8x256xf32>
    %844 = vector.shape_cast %843 : vector<1x1x8x256xf32> to vector<8x256xf32>
    %c255_i32_302 = arith.constant 255 : i32
    %845 = tpu.dynamic_rotate %844 by %c255_i32_302 dim 1 : vector<8x256xf32>, i32 -> vector<8x256xf32>
    %cst_303 = arith.constant 0.000000e+00 : f32
    %846 = vector.broadcast %cst_303 : f32 to vector<8x256xf32>
    %847 = arith.select %4, %845, %846 : vector<8x256xi1>, vector<8x256xf32>
    %c1_i32_304 = arith.constant 1 : i32
    %848 = tpu.dynamic_rotate %844 by %c1_i32_304 dim 1 : vector<8x256xf32>, i32 -> vector<8x256xf32>
    %cst_305 = arith.constant 0.000000e+00 : f32
    %849 = vector.broadcast %cst_305 : f32 to vector<8x256xf32>
    %850 = arith.select %6, %848, %849 : vector<8x256xi1>, vector<8x256xf32>
    %851 = arith.addf %847, %850 : vector<8x256xf32>
    %c240_i32_306 = arith.constant 240 : i32
    %852 = tpu.dynamic_rotate %844 by %c240_i32_306 dim 1 : vector<8x256xf32>, i32 -> vector<8x256xf32>
    %cst_307 = arith.constant 0.000000e+00 : f32
    %853 = vector.broadcast %cst_307 : f32 to vector<8x256xf32>
    %854 = arith.select %8, %852, %853 : vector<8x256xi1>, vector<8x256xf32>
    %c16_i32_308 = arith.constant 16 : i32
    %855 = tpu.dynamic_rotate %844 by %c16_i32_308 dim 1 : vector<8x256xf32>, i32 -> vector<8x256xf32>
    %cst_309 = arith.constant 0.000000e+00 : f32
    %856 = vector.broadcast %cst_309 : f32 to vector<8x256xf32>
    %857 = arith.select %10, %855, %856 : vector<8x256xi1>, vector<8x256xf32>
    %858 = arith.addf %854, %857 : vector<8x256xf32>
    %859 = vector.extract_strided_slice %844 {offsets = [1, 0], sizes = [7, 256], strides = [1, 1]} : vector<8x256xf32> to vector<7x256xf32>
    %860 = tpu.concatenate %859, %11 in 0 : vector<7x256xf32>, vector<1x256xf32> -> vector<8x256xf32>
    %861 = vector.extract_strided_slice %844 {offsets = [0, 0], sizes = [7, 256], strides = [1, 1]} : vector<8x256xf32> to vector<7x256xf32>
    %862 = tpu.concatenate %11, %861 in 0 : vector<1x256xf32>, vector<7x256xf32> -> vector<8x256xf32>
    %863 = arith.addf %860, %862 : vector<8x256xf32>
    %c240_i32_310 = arith.constant 240 : i32
    %864 = tpu.dynamic_rotate %851 by %c240_i32_310 dim 1 : vector<8x256xf32>, i32 -> vector<8x256xf32>
    %cst_311 = arith.constant 0.000000e+00 : f32
    %865 = vector.broadcast %cst_311 : f32 to vector<8x256xf32>
    %866 = arith.select %8, %864, %865 : vector<8x256xi1>, vector<8x256xf32>
    %c16_i32_312 = arith.constant 16 : i32
    %867 = tpu.dynamic_rotate %851 by %c16_i32_312 dim 1 : vector<8x256xf32>, i32 -> vector<8x256xf32>
    %cst_313 = arith.constant 0.000000e+00 : f32
    %868 = vector.broadcast %cst_313 : f32 to vector<8x256xf32>
    %869 = arith.select %10, %867, %868 : vector<8x256xi1>, vector<8x256xf32>
    %870 = arith.addf %866, %869 : vector<8x256xf32>
    %871 = arith.addf %858, %851 : vector<8x256xf32>
    %cst_314 = arith.constant 6.000000e+00 : f32
    %872 = vector.broadcast %cst_314 : f32 to vector<8x256xf32>
    %873 = arith.mulf %872, %844 : vector<8x256xf32>
    %874 = arith.subf %871, %873 : vector<8x256xf32>
    %875 = vector.extract_strided_slice %874 {offsets = [1, 0], sizes = [7, 256], strides = [1, 1]} : vector<8x256xf32> to vector<7x256xf32>
    %876 = tpu.concatenate %875, %11 in 0 : vector<7x256xf32>, vector<1x256xf32> -> vector<8x256xf32>
    %877 = vector.extract_strided_slice %874 {offsets = [0, 0], sizes = [7, 256], strides = [1, 1]} : vector<8x256xf32> to vector<7x256xf32>
    %878 = tpu.concatenate %11, %877 in 0 : vector<1x256xf32>, vector<7x256xf32> -> vector<8x256xf32>
    %879 = arith.addf %876, %878 : vector<8x256xf32>
    %880 = arith.addf %879, %870 : vector<8x256xf32>
    %cst_315 = arith.constant 6.000000e+00 : f32
    %881 = vector.broadcast %cst_315 : f32 to vector<8x256xf32>
    %882 = arith.mulf %881, %858 : vector<8x256xf32>
    %883 = arith.subf %880, %882 : vector<8x256xf32>
    %cst_316 = arith.constant 6.000000e+00 : f32
    %884 = vector.broadcast %cst_316 : f32 to vector<8x256xf32>
    %885 = arith.mulf %884, %851 : vector<8x256xf32>
    %886 = arith.subf %883, %885 : vector<8x256xf32>
    %cst_317 = arith.constant 2.400000e+01 : f32
    %887 = vector.broadcast %cst_317 : f32 to vector<8x256xf32>
    %888 = arith.mulf %887, %844 : vector<8x256xf32>
    %889 = arith.addf %886, %888 : vector<8x256xf32>
    %890 = math.absf %889 : vector<8x256xf32>
    %891 = vector.shape_cast %890 : vector<8x256xf32> to vector<1x8x256xf32>
    %cst_318 = arith.constant dense<0.000000e+00> : vector<1xf32>
    %892 = vector.multi_reduction <add>, %891, %cst_318 [1, 2] : vector<1x8x256xf32> to vector<1xf32>
    %893 = vector.shape_cast %892 : vector<1xf32> to vector<1x1x1xf32>
    %894 = vector.extract %893[0, 0, 0] : f32 from vector<1x1x1xf32>
    %895 = arith.addf %863, %844 : vector<8x256xf32>
    %c240_i32_319 = arith.constant 240 : i32
    %896 = tpu.dynamic_rotate %895 by %c240_i32_319 dim 1 : vector<8x256xf32>, i32 -> vector<8x256xf32>
    %cst_320 = arith.constant 0.000000e+00 : f32
    %897 = vector.broadcast %cst_320 : f32 to vector<8x256xf32>
    %898 = arith.select %8, %896, %897 : vector<8x256xi1>, vector<8x256xf32>
    %c16_i32_321 = arith.constant 16 : i32
    %899 = tpu.dynamic_rotate %895 by %c16_i32_321 dim 1 : vector<8x256xf32>, i32 -> vector<8x256xf32>
    %cst_322 = arith.constant 0.000000e+00 : f32
    %900 = vector.broadcast %cst_322 : f32 to vector<8x256xf32>
    %901 = arith.select %10, %899, %900 : vector<8x256xi1>, vector<8x256xf32>
    %902 = arith.addf %898, %901 : vector<8x256xf32>
    %cst_323 = arith.constant 2.000000e+00 : f32
    %903 = vector.broadcast %cst_323 : f32 to vector<8x256xf32>
    %904 = arith.mulf %903, %895 : vector<8x256xf32>
    %905 = arith.addf %902, %904 : vector<8x256xf32>
    %c255_i32_324 = arith.constant 255 : i32
    %906 = tpu.dynamic_rotate %905 by %c255_i32_324 dim 1 : vector<8x256xf32>, i32 -> vector<8x256xf32>
    %cst_325 = arith.constant 0.000000e+00 : f32
    %907 = vector.broadcast %cst_325 : f32 to vector<8x256xf32>
    %908 = arith.select %4, %906, %907 : vector<8x256xi1>, vector<8x256xf32>
    %c1_i32_326 = arith.constant 1 : i32
    %909 = tpu.dynamic_rotate %905 by %c1_i32_326 dim 1 : vector<8x256xf32>, i32 -> vector<8x256xf32>
    %cst_327 = arith.constant 0.000000e+00 : f32
    %910 = vector.broadcast %cst_327 : f32 to vector<8x256xf32>
    %911 = arith.select %6, %909, %910 : vector<8x256xi1>, vector<8x256xf32>
    %912 = arith.subf %908, %911 : vector<8x256xf32>
    %c255_i32_328 = arith.constant 255 : i32
    %913 = tpu.dynamic_rotate %895 by %c255_i32_328 dim 1 : vector<8x256xf32>, i32 -> vector<8x256xf32>
    %cst_329 = arith.constant 0.000000e+00 : f32
    %914 = vector.broadcast %cst_329 : f32 to vector<8x256xf32>
    %915 = arith.select %4, %913, %914 : vector<8x256xi1>, vector<8x256xf32>
    %c1_i32_330 = arith.constant 1 : i32
    %916 = tpu.dynamic_rotate %895 by %c1_i32_330 dim 1 : vector<8x256xf32>, i32 -> vector<8x256xf32>
    %cst_331 = arith.constant 0.000000e+00 : f32
    %917 = vector.broadcast %cst_331 : f32 to vector<8x256xf32>
    %918 = arith.select %6, %916, %917 : vector<8x256xi1>, vector<8x256xf32>
    %919 = arith.addf %915, %918 : vector<8x256xf32>
    %cst_332 = arith.constant 2.000000e+00 : f32
    %920 = vector.broadcast %cst_332 : f32 to vector<8x256xf32>
    %921 = arith.mulf %920, %895 : vector<8x256xf32>
    %922 = arith.addf %919, %921 : vector<8x256xf32>
    %c240_i32_333 = arith.constant 240 : i32
    %923 = tpu.dynamic_rotate %922 by %c240_i32_333 dim 1 : vector<8x256xf32>, i32 -> vector<8x256xf32>
    %cst_334 = arith.constant 0.000000e+00 : f32
    %924 = vector.broadcast %cst_334 : f32 to vector<8x256xf32>
    %925 = arith.select %8, %923, %924 : vector<8x256xi1>, vector<8x256xf32>
    %c16_i32_335 = arith.constant 16 : i32
    %926 = tpu.dynamic_rotate %922 by %c16_i32_335 dim 1 : vector<8x256xf32>, i32 -> vector<8x256xf32>
    %cst_336 = arith.constant 0.000000e+00 : f32
    %927 = vector.broadcast %cst_336 : f32 to vector<8x256xf32>
    %928 = arith.select %10, %926, %927 : vector<8x256xi1>, vector<8x256xf32>
    %929 = arith.subf %925, %928 : vector<8x256xf32>
    %930 = arith.addf %870, %858 : vector<8x256xf32>
    %931 = arith.addf %930, %851 : vector<8x256xf32>
    %932 = arith.addf %931, %844 : vector<8x256xf32>
    %933 = vector.extract_strided_slice %932 {offsets = [1, 0], sizes = [7, 256], strides = [1, 1]} : vector<8x256xf32> to vector<7x256xf32>
    %934 = tpu.concatenate %933, %11 in 0 : vector<7x256xf32>, vector<1x256xf32> -> vector<8x256xf32>
    %935 = vector.extract_strided_slice %932 {offsets = [0, 0], sizes = [7, 256], strides = [1, 1]} : vector<8x256xf32> to vector<7x256xf32>
    %936 = tpu.concatenate %11, %935 in 0 : vector<1x256xf32>, vector<7x256xf32> -> vector<8x256xf32>
    %937 = arith.subf %934, %936 : vector<8x256xf32>
    %938 = arith.mulf %912, %912 : vector<8x256xf32>
    %c255_i32_337 = arith.constant 255 : i32
    %939 = tpu.dynamic_rotate %938 by %c255_i32_337 dim 1 : vector<8x256xf32>, i32 -> vector<8x256xf32>
    %cst_338 = arith.constant 0.000000e+00 : f32
    %940 = vector.broadcast %cst_338 : f32 to vector<8x256xf32>
    %941 = arith.select %4, %939, %940 : vector<8x256xi1>, vector<8x256xf32>
    %c1_i32_339 = arith.constant 1 : i32
    %942 = tpu.dynamic_rotate %938 by %c1_i32_339 dim 1 : vector<8x256xf32>, i32 -> vector<8x256xf32>
    %cst_340 = arith.constant 0.000000e+00 : f32
    %943 = vector.broadcast %cst_340 : f32 to vector<8x256xf32>
    %944 = arith.select %6, %942, %943 : vector<8x256xi1>, vector<8x256xf32>
    %945 = arith.addf %941, %944 : vector<8x256xf32>
    %946 = arith.addf %945, %938 : vector<8x256xf32>
    %c240_i32_341 = arith.constant 240 : i32
    %947 = tpu.dynamic_rotate %946 by %c240_i32_341 dim 1 : vector<8x256xf32>, i32 -> vector<8x256xf32>
    %cst_342 = arith.constant 0.000000e+00 : f32
    %948 = vector.broadcast %cst_342 : f32 to vector<8x256xf32>
    %949 = arith.select %8, %947, %948 : vector<8x256xi1>, vector<8x256xf32>
    %c16_i32_343 = arith.constant 16 : i32
    %950 = tpu.dynamic_rotate %946 by %c16_i32_343 dim 1 : vector<8x256xf32>, i32 -> vector<8x256xf32>
    %cst_344 = arith.constant 0.000000e+00 : f32
    %951 = vector.broadcast %cst_344 : f32 to vector<8x256xf32>
    %952 = arith.select %10, %950, %951 : vector<8x256xi1>, vector<8x256xf32>
    %953 = arith.addf %949, %952 : vector<8x256xf32>
    %954 = arith.addf %953, %946 : vector<8x256xf32>
    %955 = vector.extract_strided_slice %954 {offsets = [1, 0], sizes = [7, 256], strides = [1, 1]} : vector<8x256xf32> to vector<7x256xf32>
    %956 = tpu.concatenate %955, %11 in 0 : vector<7x256xf32>, vector<1x256xf32> -> vector<8x256xf32>
    %957 = vector.extract_strided_slice %954 {offsets = [0, 0], sizes = [7, 256], strides = [1, 1]} : vector<8x256xf32> to vector<7x256xf32>
    %958 = tpu.concatenate %11, %957 in 0 : vector<1x256xf32>, vector<7x256xf32> -> vector<8x256xf32>
    %959 = arith.addf %956, %958 : vector<8x256xf32>
    %960 = arith.addf %959, %954 : vector<8x256xf32>
    %cst_345 = arith.constant 0.0370370373 : f32
    %961 = vector.broadcast %cst_345 : f32 to vector<8x256xf32>
    %962 = arith.mulf %960, %961 : vector<8x256xf32>
    %963 = arith.mulf %929, %929 : vector<8x256xf32>
    %c255_i32_346 = arith.constant 255 : i32
    %964 = tpu.dynamic_rotate %963 by %c255_i32_346 dim 1 : vector<8x256xf32>, i32 -> vector<8x256xf32>
    %cst_347 = arith.constant 0.000000e+00 : f32
    %965 = vector.broadcast %cst_347 : f32 to vector<8x256xf32>
    %966 = arith.select %4, %964, %965 : vector<8x256xi1>, vector<8x256xf32>
    %c1_i32_348 = arith.constant 1 : i32
    %967 = tpu.dynamic_rotate %963 by %c1_i32_348 dim 1 : vector<8x256xf32>, i32 -> vector<8x256xf32>
    %cst_349 = arith.constant 0.000000e+00 : f32
    %968 = vector.broadcast %cst_349 : f32 to vector<8x256xf32>
    %969 = arith.select %6, %967, %968 : vector<8x256xi1>, vector<8x256xf32>
    %970 = arith.addf %966, %969 : vector<8x256xf32>
    %971 = arith.addf %970, %963 : vector<8x256xf32>
    %c240_i32_350 = arith.constant 240 : i32
    %972 = tpu.dynamic_rotate %971 by %c240_i32_350 dim 1 : vector<8x256xf32>, i32 -> vector<8x256xf32>
    %cst_351 = arith.constant 0.000000e+00 : f32
    %973 = vector.broadcast %cst_351 : f32 to vector<8x256xf32>
    %974 = arith.select %8, %972, %973 : vector<8x256xi1>, vector<8x256xf32>
    %c16_i32_352 = arith.constant 16 : i32
    %975 = tpu.dynamic_rotate %971 by %c16_i32_352 dim 1 : vector<8x256xf32>, i32 -> vector<8x256xf32>
    %cst_353 = arith.constant 0.000000e+00 : f32
    %976 = vector.broadcast %cst_353 : f32 to vector<8x256xf32>
    %977 = arith.select %10, %975, %976 : vector<8x256xi1>, vector<8x256xf32>
    %978 = arith.addf %974, %977 : vector<8x256xf32>
    %979 = arith.addf %978, %971 : vector<8x256xf32>
    %980 = vector.extract_strided_slice %979 {offsets = [1, 0], sizes = [7, 256], strides = [1, 1]} : vector<8x256xf32> to vector<7x256xf32>
    %981 = tpu.concatenate %980, %11 in 0 : vector<7x256xf32>, vector<1x256xf32> -> vector<8x256xf32>
    %982 = vector.extract_strided_slice %979 {offsets = [0, 0], sizes = [7, 256], strides = [1, 1]} : vector<8x256xf32> to vector<7x256xf32>
    %983 = tpu.concatenate %11, %982 in 0 : vector<1x256xf32>, vector<7x256xf32> -> vector<8x256xf32>
    %984 = arith.addf %981, %983 : vector<8x256xf32>
    %985 = arith.addf %984, %979 : vector<8x256xf32>
    %cst_354 = arith.constant 0.0370370373 : f32
    %986 = vector.broadcast %cst_354 : f32 to vector<8x256xf32>
    %987 = arith.mulf %985, %986 : vector<8x256xf32>
    %988 = arith.mulf %937, %937 : vector<8x256xf32>
    %c255_i32_355 = arith.constant 255 : i32
    %989 = tpu.dynamic_rotate %988 by %c255_i32_355 dim 1 : vector<8x256xf32>, i32 -> vector<8x256xf32>
    %cst_356 = arith.constant 0.000000e+00 : f32
    %990 = vector.broadcast %cst_356 : f32 to vector<8x256xf32>
    %991 = arith.select %4, %989, %990 : vector<8x256xi1>, vector<8x256xf32>
    %c1_i32_357 = arith.constant 1 : i32
    %992 = tpu.dynamic_rotate %988 by %c1_i32_357 dim 1 : vector<8x256xf32>, i32 -> vector<8x256xf32>
    %cst_358 = arith.constant 0.000000e+00 : f32
    %993 = vector.broadcast %cst_358 : f32 to vector<8x256xf32>
    %994 = arith.select %6, %992, %993 : vector<8x256xi1>, vector<8x256xf32>
    %995 = arith.addf %991, %994 : vector<8x256xf32>
    %996 = arith.addf %995, %988 : vector<8x256xf32>
    %c240_i32_359 = arith.constant 240 : i32
    %997 = tpu.dynamic_rotate %996 by %c240_i32_359 dim 1 : vector<8x256xf32>, i32 -> vector<8x256xf32>
    %cst_360 = arith.constant 0.000000e+00 : f32
    %998 = vector.broadcast %cst_360 : f32 to vector<8x256xf32>
    %999 = arith.select %8, %997, %998 : vector<8x256xi1>, vector<8x256xf32>
    %c16_i32_361 = arith.constant 16 : i32
    %1000 = tpu.dynamic_rotate %996 by %c16_i32_361 dim 1 : vector<8x256xf32>, i32 -> vector<8x256xf32>
    %cst_362 = arith.constant 0.000000e+00 : f32
    %1001 = vector.broadcast %cst_362 : f32 to vector<8x256xf32>
    %1002 = arith.select %10, %1000, %1001 : vector<8x256xi1>, vector<8x256xf32>
    %1003 = arith.addf %999, %1002 : vector<8x256xf32>
    %1004 = arith.addf %1003, %996 : vector<8x256xf32>
    %1005 = vector.extract_strided_slice %1004 {offsets = [1, 0], sizes = [7, 256], strides = [1, 1]} : vector<8x256xf32> to vector<7x256xf32>
    %1006 = tpu.concatenate %1005, %11 in 0 : vector<7x256xf32>, vector<1x256xf32> -> vector<8x256xf32>
    %1007 = vector.extract_strided_slice %1004 {offsets = [0, 0], sizes = [7, 256], strides = [1, 1]} : vector<8x256xf32> to vector<7x256xf32>
    %1008 = tpu.concatenate %11, %1007 in 0 : vector<1x256xf32>, vector<7x256xf32> -> vector<8x256xf32>
    %1009 = arith.addf %1006, %1008 : vector<8x256xf32>
    %1010 = arith.addf %1009, %1004 : vector<8x256xf32>
    %cst_363 = arith.constant 0.0370370373 : f32
    %1011 = vector.broadcast %cst_363 : f32 to vector<8x256xf32>
    %1012 = arith.mulf %1010, %1011 : vector<8x256xf32>
    %1013 = arith.mulf %912, %929 : vector<8x256xf32>
    %c255_i32_364 = arith.constant 255 : i32
    %1014 = tpu.dynamic_rotate %1013 by %c255_i32_364 dim 1 : vector<8x256xf32>, i32 -> vector<8x256xf32>
    %cst_365 = arith.constant 0.000000e+00 : f32
    %1015 = vector.broadcast %cst_365 : f32 to vector<8x256xf32>
    %1016 = arith.select %4, %1014, %1015 : vector<8x256xi1>, vector<8x256xf32>
    %c1_i32_366 = arith.constant 1 : i32
    %1017 = tpu.dynamic_rotate %1013 by %c1_i32_366 dim 1 : vector<8x256xf32>, i32 -> vector<8x256xf32>
    %cst_367 = arith.constant 0.000000e+00 : f32
    %1018 = vector.broadcast %cst_367 : f32 to vector<8x256xf32>
    %1019 = arith.select %6, %1017, %1018 : vector<8x256xi1>, vector<8x256xf32>
    %1020 = arith.addf %1016, %1019 : vector<8x256xf32>
    %1021 = arith.addf %1020, %1013 : vector<8x256xf32>
    %c240_i32_368 = arith.constant 240 : i32
    %1022 = tpu.dynamic_rotate %1021 by %c240_i32_368 dim 1 : vector<8x256xf32>, i32 -> vector<8x256xf32>
    %cst_369 = arith.constant 0.000000e+00 : f32
    %1023 = vector.broadcast %cst_369 : f32 to vector<8x256xf32>
    %1024 = arith.select %8, %1022, %1023 : vector<8x256xi1>, vector<8x256xf32>
    %c16_i32_370 = arith.constant 16 : i32
    %1025 = tpu.dynamic_rotate %1021 by %c16_i32_370 dim 1 : vector<8x256xf32>, i32 -> vector<8x256xf32>
    %cst_371 = arith.constant 0.000000e+00 : f32
    %1026 = vector.broadcast %cst_371 : f32 to vector<8x256xf32>
    %1027 = arith.select %10, %1025, %1026 : vector<8x256xi1>, vector<8x256xf32>
    %1028 = arith.addf %1024, %1027 : vector<8x256xf32>
    %1029 = arith.addf %1028, %1021 : vector<8x256xf32>
    %1030 = vector.extract_strided_slice %1029 {offsets = [1, 0], sizes = [7, 256], strides = [1, 1]} : vector<8x256xf32> to vector<7x256xf32>
    %1031 = tpu.concatenate %1030, %11 in 0 : vector<7x256xf32>, vector<1x256xf32> -> vector<8x256xf32>
    %1032 = vector.extract_strided_slice %1029 {offsets = [0, 0], sizes = [7, 256], strides = [1, 1]} : vector<8x256xf32> to vector<7x256xf32>
    %1033 = tpu.concatenate %11, %1032 in 0 : vector<1x256xf32>, vector<7x256xf32> -> vector<8x256xf32>
    %1034 = arith.addf %1031, %1033 : vector<8x256xf32>
    %1035 = arith.addf %1034, %1029 : vector<8x256xf32>
    %cst_372 = arith.constant 0.0370370373 : f32
    %1036 = vector.broadcast %cst_372 : f32 to vector<8x256xf32>
    %1037 = arith.mulf %1035, %1036 : vector<8x256xf32>
    %1038 = arith.mulf %912, %937 : vector<8x256xf32>
    %c255_i32_373 = arith.constant 255 : i32
    %1039 = tpu.dynamic_rotate %1038 by %c255_i32_373 dim 1 : vector<8x256xf32>, i32 -> vector<8x256xf32>
    %cst_374 = arith.constant 0.000000e+00 : f32
    %1040 = vector.broadcast %cst_374 : f32 to vector<8x256xf32>
    %1041 = arith.select %4, %1039, %1040 : vector<8x256xi1>, vector<8x256xf32>
    %c1_i32_375 = arith.constant 1 : i32
    %1042 = tpu.dynamic_rotate %1038 by %c1_i32_375 dim 1 : vector<8x256xf32>, i32 -> vector<8x256xf32>
    %cst_376 = arith.constant 0.000000e+00 : f32
    %1043 = vector.broadcast %cst_376 : f32 to vector<8x256xf32>
    %1044 = arith.select %6, %1042, %1043 : vector<8x256xi1>, vector<8x256xf32>
    %1045 = arith.addf %1041, %1044 : vector<8x256xf32>
    %1046 = arith.addf %1045, %1038 : vector<8x256xf32>
    %c240_i32_377 = arith.constant 240 : i32
    %1047 = tpu.dynamic_rotate %1046 by %c240_i32_377 dim 1 : vector<8x256xf32>, i32 -> vector<8x256xf32>
    %cst_378 = arith.constant 0.000000e+00 : f32
    %1048 = vector.broadcast %cst_378 : f32 to vector<8x256xf32>
    %1049 = arith.select %8, %1047, %1048 : vector<8x256xi1>, vector<8x256xf32>
    %c16_i32_379 = arith.constant 16 : i32
    %1050 = tpu.dynamic_rotate %1046 by %c16_i32_379 dim 1 : vector<8x256xf32>, i32 -> vector<8x256xf32>
    %cst_380 = arith.constant 0.000000e+00 : f32
    %1051 = vector.broadcast %cst_380 : f32 to vector<8x256xf32>
    %1052 = arith.select %10, %1050, %1051 : vector<8x256xi1>, vector<8x256xf32>
    %1053 = arith.addf %1049, %1052 : vector<8x256xf32>
    %1054 = arith.addf %1053, %1046 : vector<8x256xf32>
    %1055 = vector.extract_strided_slice %1054 {offsets = [1, 0], sizes = [7, 256], strides = [1, 1]} : vector<8x256xf32> to vector<7x256xf32>
    %1056 = tpu.concatenate %1055, %11 in 0 : vector<7x256xf32>, vector<1x256xf32> -> vector<8x256xf32>
    %1057 = vector.extract_strided_slice %1054 {offsets = [0, 0], sizes = [7, 256], strides = [1, 1]} : vector<8x256xf32> to vector<7x256xf32>
    %1058 = tpu.concatenate %11, %1057 in 0 : vector<1x256xf32>, vector<7x256xf32> -> vector<8x256xf32>
    %1059 = arith.addf %1056, %1058 : vector<8x256xf32>
    %1060 = arith.addf %1059, %1054 : vector<8x256xf32>
    %cst_381 = arith.constant 0.0370370373 : f32
    %1061 = vector.broadcast %cst_381 : f32 to vector<8x256xf32>
    %1062 = arith.mulf %1060, %1061 : vector<8x256xf32>
    %1063 = arith.mulf %929, %937 : vector<8x256xf32>
    %c255_i32_382 = arith.constant 255 : i32
    %1064 = tpu.dynamic_rotate %1063 by %c255_i32_382 dim 1 : vector<8x256xf32>, i32 -> vector<8x256xf32>
    %cst_383 = arith.constant 0.000000e+00 : f32
    %1065 = vector.broadcast %cst_383 : f32 to vector<8x256xf32>
    %1066 = arith.select %4, %1064, %1065 : vector<8x256xi1>, vector<8x256xf32>
    %c1_i32_384 = arith.constant 1 : i32
    %1067 = tpu.dynamic_rotate %1063 by %c1_i32_384 dim 1 : vector<8x256xf32>, i32 -> vector<8x256xf32>
    %cst_385 = arith.constant 0.000000e+00 : f32
    %1068 = vector.broadcast %cst_385 : f32 to vector<8x256xf32>
    %1069 = arith.select %6, %1067, %1068 : vector<8x256xi1>, vector<8x256xf32>
    %1070 = arith.addf %1066, %1069 : vector<8x256xf32>
    %1071 = arith.addf %1070, %1063 : vector<8x256xf32>
    %c240_i32_386 = arith.constant 240 : i32
    %1072 = tpu.dynamic_rotate %1071 by %c240_i32_386 dim 1 : vector<8x256xf32>, i32 -> vector<8x256xf32>
    %cst_387 = arith.constant 0.000000e+00 : f32
    %1073 = vector.broadcast %cst_387 : f32 to vector<8x256xf32>
    %1074 = arith.select %8, %1072, %1073 : vector<8x256xi1>, vector<8x256xf32>
    %c16_i32_388 = arith.constant 16 : i32
    %1075 = tpu.dynamic_rotate %1071 by %c16_i32_388 dim 1 : vector<8x256xf32>, i32 -> vector<8x256xf32>
    %cst_389 = arith.constant 0.000000e+00 : f32
    %1076 = vector.broadcast %cst_389 : f32 to vector<8x256xf32>
    %1077 = arith.select %10, %1075, %1076 : vector<8x256xi1>, vector<8x256xf32>
    %1078 = arith.addf %1074, %1077 : vector<8x256xf32>
    %1079 = arith.addf %1078, %1071 : vector<8x256xf32>
    %1080 = vector.extract_strided_slice %1079 {offsets = [1, 0], sizes = [7, 256], strides = [1, 1]} : vector<8x256xf32> to vector<7x256xf32>
    %1081 = tpu.concatenate %1080, %11 in 0 : vector<7x256xf32>, vector<1x256xf32> -> vector<8x256xf32>
    %1082 = vector.extract_strided_slice %1079 {offsets = [0, 0], sizes = [7, 256], strides = [1, 1]} : vector<8x256xf32> to vector<7x256xf32>
    %1083 = tpu.concatenate %11, %1082 in 0 : vector<1x256xf32>, vector<7x256xf32> -> vector<8x256xf32>
    %1084 = arith.addf %1081, %1083 : vector<8x256xf32>
    %1085 = arith.addf %1084, %1079 : vector<8x256xf32>
    %cst_390 = arith.constant 0.0370370373 : f32
    %1086 = vector.broadcast %cst_390 : f32 to vector<8x256xf32>
    %1087 = arith.mulf %1085, %1086 : vector<8x256xf32>
    %1088 = arith.mulf %987, %1012 : vector<8x256xf32>
    %1089 = arith.mulf %1087, %1087 : vector<8x256xf32>
    %1090 = arith.subf %1088, %1089 : vector<8x256xf32>
    %1091 = arith.mulf %962, %1090 : vector<8x256xf32>
    %1092 = arith.mulf %1037, %1012 : vector<8x256xf32>
    %1093 = arith.mulf %1087, %1062 : vector<8x256xf32>
    %1094 = arith.subf %1092, %1093 : vector<8x256xf32>
    %1095 = arith.mulf %1037, %1094 : vector<8x256xf32>
    %1096 = arith.subf %1091, %1095 : vector<8x256xf32>
    %1097 = arith.mulf %1037, %1087 : vector<8x256xf32>
    %1098 = arith.mulf %987, %1062 : vector<8x256xf32>
    %1099 = arith.subf %1097, %1098 : vector<8x256xf32>
    %1100 = arith.mulf %1062, %1099 : vector<8x256xf32>
    %1101 = arith.addf %1096, %1100 : vector<8x256xf32>
    %1102 = arith.addf %962, %987 : vector<8x256xf32>
    %1103 = arith.addf %1102, %1012 : vector<8x256xf32>
    %cst_391 = arith.constant 4.000000e-02 : f32
    %1104 = vector.broadcast %cst_391 : f32 to vector<8x256xf32>
    %1105 = arith.mulf %1104, %1103 : vector<8x256xf32>
    %1106 = arith.mulf %1105, %1103 : vector<8x256xf32>
    %1107 = arith.subf %1101, %1106 : vector<8x256xf32>
    %1108 = vector.shape_cast %1107 : vector<8x256xf32> to vector<1x8x256xf32>
    %cst_392 = arith.constant dense<0.000000e+00> : vector<1xf32>
    %1109 = vector.multi_reduction <add>, %1108, %cst_392 [1, 2] : vector<1x8x256xf32> to vector<1xf32>
    %1110 = vector.shape_cast %1109 : vector<1xf32> to vector<1x1x1xf32>
    %1111 = vector.extract %1110[0, 0, 0] : f32 from vector<1x1x1xf32>
    %1112 = vector.broadcast %1111 : f32 to vector<1x1xf32>
    %c0_393 = arith.constant 0 : index
    %c0_394 = arith.constant 0 : index
    %c3_395 = arith.constant 3 : index
    %1113 = vector.load %arg2[%c0_393, %c0_394, %c3_395] : memref<1x2x4xf32, #tpu.memory_space<vmem>>, vector<1x1x1xf32>
    %1114 = vector.shape_cast %1113 : vector<1x1x1xf32> to vector<1x1xf32>
    %1115 = vector.shape_cast %1112 : vector<1x1xf32> to vector<1x1x1xf32>
    tpu.vector_store %arg2[%c0_393, %c0_394, %c3_395], %1115 {strides = array<i32>} : memref<1x2x4xf32, #tpu.memory_space<vmem>>, vector<1x1x1xf32>,
    %1116 = vector.broadcast %894 : f32 to vector<1x1xf32>
    %c0_396 = arith.constant 0 : index
    %c1_397 = arith.constant 1 : index
    %c3_398 = arith.constant 3 : index
    %1117 = vector.load %arg2[%c0_396, %c1_397, %c3_398] : memref<1x2x4xf32, #tpu.memory_space<vmem>>, vector<1x1x1xf32>
    %1118 = vector.shape_cast %1117 : vector<1x1x1xf32> to vector<1x1xf32>
    %1119 = vector.shape_cast %1116 : vector<1x1xf32> to vector<1x1x1xf32>
    tpu.vector_store %arg2[%c0_396, %c1_397, %c3_398], %1119 {strides = array<i32>} : memref<1x2x4xf32, #tpu.memory_space<vmem>>, vector<1x1x1xf32>,
    return
  }
  func.func @transform_0(%arg0: i32) -> (i32, i32, i32, i32) {
    %c0_i32 = arith.constant 0 : i32
    %c0_i32_0 = arith.constant 0 : i32
    %c0_i32_1 = arith.constant 0 : i32
    %c0_i32_2 = arith.constant 0 : i32
    return %arg0, %c0_i32, %c0_i32_0, %c0_i32_1 : i32, i32, i32, i32
  }
  func.func @transform_1(%arg0: i32) -> (i32, i32, i32) {
    %c0_i32 = arith.constant 0 : i32
    %c0_i32_0 = arith.constant 0 : i32
    %c0_i32_1 = arith.constant 0 : i32
    return %arg0, %c0_i32, %c0_i32_0 : i32, i32, i32
  }
}

module attributes {stable_mosaic.version = 11 : i64} {
  func.func @_gather_bn_kernel(%arg0: i32, %arg1: memref<8xi32, #tpu.memory_space<smem>>, %arg2: memref<1x1x2048xf32, #tpu.memory_space<vmem>>, %arg3: memref<1x1x2048xf32, #tpu.memory_space<vmem>>, %arg4: memref<1x1x2048xf32, #tpu.memory_space<vmem>>, %arg5: memref<1x1x2048xf32, #tpu.memory_space<vmem>>, %arg6: memref<1x1x2048xf32, #tpu.memory_space<vmem>>, %arg7: memref<1x1x2048xf32, #tpu.memory_space<vmem>>, %arg8: memref<1x1x2048xf32, #tpu.memory_space<vmem>>, %arg9: memref<1x1x2048xf32, #tpu.memory_space<vmem>>, %arg10: memref<4xf32, #tpu.memory_space<smem>>, %arg11: memref<4xf32, #tpu.memory_space<smem>>, %arg12: memref<2x4x2048xf32, #tpu.memory_space<vmem>>) attributes {dimension_semantics = [#tpu.dimension_semantics<arbitrary>], iteration_bounds = array<i64: 1>, scalar_prefetch = 1 : i64, scratch_operands = 0 : i64, tpu.core_type = #tpu.core_type<tc>, window_params = [{transform_indices = @transform_0, window_bounds = array<i64: 1, 1, 2048>}, {transform_indices = @transform_1, window_bounds = array<i64: 1, 1, 2048>}, {transform_indices = @transform_2, window_bounds = array<i64: 1, 1, 2048>}, {transform_indices = @transform_3, window_bounds = array<i64: 1, 1, 2048>}, {transform_indices = @transform_4, window_bounds = array<i64: 1, 1, 2048>}, {transform_indices = @transform_5, window_bounds = array<i64: 1, 1, 2048>}, {transform_indices = @transform_6, window_bounds = array<i64: 1, 1, 2048>}, {transform_indices = @transform_7, window_bounds = array<i64: 1, 1, 2048>}, {transform_indices = @transform_8, window_bounds = array<i64: 4>}, {transform_indices = @transform_9, window_bounds = array<i64: 4>}, {pipeline_mode = #tpu.pipeline_mode<synchronous>, transform_indices = @transform_10, window_bounds = array<i64: 2, 4, 2048>}]} {
    %c0 = arith.constant 0 : index
    %c0_0 = arith.constant 0 : index
    %c0_1 = arith.constant 0 : index
    %0 = vector.load %arg2[%c0, %c0_0, %c0_1] : memref<1x1x2048xf32, #tpu.memory_space<vmem>>, vector<1x1x2048xf32>
    %1 = vector.shape_cast %0 : vector<1x1x2048xf32> to vector<1x2048xf32>
    %c0_2 = arith.constant 0 : index
    %c0_3 = arith.constant 0 : index
    %c0_4 = arith.constant 0 : index
    %2 = vector.load %arg6[%c0_2, %c0_3, %c0_4] : memref<1x1x2048xf32, #tpu.memory_space<vmem>>, vector<1x1x2048xf32>
    %3 = vector.shape_cast %2 : vector<1x1x2048xf32> to vector<1x2048xf32>
    %4 = arith.addf %1, %3 : vector<1x2048xf32>
    %5 = vector.shape_cast %4 : vector<1x2048xf32> to vector<1x1x2048xf32>
    %cst = arith.constant dense<0.000000e+00> : vector<1xf32>
    %6 = vector.multi_reduction <add>, %5, %cst [1, 2] : vector<1x1x2048xf32> to vector<1xf32>
    %7 = vector.shape_cast %6 : vector<1xf32> to vector<1x1x1xf32>
    %8 = vector.extract %7[0, 0, 0] : f32 from vector<1x1x1xf32>
    %cst_5 = arith.constant 2.44140625E-4 : f32
    %9 = arith.mulf %8, %cst_5 : f32
    %10 = vector.broadcast %9 : f32 to vector<1x2048xf32>
    %11 = arith.subf %1, %10 : vector<1x2048xf32>
    %12 = arith.mulf %11, %11 : vector<1x2048xf32>
    %13 = vector.shape_cast %12 : vector<1x2048xf32> to vector<1x1x2048xf32>
    %cst_6 = arith.constant dense<0.000000e+00> : vector<1xf32>
    %14 = vector.multi_reduction <add>, %13, %cst_6 [1, 2] : vector<1x1x2048xf32> to vector<1xf32>
    %15 = vector.shape_cast %14 : vector<1xf32> to vector<1x1x1xf32>
    %16 = vector.extract %15[0, 0, 0] : f32 from vector<1x1x1xf32>
    %17 = vector.broadcast %9 : f32 to vector<1x2048xf32>
    %18 = arith.subf %3, %17 : vector<1x2048xf32>
    %19 = arith.mulf %18, %18 : vector<1x2048xf32>
    %20 = vector.shape_cast %19 : vector<1x2048xf32> to vector<1x1x2048xf32>
    %cst_7 = arith.constant dense<0.000000e+00> : vector<1xf32>
    %21 = vector.multi_reduction <add>, %20, %cst_7 [1, 2] : vector<1x1x2048xf32> to vector<1xf32>
    %22 = vector.shape_cast %21 : vector<1xf32> to vector<1x1x1xf32>
    %23 = vector.extract %22[0, 0, 0] : f32 from vector<1x1x1xf32>
    %24 = arith.addf %16, %23 : f32
    %cst_8 = arith.constant 2.44140625E-4 : f32
    %25 = arith.mulf %24, %cst_8 : f32
    %cst_9 = arith.constant 9.99999974E-6 : f32
    %26 = arith.addf %25, %cst_9 : f32
    %27 = math.rsqrt %26 : f32
    %c0_10 = arith.constant 0 : index
    %28 = memref.load %arg10[%c0_10] : memref<4xf32, #tpu.memory_space<smem>>
    %29 = arith.mulf %27, %28 : f32
    %c0_11 = arith.constant 0 : index
    %30 = memref.load %arg11[%c0_11] : memref<4xf32, #tpu.memory_space<smem>>
    %31 = arith.mulf %9, %29 : f32
    %32 = arith.subf %30, %31 : f32
    %33 = vector.broadcast %29 : f32 to vector<1x2048xf32>
    %34 = arith.mulf %1, %33 : vector<1x2048xf32>
    %35 = vector.broadcast %32 : f32 to vector<1x2048xf32>
    %36 = arith.addf %34, %35 : vector<1x2048xf32>
    %c0_12 = arith.constant 0 : index
    %c0_13 = arith.constant 0 : index
    %c0_14 = arith.constant 0 : index
    %37 = vector.load %arg12[%c0_12, %c0_13, %c0_14] : memref<2x4x2048xf32, #tpu.memory_space<vmem>>, vector<1x1x2048xf32>
    %38 = vector.shape_cast %37 : vector<1x1x2048xf32> to vector<1x2048xf32>
    %39 = vector.shape_cast %36 : vector<1x2048xf32> to vector<1x1x2048xf32>
    tpu.vector_store %arg12[%c0_12, %c0_13, %c0_14], %39 {strides = array<i32>} : memref<2x4x2048xf32, #tpu.memory_space<vmem>>, vector<1x1x2048xf32>,
    %40 = vector.broadcast %29 : f32 to vector<1x2048xf32>
    %41 = arith.mulf %3, %40 : vector<1x2048xf32>
    %42 = vector.broadcast %32 : f32 to vector<1x2048xf32>
    %43 = arith.addf %41, %42 : vector<1x2048xf32>
    %c1 = arith.constant 1 : index
    %c0_15 = arith.constant 0 : index
    %c0_16 = arith.constant 0 : index
    %44 = vector.load %arg12[%c1, %c0_15, %c0_16] : memref<2x4x2048xf32, #tpu.memory_space<vmem>>, vector<1x1x2048xf32>
    %45 = vector.shape_cast %44 : vector<1x1x2048xf32> to vector<1x2048xf32>
    %46 = vector.shape_cast %43 : vector<1x2048xf32> to vector<1x1x2048xf32>
    tpu.vector_store %arg12[%c1, %c0_15, %c0_16], %46 {strides = array<i32>} : memref<2x4x2048xf32, #tpu.memory_space<vmem>>, vector<1x1x2048xf32>,
    %c0_17 = arith.constant 0 : index
    %c0_18 = arith.constant 0 : index
    %c0_19 = arith.constant 0 : index
    %47 = vector.load %arg3[%c0_17, %c0_18, %c0_19] : memref<1x1x2048xf32, #tpu.memory_space<vmem>>, vector<1x1x2048xf32>
    %48 = vector.shape_cast %47 : vector<1x1x2048xf32> to vector<1x2048xf32>
    %c0_20 = arith.constant 0 : index
    %c0_21 = arith.constant 0 : index
    %c0_22 = arith.constant 0 : index
    %49 = vector.load %arg7[%c0_20, %c0_21, %c0_22] : memref<1x1x2048xf32, #tpu.memory_space<vmem>>, vector<1x1x2048xf32>
    %50 = vector.shape_cast %49 : vector<1x1x2048xf32> to vector<1x2048xf32>
    %51 = arith.addf %48, %50 : vector<1x2048xf32>
    %52 = vector.shape_cast %51 : vector<1x2048xf32> to vector<1x1x2048xf32>
    %cst_23 = arith.constant dense<0.000000e+00> : vector<1xf32>
    %53 = vector.multi_reduction <add>, %52, %cst_23 [1, 2] : vector<1x1x2048xf32> to vector<1xf32>
    %54 = vector.shape_cast %53 : vector<1xf32> to vector<1x1x1xf32>
    %55 = vector.extract %54[0, 0, 0] : f32 from vector<1x1x1xf32>
    %cst_24 = arith.constant 2.44140625E-4 : f32
    %56 = arith.mulf %55, %cst_24 : f32
    %57 = vector.broadcast %56 : f32 to vector<1x2048xf32>
    %58 = arith.subf %48, %57 : vector<1x2048xf32>
    %59 = arith.mulf %58, %58 : vector<1x2048xf32>
    %60 = vector.shape_cast %59 : vector<1x2048xf32> to vector<1x1x2048xf32>
    %cst_25 = arith.constant dense<0.000000e+00> : vector<1xf32>
    %61 = vector.multi_reduction <add>, %60, %cst_25 [1, 2] : vector<1x1x2048xf32> to vector<1xf32>
    %62 = vector.shape_cast %61 : vector<1xf32> to vector<1x1x1xf32>
    %63 = vector.extract %62[0, 0, 0] : f32 from vector<1x1x1xf32>
    %64 = vector.broadcast %56 : f32 to vector<1x2048xf32>
    %65 = arith.subf %50, %64 : vector<1x2048xf32>
    %66 = arith.mulf %65, %65 : vector<1x2048xf32>
    %67 = vector.shape_cast %66 : vector<1x2048xf32> to vector<1x1x2048xf32>
    %cst_26 = arith.constant dense<0.000000e+00> : vector<1xf32>
    %68 = vector.multi_reduction <add>, %67, %cst_26 [1, 2] : vector<1x1x2048xf32> to vector<1xf32>
    %69 = vector.shape_cast %68 : vector<1xf32> to vector<1x1x1xf32>
    %70 = vector.extract %69[0, 0, 0] : f32 from vector<1x1x1xf32>
    %71 = arith.addf %63, %70 : f32
    %cst_27 = arith.constant 2.44140625E-4 : f32
    %72 = arith.mulf %71, %cst_27 : f32
    %cst_28 = arith.constant 9.99999974E-6 : f32
    %73 = arith.addf %72, %cst_28 : f32
    %74 = math.rsqrt %73 : f32
    %c1_29 = arith.constant 1 : index
    %75 = memref.load %arg10[%c1_29] : memref<4xf32, #tpu.memory_space<smem>>
    %76 = arith.mulf %74, %75 : f32
    %c1_30 = arith.constant 1 : index
    %77 = memref.load %arg11[%c1_30] : memref<4xf32, #tpu.memory_space<smem>>
    %78 = arith.mulf %56, %76 : f32
    %79 = arith.subf %77, %78 : f32
    %80 = vector.broadcast %76 : f32 to vector<1x2048xf32>
    %81 = arith.mulf %48, %80 : vector<1x2048xf32>
    %82 = vector.broadcast %79 : f32 to vector<1x2048xf32>
    %83 = arith.addf %81, %82 : vector<1x2048xf32>
    %c0_31 = arith.constant 0 : index
    %c1_32 = arith.constant 1 : index
    %c0_33 = arith.constant 0 : index
    %84 = vector.load %arg12[%c0_31, %c1_32, %c0_33] : memref<2x4x2048xf32, #tpu.memory_space<vmem>>, vector<1x1x2048xf32>
    %85 = vector.shape_cast %84 : vector<1x1x2048xf32> to vector<1x2048xf32>
    %86 = vector.shape_cast %83 : vector<1x2048xf32> to vector<1x1x2048xf32>
    tpu.vector_store %arg12[%c0_31, %c1_32, %c0_33], %86 {strides = array<i32>} : memref<2x4x2048xf32, #tpu.memory_space<vmem>>, vector<1x1x2048xf32>,
    %87 = vector.broadcast %76 : f32 to vector<1x2048xf32>
    %88 = arith.mulf %50, %87 : vector<1x2048xf32>
    %89 = vector.broadcast %79 : f32 to vector<1x2048xf32>
    %90 = arith.addf %88, %89 : vector<1x2048xf32>
    %c1_34 = arith.constant 1 : index
    %c1_35 = arith.constant 1 : index
    %c0_36 = arith.constant 0 : index
    %91 = vector.load %arg12[%c1_34, %c1_35, %c0_36] : memref<2x4x2048xf32, #tpu.memory_space<vmem>>, vector<1x1x2048xf32>
    %92 = vector.shape_cast %91 : vector<1x1x2048xf32> to vector<1x2048xf32>
    %93 = vector.shape_cast %90 : vector<1x2048xf32> to vector<1x1x2048xf32>
    tpu.vector_store %arg12[%c1_34, %c1_35, %c0_36], %93 {strides = array<i32>} : memref<2x4x2048xf32, #tpu.memory_space<vmem>>, vector<1x1x2048xf32>,
    %c0_37 = arith.constant 0 : index
    %c0_38 = arith.constant 0 : index
    %c0_39 = arith.constant 0 : index
    %94 = vector.load %arg4[%c0_37, %c0_38, %c0_39] : memref<1x1x2048xf32, #tpu.memory_space<vmem>>, vector<1x1x2048xf32>
    %95 = vector.shape_cast %94 : vector<1x1x2048xf32> to vector<1x2048xf32>
    %c0_40 = arith.constant 0 : index
    %c0_41 = arith.constant 0 : index
    %c0_42 = arith.constant 0 : index
    %96 = vector.load %arg8[%c0_40, %c0_41, %c0_42] : memref<1x1x2048xf32, #tpu.memory_space<vmem>>, vector<1x1x2048xf32>
    %97 = vector.shape_cast %96 : vector<1x1x2048xf32> to vector<1x2048xf32>
    %98 = arith.addf %95, %97 : vector<1x2048xf32>
    %99 = vector.shape_cast %98 : vector<1x2048xf32> to vector<1x1x2048xf32>
    %cst_43 = arith.constant dense<0.000000e+00> : vector<1xf32>
    %100 = vector.multi_reduction <add>, %99, %cst_43 [1, 2] : vector<1x1x2048xf32> to vector<1xf32>
    %101 = vector.shape_cast %100 : vector<1xf32> to vector<1x1x1xf32>
    %102 = vector.extract %101[0, 0, 0] : f32 from vector<1x1x1xf32>
    %cst_44 = arith.constant 2.44140625E-4 : f32
    %103 = arith.mulf %102, %cst_44 : f32
    %104 = vector.broadcast %103 : f32 to vector<1x2048xf32>
    %105 = arith.subf %95, %104 : vector<1x2048xf32>
    %106 = arith.mulf %105, %105 : vector<1x2048xf32>
    %107 = vector.shape_cast %106 : vector<1x2048xf32> to vector<1x1x2048xf32>
    %cst_45 = arith.constant dense<0.000000e+00> : vector<1xf32>
    %108 = vector.multi_reduction <add>, %107, %cst_45 [1, 2] : vector<1x1x2048xf32> to vector<1xf32>
    %109 = vector.shape_cast %108 : vector<1xf32> to vector<1x1x1xf32>
    %110 = vector.extract %109[0, 0, 0] : f32 from vector<1x1x1xf32>
    %111 = vector.broadcast %103 : f32 to vector<1x2048xf32>
    %112 = arith.subf %97, %111 : vector<1x2048xf32>
    %113 = arith.mulf %112, %112 : vector<1x2048xf32>
    %114 = vector.shape_cast %113 : vector<1x2048xf32> to vector<1x1x2048xf32>
    %cst_46 = arith.constant dense<0.000000e+00> : vector<1xf32>
    %115 = vector.multi_reduction <add>, %114, %cst_46 [1, 2] : vector<1x1x2048xf32> to vector<1xf32>
    %116 = vector.shape_cast %115 : vector<1xf32> to vector<1x1x1xf32>
    %117 = vector.extract %116[0, 0, 0] : f32 from vector<1x1x1xf32>
    %118 = arith.addf %110, %117 : f32
    %cst_47 = arith.constant 2.44140625E-4 : f32
    %119 = arith.mulf %118, %cst_47 : f32
    %cst_48 = arith.constant 9.99999974E-6 : f32
    %120 = arith.addf %119, %cst_48 : f32
    %121 = math.rsqrt %120 : f32
    %c2 = arith.constant 2 : index
    %122 = memref.load %arg10[%c2] : memref<4xf32, #tpu.memory_space<smem>>
    %123 = arith.mulf %121, %122 : f32
    %c2_49 = arith.constant 2 : index
    %124 = memref.load %arg11[%c2_49] : memref<4xf32, #tpu.memory_space<smem>>
    %125 = arith.mulf %103, %123 : f32
    %126 = arith.subf %124, %125 : f32
    %127 = vector.broadcast %123 : f32 to vector<1x2048xf32>
    %128 = arith.mulf %95, %127 : vector<1x2048xf32>
    %129 = vector.broadcast %126 : f32 to vector<1x2048xf32>
    %130 = arith.addf %128, %129 : vector<1x2048xf32>
    %c0_50 = arith.constant 0 : index
    %c2_51 = arith.constant 2 : index
    %c0_52 = arith.constant 0 : index
    %131 = vector.load %arg12[%c0_50, %c2_51, %c0_52] : memref<2x4x2048xf32, #tpu.memory_space<vmem>>, vector<1x1x2048xf32>
    %132 = vector.shape_cast %131 : vector<1x1x2048xf32> to vector<1x2048xf32>
    %133 = vector.shape_cast %130 : vector<1x2048xf32> to vector<1x1x2048xf32>
    tpu.vector_store %arg12[%c0_50, %c2_51, %c0_52], %133 {strides = array<i32>} : memref<2x4x2048xf32, #tpu.memory_space<vmem>>, vector<1x1x2048xf32>,
    %134 = vector.broadcast %123 : f32 to vector<1x2048xf32>
    %135 = arith.mulf %97, %134 : vector<1x2048xf32>
    %136 = vector.broadcast %126 : f32 to vector<1x2048xf32>
    %137 = arith.addf %135, %136 : vector<1x2048xf32>
    %c1_53 = arith.constant 1 : index
    %c2_54 = arith.constant 2 : index
    %c0_55 = arith.constant 0 : index
    %138 = vector.load %arg12[%c1_53, %c2_54, %c0_55] : memref<2x4x2048xf32, #tpu.memory_space<vmem>>, vector<1x1x2048xf32>
    %139 = vector.shape_cast %138 : vector<1x1x2048xf32> to vector<1x2048xf32>
    %140 = vector.shape_cast %137 : vector<1x2048xf32> to vector<1x1x2048xf32>
    tpu.vector_store %arg12[%c1_53, %c2_54, %c0_55], %140 {strides = array<i32>} : memref<2x4x2048xf32, #tpu.memory_space<vmem>>, vector<1x1x2048xf32>,
    %c0_56 = arith.constant 0 : index
    %c0_57 = arith.constant 0 : index
    %c0_58 = arith.constant 0 : index
    %141 = vector.load %arg5[%c0_56, %c0_57, %c0_58] : memref<1x1x2048xf32, #tpu.memory_space<vmem>>, vector<1x1x2048xf32>
    %142 = vector.shape_cast %141 : vector<1x1x2048xf32> to vector<1x2048xf32>
    %c0_59 = arith.constant 0 : index
    %c0_60 = arith.constant 0 : index
    %c0_61 = arith.constant 0 : index
    %143 = vector.load %arg9[%c0_59, %c0_60, %c0_61] : memref<1x1x2048xf32, #tpu.memory_space<vmem>>, vector<1x1x2048xf32>
    %144 = vector.shape_cast %143 : vector<1x1x2048xf32> to vector<1x2048xf32>
    %145 = arith.addf %142, %144 : vector<1x2048xf32>
    %146 = vector.shape_cast %145 : vector<1x2048xf32> to vector<1x1x2048xf32>
    %cst_62 = arith.constant dense<0.000000e+00> : vector<1xf32>
    %147 = vector.multi_reduction <add>, %146, %cst_62 [1, 2] : vector<1x1x2048xf32> to vector<1xf32>
    %148 = vector.shape_cast %147 : vector<1xf32> to vector<1x1x1xf32>
    %149 = vector.extract %148[0, 0, 0] : f32 from vector<1x1x1xf32>
    %cst_63 = arith.constant 2.44140625E-4 : f32
    %150 = arith.mulf %149, %cst_63 : f32
    %151 = vector.broadcast %150 : f32 to vector<1x2048xf32>
    %152 = arith.subf %142, %151 : vector<1x2048xf32>
    %153 = arith.mulf %152, %152 : vector<1x2048xf32>
    %154 = vector.shape_cast %153 : vector<1x2048xf32> to vector<1x1x2048xf32>
    %cst_64 = arith.constant dense<0.000000e+00> : vector<1xf32>
    %155 = vector.multi_reduction <add>, %154, %cst_64 [1, 2] : vector<1x1x2048xf32> to vector<1xf32>
    %156 = vector.shape_cast %155 : vector<1xf32> to vector<1x1x1xf32>
    %157 = vector.extract %156[0, 0, 0] : f32 from vector<1x1x1xf32>
    %158 = vector.broadcast %150 : f32 to vector<1x2048xf32>
    %159 = arith.subf %144, %158 : vector<1x2048xf32>
    %160 = arith.mulf %159, %159 : vector<1x2048xf32>
    %161 = vector.shape_cast %160 : vector<1x2048xf32> to vector<1x1x2048xf32>
    %cst_65 = arith.constant dense<0.000000e+00> : vector<1xf32>
    %162 = vector.multi_reduction <add>, %161, %cst_65 [1, 2] : vector<1x1x2048xf32> to vector<1xf32>
    %163 = vector.shape_cast %162 : vector<1xf32> to vector<1x1x1xf32>
    %164 = vector.extract %163[0, 0, 0] : f32 from vector<1x1x1xf32>
    %165 = arith.addf %157, %164 : f32
    %cst_66 = arith.constant 2.44140625E-4 : f32
    %166 = arith.mulf %165, %cst_66 : f32
    %cst_67 = arith.constant 9.99999974E-6 : f32
    %167 = arith.addf %166, %cst_67 : f32
    %168 = math.rsqrt %167 : f32
    %c3 = arith.constant 3 : index
    %169 = memref.load %arg10[%c3] : memref<4xf32, #tpu.memory_space<smem>>
    %170 = arith.mulf %168, %169 : f32
    %c3_68 = arith.constant 3 : index
    %171 = memref.load %arg11[%c3_68] : memref<4xf32, #tpu.memory_space<smem>>
    %172 = arith.mulf %150, %170 : f32
    %173 = arith.subf %171, %172 : f32
    %174 = vector.broadcast %170 : f32 to vector<1x2048xf32>
    %175 = arith.mulf %142, %174 : vector<1x2048xf32>
    %176 = vector.broadcast %173 : f32 to vector<1x2048xf32>
    %177 = arith.addf %175, %176 : vector<1x2048xf32>
    %c0_69 = arith.constant 0 : index
    %c3_70 = arith.constant 3 : index
    %c0_71 = arith.constant 0 : index
    %178 = vector.load %arg12[%c0_69, %c3_70, %c0_71] : memref<2x4x2048xf32, #tpu.memory_space<vmem>>, vector<1x1x2048xf32>
    %179 = vector.shape_cast %178 : vector<1x1x2048xf32> to vector<1x2048xf32>
    %180 = vector.shape_cast %177 : vector<1x2048xf32> to vector<1x1x2048xf32>
    tpu.vector_store %arg12[%c0_69, %c3_70, %c0_71], %180 {strides = array<i32>} : memref<2x4x2048xf32, #tpu.memory_space<vmem>>, vector<1x1x2048xf32>,
    %181 = vector.broadcast %170 : f32 to vector<1x2048xf32>
    %182 = arith.mulf %144, %181 : vector<1x2048xf32>
    %183 = vector.broadcast %173 : f32 to vector<1x2048xf32>
    %184 = arith.addf %182, %183 : vector<1x2048xf32>
    %c1_72 = arith.constant 1 : index
    %c3_73 = arith.constant 3 : index
    %c0_74 = arith.constant 0 : index
    %185 = vector.load %arg12[%c1_72, %c3_73, %c0_74] : memref<2x4x2048xf32, #tpu.memory_space<vmem>>, vector<1x1x2048xf32>
    %186 = vector.shape_cast %185 : vector<1x1x2048xf32> to vector<1x2048xf32>
    %187 = vector.shape_cast %184 : vector<1x2048xf32> to vector<1x1x2048xf32>
    tpu.vector_store %arg12[%c1_72, %c3_73, %c0_74], %187 {strides = array<i32>} : memref<2x4x2048xf32, #tpu.memory_space<vmem>>, vector<1x1x2048xf32>,
    return
  }
  func.func @transform_0(%arg0: i32, %arg1: memref<8xi32, #tpu.memory_space<smem>>) -> (i32, i32, i32) {
    %c0 = arith.constant 0 : index
    %0 = memref.load %arg1[%c0] : memref<8xi32, #tpu.memory_space<smem>>
    %c0_i32 = arith.constant 0 : i32
    %c0_i32_0 = arith.constant 0 : i32
    %c0_i32_1 = arith.constant 0 : i32
    return %0, %c0_i32, %c0_i32_0 : i32, i32, i32
  }
  func.func @transform_1(%arg0: i32, %arg1: memref<8xi32, #tpu.memory_space<smem>>) -> (i32, i32, i32) {
    %c1 = arith.constant 1 : index
    %0 = memref.load %arg1[%c1] : memref<8xi32, #tpu.memory_space<smem>>
    %c0_i32 = arith.constant 0 : i32
    %c0_i32_0 = arith.constant 0 : i32
    %c0_i32_1 = arith.constant 0 : i32
    return %0, %c0_i32, %c0_i32_0 : i32, i32, i32
  }
  func.func @transform_2(%arg0: i32, %arg1: memref<8xi32, #tpu.memory_space<smem>>) -> (i32, i32, i32) {
    %c2 = arith.constant 2 : index
    %0 = memref.load %arg1[%c2] : memref<8xi32, #tpu.memory_space<smem>>
    %c0_i32 = arith.constant 0 : i32
    %c0_i32_0 = arith.constant 0 : i32
    %c0_i32_1 = arith.constant 0 : i32
    return %0, %c0_i32, %c0_i32_0 : i32, i32, i32
  }
  func.func @transform_3(%arg0: i32, %arg1: memref<8xi32, #tpu.memory_space<smem>>) -> (i32, i32, i32) {
    %c3 = arith.constant 3 : index
    %0 = memref.load %arg1[%c3] : memref<8xi32, #tpu.memory_space<smem>>
    %c0_i32 = arith.constant 0 : i32
    %c0_i32_0 = arith.constant 0 : i32
    %c0_i32_1 = arith.constant 0 : i32
    return %0, %c0_i32, %c0_i32_0 : i32, i32, i32
  }
  func.func @transform_4(%arg0: i32, %arg1: memref<8xi32, #tpu.memory_space<smem>>) -> (i32, i32, i32) {
    %c4 = arith.constant 4 : index
    %0 = memref.load %arg1[%c4] : memref<8xi32, #tpu.memory_space<smem>>
    %c0_i32 = arith.constant 0 : i32
    %c0_i32_0 = arith.constant 0 : i32
    %c0_i32_1 = arith.constant 0 : i32
    return %0, %c0_i32, %c0_i32_0 : i32, i32, i32
  }
  func.func @transform_5(%arg0: i32, %arg1: memref<8xi32, #tpu.memory_space<smem>>) -> (i32, i32, i32) {
    %c5 = arith.constant 5 : index
    %0 = memref.load %arg1[%c5] : memref<8xi32, #tpu.memory_space<smem>>
    %c0_i32 = arith.constant 0 : i32
    %c0_i32_0 = arith.constant 0 : i32
    %c0_i32_1 = arith.constant 0 : i32
    return %0, %c0_i32, %c0_i32_0 : i32, i32, i32
  }
  func.func @transform_6(%arg0: i32, %arg1: memref<8xi32, #tpu.memory_space<smem>>) -> (i32, i32, i32) {
    %c6 = arith.constant 6 : index
    %0 = memref.load %arg1[%c6] : memref<8xi32, #tpu.memory_space<smem>>
    %c0_i32 = arith.constant 0 : i32
    %c0_i32_0 = arith.constant 0 : i32
    %c0_i32_1 = arith.constant 0 : i32
    return %0, %c0_i32, %c0_i32_0 : i32, i32, i32
  }
  func.func @transform_7(%arg0: i32, %arg1: memref<8xi32, #tpu.memory_space<smem>>) -> (i32, i32, i32) {
    %c7 = arith.constant 7 : index
    %0 = memref.load %arg1[%c7] : memref<8xi32, #tpu.memory_space<smem>>
    %c0_i32 = arith.constant 0 : i32
    %c0_i32_0 = arith.constant 0 : i32
    %c0_i32_1 = arith.constant 0 : i32
    return %0, %c0_i32, %c0_i32_0 : i32, i32, i32
  }
  func.func @transform_8(%arg0: i32, %arg1: memref<8xi32, #tpu.memory_space<smem>>) -> i32 {
    %c0_i32 = arith.constant 0 : i32
    %c0_i32_0 = arith.constant 0 : i32
    return %c0_i32 : i32
  }
  func.func @transform_9(%arg0: i32, %arg1: memref<8xi32, #tpu.memory_space<smem>>) -> i32 {
    %c0_i32 = arith.constant 0 : i32
    %c0_i32_0 = arith.constant 0 : i32
    return %c0_i32 : i32
  }
  func.func @transform_10(%arg0: i32, %arg1: memref<8xi32, #tpu.memory_space<smem>>) -> (i32, i32, i32) {
    %c0_i32 = arith.constant 0 : i32
    %c0_i32_0 = arith.constant 0 : i32
    %c0_i32_1 = arith.constant 0 : i32
    %c0_i32_2 = arith.constant 0 : i32
    return %c0_i32, %c0_i32_0, %c0_i32_1 : i32, i32, i32
  }
}

</mosaic_0001>

<llo_original>
// kernel: edge_enhancement_forward.3
$region0: #{edge_enhancement_forward.3}
  #allocation0 [shape = 'u32[]', space=smem, size = 0x4, offset = 0x4, fixed_abs, tag = 'smem constant byte address 0x4 - core index']
  #allocation1 [shape = 'u32[72,128]{1,0:T(1,128)}', space=vmem, size = 0x9000, scoped, tag = 'internal scratch']
  #allocation2 [shape = 's32[1]{0}', space=sflag, size = 0x4, scoped, tag = 'scoped memory for edge_enhancement_forward.3']
  #allocation3 [shape = 'u8[512]{0}', space=smem, size = 0x200, scoped, tag = 'prefetched SMEM operand 0']
  %s0 = inlined_call_operand.vmem [shape: s32[8], index: 0, kind: input, shape index: {}]
  %s1 = inlined_call_operand.vmem [shape: f32[8,1,2048], index: 1, kind: input, shape index: {}, may-alias: {1,2,3,4,5,6,7,8}]
  %s2 = inlined_call_operand.vmem [shape: f32[8,1,2048], index: 2, kind: input, shape index: {}, may-alias: {1,2,3,4,5,6,7,8}]
  %s3 = inlined_call_operand.vmem [shape: f32[8,1,2048], index: 3, kind: input, shape index: {}, may-alias: {1,2,3,4,5,6,7,8}]
  %s4 = inlined_call_operand.vmem [shape: f32[8,1,2048], index: 4, kind: input, shape index: {}, may-alias: {1,2,3,4,5,6,7,8}]
  %s5 = inlined_call_operand.vmem [shape: f32[8,1,2048], index: 5, kind: input, shape index: {}, may-alias: {1,2,3,4,5,6,7,8}]
  %s6 = inlined_call_operand.vmem [shape: f32[8,1,2048], index: 6, kind: input, shape index: {}, may-alias: {1,2,3,4,5,6,7,8}]
  %s7 = inlined_call_operand.vmem [shape: f32[8,1,2048], index: 7, kind: input, shape index: {}, may-alias: {1,2,3,4,5,6,7,8}]
  %s8 = inlined_call_operand.vmem [shape: f32[8,1,2048], index: 8, kind: input, shape index: {}, may-alias: {1,2,3,4,5,6,7,8}]
  %s9 = inlined_call_operand.vmem [shape: f32[4], index: 9, kind: input, shape index: {}]
  %s10 = inlined_call_operand.vmem [shape: f32[4], index: 10, kind: input, shape index: {}]
  %s11 = inlined_call_operand.vmem [shape: f32[2,4,2048], index: 11, kind: output, shape index: {}]
  %s12 = sld [smem:[#allocation0]]
  $region58: #{edge_enhancement_forward.3} parent=0
    _
  %s14 = ssub.s32 1, %s12
  %s15 = scalar_select 0, %s14, %s12
  %s17 = sshll.u32 %s0, 4
  %s18 = int_to_ptr.vmem [resolvable:$true] %s17
  %20 = dma.vmem_to_smem %s18, 16, [#allocation3], [#allocation2]
  %22 = dma.done [#allocation2], 16
  %23 = sfence
  $region1: #{edge_enhancement_forward.3} parent=0
    #allocation4 [shape = 'u8[512]{0}', space=smem, size = 0x200, scoped, tag = 'input window, operand 9, single buffered']
    #allocation5 [shape = 's32[1]{0}', space=sflag, size = 0x4, scoped, tag = 'scoped memory for edge_enhancement_forward.3']
    #allocation6 [shape = 'u8[512]{0}', space=smem, size = 0x200, scoped, tag = 'input window, operand 10, single buffered']
    #allocation7 [shape = 's32[1]{0}', space=sflag, size = 0x4, scoped, tag = 'scoped memory for edge_enhancement_forward.3']
    %24 = vsyncpa [#allocation5], 0
    %25 = vsyncpa [#allocation7], 0
    // Predicated region
    $region2: #{edge_enhancement_forward.3} parent=1 // pred_check
      _
    $region3: #{edge_enhancement_forward.3} parent=1 // pred_check_branch
      %27 = sbr.rel (0) target = $region5
    $region4: #{edge_enhancement_forward.3} parent=1 // pred_region
      %s28 = sld [smem:[#allocation3]]
      %p29 = scmp.lt.s32.totalorder %s28, 7
      %s30 = scalar_select %p29, %s28, 7
      %s31 = smul.addr %s30, 16
      %s32 = scalar_lea.vmem %s1, %s31
      %s33 = sld [smem:[#allocation3]]
    $region5: #{edge_enhancement_forward.3} parent=1 // pred_fallthru
      _
    // Predicated region
    $region6: #{edge_enhancement_forward.3} parent=1 // pred_check
      _
    $region7: #{edge_enhancement_forward.3} parent=1 // pred_check_branch
      %35 = sbr.rel (0) target = $region9
    $region8: #{edge_enhancement_forward.3} parent=1 // pred_region
      %s36 = sld [smem:[#allocation3 + $0x1]]
      %p37 = scmp.lt.s32.totalorder %s36, 7
      %s38 = scalar_select %p37, %s36, 7
      %s39 = smul.addr %s38, 16
      %s40 = scalar_lea.vmem %s2, %s39
      %s41 = sld [smem:[#allocation3 + $0x1]]
    $region9: #{edge_enhancement_forward.3} parent=1 // pred_fallthru
      _
    // Predicated region
    $region10: #{edge_enhancement_forward.3} parent=1 // pred_check
      _
    $region11: #{edge_enhancement_forward.3} parent=1 // pred_check_branch
      %43 = sbr.rel (0) target = $region13
    $region12: #{edge_enhancement_forward.3} parent=1 // pred_region
      %s44 = sld [smem:[#allocation3 + $0x2]]
      %p45 = scmp.lt.s32.totalorder %s44, 7
      %s46 = scalar_select %p45, %s44, 7
      %s47 = smul.addr %s46, 16
      %s48 = scalar_lea.vmem %s3, %s47
      %s49 = sld [smem:[#allocation3 + $0x2]]
    $region13: #{edge_enhancement_forward.3} parent=1 // pred_fallthru
      _
    // Predicated region
    $region14: #{edge_enhancement_forward.3} parent=1 // pred_check
      _
    $region15: #{edge_enhancement_forward.3} parent=1 // pred_check_branch
      %51 = sbr.rel (0) target = $region17
    $region16: #{edge_enhancement_forward.3} parent=1 // pred_region
      %s52 = sld [smem:[#allocation3 + $0x3]]
      %p53 = scmp.lt.s32.totalorder %s52, 7
      %s54 = scalar_select %p53, %s52, 7
      %s55 = smul.addr %s54, 16
      %s56 = scalar_lea.vmem %s4, %s55
      %s57 = sld [smem:[#allocation3 + $0x3]]
    $region17: #{edge_enhancement_forward.3} parent=1 // pred_fallthru
      _
    // Predicated region
    $region18: #{edge_enhancement_forward.3} parent=1 // pred_check
      _
    $region19: #{edge_enhancement_forward.3} parent=1 // pred_check_branch
      %59 = sbr.rel (0) target = $region21
    $region20: #{edge_enhancement_forward.3} parent=1 // pred_region
      %s60 = sld [smem:[#allocation3 + $0x4]]
      %p61 = scmp.lt.s32.totalorder %s60, 7
      %s62 = scalar_select %p61, %s60, 7
      %s63 = smul.addr %s62, 16
      %s64 = scalar_lea.vmem %s5, %s63
      %s65 = sld [smem:[#allocation3 + $0x4]]
    $region21: #{edge_enhancement_forward.3} parent=1 // pred_fallthru
      _
    // Predicated region
    $region22: #{edge_enhancement_forward.3} parent=1 // pred_check
      _
    $region23: #{edge_enhancement_forward.3} parent=1 // pred_check_branch
      %67 = sbr.rel (0) target = $region25
    $region24: #{edge_enhancement_forward.3} parent=1 // pred_region
      %s68 = sld [smem:[#allocation3 + $0x5]]
      %p69 = scmp.lt.s32.totalorder %s68, 7
      %s70 = scalar_select %p69, %s68, 7
      %s71 = smul.addr %s70, 16
      %s72 = scalar_lea.vmem %s6, %s71
      %s73 = sld [smem:[#allocation3 + $0x5]]
    $region25: #{edge_enhancement_forward.3} parent=1 // pred_fallthru
      _
    // Predicated region
    $region26: #{edge_enhancement_forward.3} parent=1 // pred_check
      _
    $region27: #{edge_enhancement_forward.3} parent=1 // pred_check_branch
      %75 = sbr.rel (0) target = $region29
    $region28: #{edge_enhancement_forward.3} parent=1 // pred_region
      %s76 = sld [smem:[#allocation3 + $0x6]]
      %p77 = scmp.lt.s32.totalorder %s76, 7
      %s78 = scalar_select %p77, %s76, 7
      %s79 = smul.addr %s78, 16
      %s80 = scalar_lea.vmem %s7, %s79
      %s81 = sld [smem:[#allocation3 + $0x6]]
    $region29: #{edge_enhancement_forward.3} parent=1 // pred_fallthru
      _
    // Predicated region
    $region30: #{edge_enhancement_forward.3} parent=1 // pred_check
      _
    $region31: #{edge_enhancement_forward.3} parent=1 // pred_check_branch
      %83 = sbr.rel (0) target = $region33
    $region32: #{edge_enhancement_forward.3} parent=1 // pred_region
      %s84 = sld [smem:[#allocation3 + $0x7]]
      %p85 = scmp.lt.s32.totalorder %s84, 7
      %s86 = scalar_select %p85, %s84, 7
      %s87 = smul.addr %s86, 16
      %s88 = scalar_lea.vmem %s8, %s87
      %s89 = sld [smem:[#allocation3 + $0x7]]
    $region33: #{edge_enhancement_forward.3} parent=1 // pred_fallthru
      _
    // Predicated region
    $region34: #{edge_enhancement_forward.3} parent=1 // pred_check
      _
    $region35: #{edge_enhancement_forward.3} parent=1 // pred_check_branch
      %91 = sbr.rel (0) target = $region37
    $region36: #{edge_enhancement_forward.3} parent=1 // pred_region
      %93 = vsyncadd [#allocation5], 0
      %s95 = sshll.u32 %s9, 4
      %s96 = int_to_ptr.vmem [resolvable:$true] %s95
      %98 = dma.vmem_to_smem %s96, 16, [#allocation4], [#allocation5]
    $region37: #{edge_enhancement_forward.3} parent=1 // pred_fallthru
      _
    // Predicated region
    $region38: #{edge_enhancement_forward.3} parent=1 // pred_check
      _
    $region39: #{edge_enhancement_forward.3} parent=1 // pred_check_branch
      %100 = sbr.rel (0) target = $region41
    $region40: #{edge_enhancement_forward.3} parent=1 // pred_region
      %102 = vsyncadd [#allocation7], 0
      %s104 = sshll.u32 %s10, 4
      %s105 = int_to_ptr.vmem [resolvable:$true] %s104
      %107 = dma.vmem_to_smem %s105, 16, [#allocation6], [#allocation7]
    $region41: #{edge_enhancement_forward.3} parent=1 // pred_fallthru
      _
    // Predicated region
    $region42: #{edge_enhancement_forward.3} parent=1 // pred_check
      _
    $region43: #{edge_enhancement_forward.3} parent=1 // pred_check_branch
      %109 = sbr.rel (0) target = $region45
    $region44: #{edge_enhancement_forward.3} parent=1 // pred_region
      %111 = dma.done [#allocation5], 16
    $region45: #{edge_enhancement_forward.3} parent=1 // pred_fallthru
      _
    // Predicated region
    $region46: #{edge_enhancement_forward.3} parent=1 // pred_check
      _
    $region47: #{edge_enhancement_forward.3} parent=1 // pred_check_branch
      %113 = sbr.rel (0) target = $region49
    $region48: #{edge_enhancement_forward.3} parent=1 // pred_region
      %115 = dma.done [#allocation7], 16
    $region49: #{edge_enhancement_forward.3} parent=1 // pred_fallthru
      _
    %116 = sfence
    %s117 = sld [smem:[#allocation3]]
    %p118 = scmp.lt.s32.totalorder %s117, 7
    %s119 = scalar_select %p118, %s117, 7
    %s120 = smul.addr %s119, 16
    %s121 = scalar_lea.vmem %s1, %s120
    %s122 = sld [smem:[#allocation3 + $0x1]]
    %p123 = scmp.lt.s32.totalorder %s122, 7
    %s124 = scalar_select %p123, %s122, 7
    %s125 = smul.addr %s124, 16
    %s126 = scalar_lea.vmem %s2, %s125
    %s127 = sld [smem:[#allocation3 + $0x2]]
    %p128 = scmp.lt.s32.totalorder %s127, 7
    %s129 = scalar_select %p128, %s127, 7
    %s130 = smul.addr %s129, 16
    %s131 = scalar_lea.vmem %s3, %s130
    %s132 = sld [smem:[#allocation3 + $0x3]]
    %p133 = scmp.lt.s32.totalorder %s132, 7
    %s134 = scalar_select %p133, %s132, 7
    %s135 = smul.addr %s134, 16
    %s136 = scalar_lea.vmem %s4, %s135
    %s137 = sld [smem:[#allocation3 + $0x4]]
    %p138 = scmp.lt.s32.totalorder %s137, 7
    %s139 = scalar_select %p138, %s137, 7
    %s140 = smul.addr %s139, 16
    %s141 = scalar_lea.vmem %s5, %s140
    %s142 = sld [smem:[#allocation3 + $0x5]]
    %p143 = scmp.lt.s32.totalorder %s142, 7
    %s144 = scalar_select %p143, %s142, 7
    %s145 = smul.addr %s144, 16
    %s146 = scalar_lea.vmem %s6, %s145
    %s147 = sld [smem:[#allocation3 + $0x6]]
    %p148 = scmp.lt.s32.totalorder %s147, 7
    %s149 = scalar_select %p148, %s147, 7
    %s150 = smul.addr %s149, 16
    %s151 = scalar_lea.vmem %s7, %s150
    %s152 = sld [smem:[#allocation3 + $0x7]]
    %p153 = scmp.lt.s32.totalorder %s152, 7
    %s154 = scalar_select %p153, %s152, 7
    %s155 = smul.addr %s154, 16
    %s156 = scalar_lea.vmem %s8, %s155
    %s157 = sld [smem:[#allocation3]]
    %p158 = scmp.lt.s32.totalorder %s157, 7
    %s159 = scalar_select %p158, %s157, 7
    %s160 = smul.addr %s159, 16
    %s161 = scalar_lea.vmem %s1, %s160
    %s162 = sld [smem:[#allocation3]]
    %s163 = sld [smem:[#allocation3 + $0x1]]
    %p164 = scmp.lt.s32.totalorder %s163, 7
    %s165 = scalar_select %p164, %s163, 7
    %s166 = smul.addr %s165, 16
    %s167 = scalar_lea.vmem %s2, %s166
    %s168 = sld [smem:[#allocation3 + $0x1]]
    %s169 = sld [smem:[#allocation3 + $0x2]]
    %p170 = scmp.lt.s32.totalorder %s169, 7
    %s171 = scalar_select %p170, %s169, 7
    %s172 = smul.addr %s171, 16
    %s173 = scalar_lea.vmem %s3, %s172
    %s174 = sld [smem:[#allocation3 + $0x2]]
    %s175 = sld [smem:[#allocation3 + $0x3]]
    %p176 = scmp.lt.s32.totalorder %s175, 7
    %s177 = scalar_select %p176, %s175, 7
    %s178 = smul.addr %s177, 16
    %s179 = scalar_lea.vmem %s4, %s178
    %s180 = sld [smem:[#allocation3 + $0x3]]
    %s181 = sld [smem:[#allocation3 + $0x4]]
    %p182 = scmp.lt.s32.totalorder %s181, 7
    %s183 = scalar_select %p182, %s181, 7
    %s184 = smul.addr %s183, 16
    %s185 = scalar_lea.vmem %s5, %s184
    %s186 = sld [smem:[#allocation3 + $0x4]]
    %s187 = sld [smem:[#allocation3 + $0x5]]
    %p188 = scmp.lt.s32.totalorder %s187, 7
    %s189 = scalar_select %p188, %s187, 7
    %s190 = smul.addr %s189, 16
    %s191 = scalar_lea.vmem %s6, %s190
    %s192 = sld [smem:[#allocation3 + $0x5]]
    %s193 = sld [smem:[#allocation3 + $0x6]]
    %p194 = scmp.lt.s32.totalorder %s193, 7
    %s195 = scalar_select %p194, %s193, 7
    %s196 = smul.addr %s195, 16
    %s197 = scalar_lea.vmem %s7, %s196
    %s198 = sld [smem:[#allocation3 + $0x6]]
    %s199 = sld [smem:[#allocation3 + $0x7]]
    %p200 = scmp.lt.s32.totalorder %s199, 7
    %s201 = scalar_select %p200, %s199, 7
    %s202 = smul.addr %s201, 16
    %s203 = scalar_lea.vmem %s8, %s202
    %s204 = sld [smem:[#allocation3 + $0x7]]
    %v205 = vld [vmem:[%s161] sm:$0xff]
    %v206 = vld [vmem:[%s161 + $0x8] sm:$0xff]
    %v207 = vld [vmem:[%s185] sm:$0xff]
    %v208 = vld [vmem:[%s185 + $0x8] sm:$0xff]
    %v209 = vadd.f32 %v205, %v207
    %v210 = vadd.f32 %v206, %v208
    %v213 = vperm.slane %v209, 0
    %v214 = vperm.slane %v209, 1
    %v215 = vperm.slane %v209, 2
    %v216 = vperm.slane %v209, 3
    %v217 = vperm.slane %v209, 4
    %v218 = vperm.slane %v209, 5
    %v219 = vperm.slane %v209, 6
    %v220 = vperm.slane %v209, 7
    %v221 = vperm.slane %v210, 0
    %v222 = vperm.slane %v210, 1
    %v223 = vperm.slane %v210, 2
    %v224 = vperm.slane %v210, 3
    %v225 = vperm.slane %v210, 4
    %v226 = vperm.slane %v210, 5
    %v227 = vperm.slane %v210, 6
    %v228 = vperm.slane %v210, 7
    %vm245 = vcmask 1040384
    %v246 = vsel %vm245, %v213, 0.0
    %v247 = vsel %vm245, %v214, 0.0
    %v248 = vadd.f32 %v246, %v247
    %v249 = vsel %vm245, %v215, 0.0
    %v250 = vadd.f32 %v248, %v249
    %v251 = vsel %vm245, %v216, 0.0
    %v252 = vadd.f32 %v250, %v251
    %v253 = vsel %vm245, %v217, 0.0
    %v254 = vadd.f32 %v252, %v253
    %v255 = vsel %vm245, %v218, 0.0
    %v256 = vadd.f32 %v254, %v255
    %v257 = vsel %vm245, %v219, 0.0
    %v258 = vadd.f32 %v256, %v257
    %v259 = vsel %vm245, %v220, 0.0
    %v260 = vadd.f32 %v258, %v259
    %v261 = vsel %vm245, %v221, 0.0
    %v262 = vadd.f32 %v260, %v261
    %v263 = vsel %vm245, %v222, 0.0
    %v264 = vadd.f32 %v262, %v263
    %v265 = vsel %vm245, %v223, 0.0
    %v266 = vadd.f32 %v264, %v265
    %v267 = vsel %vm245, %v224, 0.0
    %v268 = vadd.f32 %v266, %v267
    %v269 = vsel %vm245, %v225, 0.0
    %v270 = vadd.f32 %v268, %v269
    %v271 = vsel %vm245, %v226, 0.0
    %v272 = vadd.f32 %v270, %v271
    %v273 = vsel %vm245, %v227, 0.0
    %v274 = vadd.f32 %v272, %v273
    %v275 = vsel %vm245, %v228, 0.0
    %v276 = vadd.f32 %v274, %v275
    %277 = vadd.xlane.f32.xlu0 %v276
    %v278 = vpop.xlane.xlu0 %277
    %v279 = vrot.slane %v278, 4
    %v280 = vadd.f32 %v278, %v279
    %v281 = vrot.slane %v280, 2
    %v282 = vadd.f32 %v280, %v281
    %v283 = vrot.slane %v282, 1
    %v284 = vadd.f32 %v282, %v283
    %s285 = vtos %v284
    %s286 = smul.f32 %s285, 0.00024414063
    %v287 = vstv %s286
    %v288 = vsub.f32 %v205, %v287
    %v289 = vsub.f32 %v206, %v287
    %v290 = vmul.f32 %v288, %v288
    %v291 = vmul.f32 %v289, %v289
    %v294 = vperm.slane %v290, 0
    %v295 = vperm.slane %v290, 1
    %v296 = vperm.slane %v290, 2
    %v297 = vperm.slane %v290, 3
    %v298 = vperm.slane %v290, 4
    %v299 = vperm.slane %v290, 5
    %v300 = vperm.slane %v290, 6
    %v301 = vperm.slane %v290, 7
    %v302 = vperm.slane %v291, 0
    %v303 = vperm.slane %v291, 1
    %v304 = vperm.slane %v291, 2
    %v305 = vperm.slane %v291, 3
    %v306 = vperm.slane %v291, 4
    %v307 = vperm.slane %v291, 5
    %v308 = vperm.slane %v291, 6
    %v309 = vperm.slane %v291, 7
    %v326 = vsel %vm245, %v294, 0.0
    %v327 = vsel %vm245, %v295, 0.0
    %v328 = vadd.f32 %v326, %v327
    %v329 = vsel %vm245, %v296, 0.0
    %v330 = vadd.f32 %v328, %v329
    %v331 = vsel %vm245, %v297, 0.0
    %v332 = vadd.f32 %v330, %v331
    %v333 = vsel %vm245, %v298, 0.0
    %v334 = vadd.f32 %v332, %v333
    %v335 = vsel %vm245, %v299, 0.0
    %v336 = vadd.f32 %v334, %v335
    %v337 = vsel %vm245, %v300, 0.0
    %v338 = vadd.f32 %v336, %v337
    %v339 = vsel %vm245, %v301, 0.0
    %v340 = vadd.f32 %v338, %v339
    %v341 = vsel %vm245, %v302, 0.0
    %v342 = vadd.f32 %v340, %v341
    %v343 = vsel %vm245, %v303, 0.0
    %v344 = vadd.f32 %v342, %v343
    %v345 = vsel %vm245, %v304, 0.0
    %v346 = vadd.f32 %v344, %v345
    %v347 = vsel %vm245, %v305, 0.0
    %v348 = vadd.f32 %v346, %v347
    %v349 = vsel %vm245, %v306, 0.0
    %v350 = vadd.f32 %v348, %v349
    %v351 = vsel %vm245, %v307, 0.0
    %v352 = vadd.f32 %v350, %v351
    %v353 = vsel %vm245, %v308, 0.0
    %v354 = vadd.f32 %v352, %v353
    %v355 = vsel %vm245, %v309, 0.0
    %v356 = vadd.f32 %v354, %v355
    %357 = vadd.xlane.f32.xlu0 %v356
    %v358 = vpop.xlane.xlu0 %357
    %v359 = vrot.slane %v358, 4
    %v360 = vadd.f32 %v358, %v359
    %v361 = vrot.slane %v360, 2
    %v362 = vadd.f32 %v360, %v361
    %v363 = vrot.slane %v362, 1
    %v364 = vadd.f32 %v362, %v363
    %s365 = vtos %v364
    %v366 = vsub.f32 %v207, %v287
    %v367 = vsub.f32 %v208, %v287
    %v368 = vmul.f32 %v366, %v366
    %v369 = vmul.f32 %v367, %v367
    %v372 = vperm.slane %v368, 0
    %v373 = vperm.slane %v368, 1
    %v374 = vperm.slane %v368, 2
    %v375 = vperm.slane %v368, 3
    %v376 = vperm.slane %v368, 4
    %v377 = vperm.slane %v368, 5
    %v378 = vperm.slane %v368, 6
    %v379 = vperm.slane %v368, 7
    %v380 = vperm.slane %v369, 0
    %v381 = vperm.slane %v369, 1
    %v382 = vperm.slane %v369, 2
    %v383 = vperm.slane %v369, 3
    %v384 = vperm.slane %v369, 4
    %v385 = vperm.slane %v369, 5
    %v386 = vperm.slane %v369, 6
    %v387 = vperm.slane %v369, 7
    %v404 = vsel %vm245, %v372, 0.0
    %v405 = vsel %vm245, %v373, 0.0
    %v406 = vadd.f32 %v404, %v405
    %v407 = vsel %vm245, %v374, 0.0
    %v408 = vadd.f32 %v406, %v407
    %v409 = vsel %vm245, %v375, 0.0
    %v410 = vadd.f32 %v408, %v409
    %v411 = vsel %vm245, %v376, 0.0
    %v412 = vadd.f32 %v410, %v411
    %v413 = vsel %vm245, %v377, 0.0
    %v414 = vadd.f32 %v412, %v413
    %v415 = vsel %vm245, %v378, 0.0
    %v416 = vadd.f32 %v414, %v415
    %v417 = vsel %vm245, %v379, 0.0
    %v418 = vadd.f32 %v416, %v417
    %v419 = vsel %vm245, %v380, 0.0
    %v420 = vadd.f32 %v418, %v419
    %v421 = vsel %vm245, %v381, 0.0
    %v422 = vadd.f32 %v420, %v421
    %v423 = vsel %vm245, %v382, 0.0
    %v424 = vadd.f32 %v422, %v423
    %v425 = vsel %vm245, %v383, 0.0
    %v426 = vadd.f32 %v424, %v425
    %v427 = vsel %vm245, %v384, 0.0
    %v428 = vadd.f32 %v426, %v427
    %v429 = vsel %vm245, %v385, 0.0
    %v430 = vadd.f32 %v428, %v429
    %v431 = vsel %vm245, %v386, 0.0
    %v432 = vadd.f32 %v430, %v431
    %v433 = vsel %vm245, %v387, 0.0
    %v434 = vadd.f32 %v432, %v433
    %435 = vadd.xlane.f32.xlu0 %v434
    %v436 = vpop.xlane.xlu0 %435
    %v437 = vrot.slane %v436, 4
    %v438 = vadd.f32 %v436, %v437
    %v439 = vrot.slane %v438, 2
    %v440 = vadd.f32 %v438, %v439
    %v441 = vrot.slane %v440, 1
    %v442 = vadd.f32 %v440, %v441
    %s443 = vtos %v442
    %s444 = sadd.f32 %s365, %s443
    %s445 = smul.f32 %s444, 0.00024414063
    %s446 = sadd.f32 %s445, 1e-05
    %v447 = vstv %s446
    %v448 = vrsqrt.pop %v447
    %v449 = vmul.f32 %v448, %v447
    %v450 = vmul.f32 %v449, %v448
    %v451 = vmul.f32 0.5, %v450
    %v452 = vsub.f32 1.5, %v451
    %v453 = vmul.f32 %v448, %v452
    %vm454 = vweird.f32 %v447
    %vm455 = vweird.f32 %v448
    %vm456 = vmor %vm454, %vm455
    %v457 = vsel %vm456, %v448, %v453
    %s458 = vtos %v457
    %s459 = sld [smem:[#allocation4]]
    %s460 = smul.f32 %s458, %s459
    %s461 = sld [smem:[#allocation6]]
    %s462 = smul.f32 %s286, %s460
    %s463 = ssub.f32 %s461, %s462
    %v464 = vstv %s460
    %v465 = vmul.f32 %v205, %v464
    %v466 = vmul.f32 %v206, %v464
    %v467 = vstv %s463
    %v468 = vadd.f32 %v465, %v467
    %v469 = vadd.f32 %v466, %v467
    %470 = vst [vmem:[%s11] ss:$4 sm:$0xff] %v468
    %s471 = scalar_lea.vmem %s11, 32
    %472 = vst [vmem:[%s471] ss:$4 sm:$0xff] %v469
    %v473 = vmul.f32 %v207, %v464
    %v474 = vmul.f32 %v208, %v464
    %v475 = vadd.f32 %v473, %v467
    %v476 = vadd.f32 %v474, %v467
    %s477 = scalar_lea.vmem %s11, 64
    %478 = vst [vmem:[%s477] ss:$4 sm:$0xff] %v475
    %s479 = scalar_lea.vmem %s477, 32
    %480 = vst [vmem:[%s479] ss:$4 sm:$0xff] %v476
    %v481 = vld [vmem:[%s167] sm:$0xff]
    %v482 = vld [vmem:[%s167 + $0x8] sm:$0xff]
    %v483 = vld [vmem:[%s191] sm:$0xff]
    %v484 = vld [vmem:[%s191 + $0x8] sm:$0xff]
    %v485 = vadd.f32 %v481, %v483
    %v486 = vadd.f32 %v482, %v484
    %v489 = vperm.slane %v485, 0
    %v490 = vperm.slane %v485, 1
    %v491 = vperm.slane %v485, 2
    %v492 = vperm.slane %v485, 3
    %v493 = vperm.slane %v485, 4
    %v494 = vperm.slane %v485, 5
    %v495 = vperm.slane %v485, 6
    %v496 = vperm.slane %v485, 7
    %v497 = vperm.slane %v486, 0
    %v498 = vperm.slane %v486, 1
    %v499 = vperm.slane %v486, 2
    %v500 = vperm.slane %v486, 3
    %v501 = vperm.slane %v486, 4
    %v502 = vperm.slane %v486, 5
    %v503 = vperm.slane %v486, 6
    %v504 = vperm.slane %v486, 7
    %v521 = vsel %vm245, %v489, 0.0
    %v522 = vsel %vm245, %v490, 0.0
    %v523 = vadd.f32 %v521, %v522
    %v524 = vsel %vm245, %v491, 0.0
    %v525 = vadd.f32 %v523, %v524
    %v526 = vsel %vm245, %v492, 0.0
    %v527 = vadd.f32 %v525, %v526
    %v528 = vsel %vm245, %v493, 0.0
    %v529 = vadd.f32 %v527, %v528
    %v530 = vsel %vm245, %v494, 0.0
    %v531 = vadd.f32 %v529, %v530
    %v532 = vsel %vm245, %v495, 0.0
    %v533 = vadd.f32 %v531, %v532
    %v534 = vsel %vm245, %v496, 0.0
    %v535 = vadd.f32 %v533, %v534
    %v536 = vsel %vm245, %v497, 0.0
    %v537 = vadd.f32 %v535, %v536
    %v538 = vsel %vm245, %v498, 0.0
    %v539 = vadd.f32 %v537, %v538
    %v540 = vsel %vm245, %v499, 0.0
    %v541 = vadd.f32 %v539, %v540
    %v542 = vsel %vm245, %v500, 0.0
    %v543 = vadd.f32 %v541, %v542
    %v544 = vsel %vm245, %v501, 0.0
    %v545 = vadd.f32 %v543, %v544
    %v546 = vsel %vm245, %v502, 0.0
    %v547 = vadd.f32 %v545, %v546
    %v548 = vsel %vm245, %v503, 0.0
    %v549 = vadd.f32 %v547, %v548
    %v550 = vsel %vm245, %v504, 0.0
    %v551 = vadd.f32 %v549, %v550
    %552 = vadd.xlane.f32.xlu0 %v551
    %v553 = vpop.xlane.xlu0 %552
    %v554 = vrot.slane %v553, 4
    %v555 = vadd.f32 %v553, %v554
    %v556 = vrot.slane %v555, 2
    %v557 = vadd.f32 %v555, %v556
    %v558 = vrot.slane %v557, 1
    %v559 = vadd.f32 %v557, %v558
    %s560 = vtos %v559
    %s561 = smul.f32 %s560, 0.00024414063
    %v562 = vstv %s561
    %v563 = vsub.f32 %v481, %v562
    %v564 = vsub.f32 %v482, %v562
    %v565 = vmul.f32 %v563, %v563
    %v566 = vmul.f32 %v564, %v564
    %v569 = vperm.slane %v565, 0
    %v570 = vperm.slane %v565, 1
    %v571 = vperm.slane %v565, 2
    %v572 = vperm.slane %v565, 3
    %v573 = vperm.slane %v565, 4
    %v574 = vperm.slane %v565, 5
    %v575 = vperm.slane %v565, 6
    %v576 = vperm.slane %v565, 7
    %v577 = vperm.slane %v566, 0
    %v578 = vperm.slane %v566, 1
    %v579 = vperm.slane %v566, 2
    %v580 = vperm.slane %v566, 3
    %v581 = vperm.slane %v566, 4
    %v582 = vperm.slane %v566, 5
    %v583 = vperm.slane %v566, 6
    %v584 = vperm.slane %v566, 7
    %v601 = vsel %vm245, %v569, 0.0
    %v602 = vsel %vm245, %v570, 0.0
    %v603 = vadd.f32 %v601, %v602
    %v604 = vsel %vm245, %v571, 0.0
    %v605 = vadd.f32 %v603, %v604
    %v606 = vsel %vm245, %v572, 0.0
    %v607 = vadd.f32 %v605, %v606
    %v608 = vsel %vm245, %v573, 0.0
    %v609 = vadd.f32 %v607, %v608
    %v610 = vsel %vm245, %v574, 0.0
    %v611 = vadd.f32 %v609, %v610
    %v612 = vsel %vm245, %v575, 0.0
    %v613 = vadd.f32 %v611, %v612
    %v614 = vsel %vm245, %v576, 0.0
    %v615 = vadd.f32 %v613, %v614
    %v616 = vsel %vm245, %v577, 0.0
    %v617 = vadd.f32 %v615, %v616
    %v618 = vsel %vm245, %v578, 0.0
    %v619 = vadd.f32 %v617, %v618
    %v620 = vsel %vm245, %v579, 0.0
    %v621 = vadd.f32 %v619, %v620
    %v622 = vsel %vm245, %v580, 0.0
    %v623 = vadd.f32 %v621, %v622
    %v624 = vsel %vm245, %v581, 0.0
    %v625 = vadd.f32 %v623, %v624
    %v626 = vsel %vm245, %v582, 0.0
    %v627 = vadd.f32 %v625, %v626
    %v628 = vsel %vm245, %v583, 0.0
    %v629 = vadd.f32 %v627, %v628
    %v630 = vsel %vm245, %v584, 0.0
    %v631 = vadd.f32 %v629, %v630
    %632 = vadd.xlane.f32.xlu0 %v631
    %v633 = vpop.xlane.xlu0 %632
    %v634 = vrot.slane %v633, 4
    %v635 = vadd.f32 %v633, %v634
    %v636 = vrot.slane %v635, 2
    %v637 = vadd.f32 %v635, %v636
    %v638 = vrot.slane %v637, 1
    %v639 = vadd.f32 %v637, %v638
    %s640 = vtos %v639
    %v641 = vsub.f32 %v483, %v562
    %v642 = vsub.f32 %v484, %v562
    %v643 = vmul.f32 %v641, %v641
    %v644 = vmul.f32 %v642, %v642
    %v647 = vperm.slane %v643, 0
    %v648 = vperm.slane %v643, 1
    %v649 = vperm.slane %v643, 2
    %v650 = vperm.slane %v643, 3
    %v651 = vperm.slane %v643, 4
    %v652 = vperm.slane %v643, 5
    %v653 = vperm.slane %v643, 6
    %v654 = vperm.slane %v643, 7
    %v655 = vperm.slane %v644, 0
    %v656 = vperm.slane %v644, 1
    %v657 = vperm.slane %v644, 2
    %v658 = vperm.slane %v644, 3
    %v659 = vperm.slane %v644, 4
    %v660 = vperm.slane %v644, 5
    %v661 = vperm.slane %v644, 6
    %v662 = vperm.slane %v644, 7
    %v679 = vsel %vm245, %v647, 0.0
    %v680 = vsel %vm245, %v648, 0.0
    %v681 = vadd.f32 %v679, %v680
    %v682 = vsel %vm245, %v649, 0.0
    %v683 = vadd.f32 %v681, %v682
    %v684 = vsel %vm245, %v650, 0.0
    %v685 = vadd.f32 %v683, %v684
    %v686 = vsel %vm245, %v651, 0.0
    %v687 = vadd.f32 %v685, %v686
    %v688 = vsel %vm245, %v652, 0.0
    %v689 = vadd.f32 %v687, %v688
    %v690 = vsel %vm245, %v653, 0.0
    %v691 = vadd.f32 %v689, %v690
    %v692 = vsel %vm245, %v654, 0.0
    %v693 = vadd.f32 %v691, %v692
    %v694 = vsel %vm245, %v655, 0.0
    %v695 = vadd.f32 %v693, %v694
    %v696 = vsel %vm245, %v656, 0.0
    %v697 = vadd.f32 %v695, %v696
    %v698 = vsel %vm245, %v657, 0.0
    %v699 = vadd.f32 %v697, %v698
    %v700 = vsel %vm245, %v658, 0.0
    %v701 = vadd.f32 %v699, %v700
    %v702 = vsel %vm245, %v659, 0.0
    %v703 = vadd.f32 %v701, %v702
    %v704 = vsel %vm245, %v660, 0.0
    %v705 = vadd.f32 %v703, %v704
    %v706 = vsel %vm245, %v661, 0.0
    %v707 = vadd.f32 %v705, %v706
    %v708 = vsel %vm245, %v662, 0.0
    %v709 = vadd.f32 %v707, %v708
    %710 = vadd.xlane.f32.xlu0 %v709
    %v711 = vpop.xlane.xlu0 %710
    %v712 = vrot.slane %v711, 4
    %v713 = vadd.f32 %v711, %v712
    %v714 = vrot.slane %v713, 2
    %v715 = vadd.f32 %v713, %v714
    %v716 = vrot.slane %v715, 1
    %v717 = vadd.f32 %v715, %v716
    %s718 = vtos %v717
    %s719 = sadd.f32 %s640, %s718
    %s720 = smul.f32 %s719, 0.00024414063
    %s721 = sadd.f32 %s720, 1e-05
    %v722 = vstv %s721
    %v723 = vrsqrt.pop %v722
    %v724 = vmul.f32 %v723, %v722
    %v725 = vmul.f32 %v724, %v723
    %v726 = vmul.f32 0.5, %v725
    %v727 = vsub.f32 1.5, %v726
    %v728 = vmul.f32 %v723, %v727
    %vm729 = vweird.f32 %v722
    %vm730 = vweird.f32 %v723
    %vm731 = vmor %vm729, %vm730
    %v732 = vsel %vm731, %v723, %v728
    %s733 = vtos %v732
    %s734 = sld [smem:[#allocation4 + $0x1]]
    %s735 = smul.f32 %s733, %s734
    %s736 = sld [smem:[#allocation6 + $0x1]]
    %s737 = smul.f32 %s561, %s735
    %s738 = ssub.f32 %s736, %s737
    %v739 = vstv %s735
    %v740 = vmul.f32 %v481, %v739
    %v741 = vmul.f32 %v482, %v739
    %v742 = vstv %s738
    %v743 = vadd.f32 %v740, %v742
    %v744 = vadd.f32 %v741, %v742
    %s745 = scalar_lea.vmem %s11, 1
    %746 = vst [vmem:[%s745] ss:$4 sm:$0xff] %v743
    %s747 = scalar_lea.vmem %s11, 33
    %748 = vst [vmem:[%s747] ss:$4 sm:$0xff] %v744
    %v749 = vmul.f32 %v483, %v739
    %v750 = vmul.f32 %v484, %v739
    %v751 = vadd.f32 %v749, %v742
    %v752 = vadd.f32 %v750, %v742
    %s753 = scalar_lea.vmem %s477, 1
    %754 = vst [vmem:[%s753] ss:$4 sm:$0xff] %v751
    %s755 = scalar_lea.vmem %s477, 33
    %756 = vst [vmem:[%s755] ss:$4 sm:$0xff] %v752
    %v757 = vld [vmem:[%s173] sm:$0xff]
    %v758 = vld [vmem:[%s173 + $0x8] sm:$0xff]
    %v759 = vld [vmem:[%s197] sm:$0xff]
    %v760 = vld [vmem:[%s197 + $0x8] sm:$0xff]
    %v761 = vadd.f32 %v757, %v759
    %v762 = vadd.f32 %v758, %v760
    %v765 = vperm.slane %v761, 0
    %v766 = vperm.slane %v761, 1
    %v767 = vperm.slane %v761, 2
    %v768 = vperm.slane %v761, 3
    %v769 = vperm.slane %v761, 4
    %v770 = vperm.slane %v761, 5
    %v771 = vperm.slane %v761, 6
    %v772 = vperm.slane %v761, 7
    %v773 = vperm.slane %v762, 0
    %v774 = vperm.slane %v762, 1
    %v775 = vperm.slane %v762, 2
    %v776 = vperm.slane %v762, 3
    %v777 = vperm.slane %v762, 4
    %v778 = vperm.slane %v762, 5
    %v779 = vperm.slane %v762, 6
    %v780 = vperm.slane %v762, 7
    %v797 = vsel %vm245, %v765, 0.0
    %v798 = vsel %vm245, %v766, 0.0
    %v799 = vadd.f32 %v797, %v798
    %v800 = vsel %vm245, %v767, 0.0
    %v801 = vadd.f32 %v799, %v800
    %v802 = vsel %vm245, %v768, 0.0
    %v803 = vadd.f32 %v801, %v802
    %v804 = vsel %vm245, %v769, 0.0
    %v805 = vadd.f32 %v803, %v804
    %v806 = vsel %vm245, %v770, 0.0
    %v807 = vadd.f32 %v805, %v806
    %v808 = vsel %vm245, %v771, 0.0
    %v809 = vadd.f32 %v807, %v808
    %v810 = vsel %vm245, %v772, 0.0
    %v811 = vadd.f32 %v809, %v810
    %v812 = vsel %vm245, %v773, 0.0
    %v813 = vadd.f32 %v811, %v812
    %v814 = vsel %vm245, %v774, 0.0
    %v815 = vadd.f32 %v813, %v814
    %v816 = vsel %vm245, %v775, 0.0
    %v817 = vadd.f32 %v815, %v816
    %v818 = vsel %vm245, %v776, 0.0
    %v819 = vadd.f32 %v817, %v818
    %v820 = vsel %vm245, %v777, 0.0
    %v821 = vadd.f32 %v819, %v820
    %v822 = vsel %vm245, %v778, 0.0
    %v823 = vadd.f32 %v821, %v822
    %v824 = vsel %vm245, %v779, 0.0
    %v825 = vadd.f32 %v823, %v824
    %v826 = vsel %vm245, %v780, 0.0
    %v827 = vadd.f32 %v825, %v826
    %828 = vadd.xlane.f32.xlu0 %v827
    %v829 = vpop.xlane.xlu0 %828
    %v830 = vrot.slane %v829, 4
    %v831 = vadd.f32 %v829, %v830
    %v832 = vrot.slane %v831, 2
    %v833 = vadd.f32 %v831, %v832
    %v834 = vrot.slane %v833, 1
    %v835 = vadd.f32 %v833, %v834
    %s836 = vtos %v835
    %s837 = smul.f32 %s836, 0.00024414063
    %v838 = vstv %s837
    %v839 = vsub.f32 %v757, %v838
    %v840 = vsub.f32 %v758, %v838
    %v841 = vmul.f32 %v839, %v839
    %v842 = vmul.f32 %v840, %v840
    %v845 = vperm.slane %v841, 0
    %v846 = vperm.slane %v841, 1
    %v847 = vperm.slane %v841, 2
    %v848 = vperm.slane %v841, 3
    %v849 = vperm.slane %v841, 4
    %v850 = vperm.slane %v841, 5
    %v851 = vperm.slane %v841, 6
    %v852 = vperm.slane %v841, 7
    %v853 = vperm.slane %v842, 0
    %v854 = vperm.slane %v842, 1
    %v855 = vperm.slane %v842, 2
    %v856 = vperm.slane %v842, 3
    %v857 = vperm.slane %v842, 4
    %v858 = vperm.slane %v842, 5
    %v859 = vperm.slane %v842, 6
    %v860 = vperm.slane %v842, 7
    %v877 = vsel %vm245, %v845, 0.0
    %v878 = vsel %vm245, %v846, 0.0
    %v879 = vadd.f32 %v877, %v878
    %v880 = vsel %vm245, %v847, 0.0
    %v881 = vadd.f32 %v879, %v880
    %v882 = vsel %vm245, %v848, 0.0
    %v883 = vadd.f32 %v881, %v882
    %v884 = vsel %vm245, %v849, 0.0
    %v885 = vadd.f32 %v883, %v884
    %v886 = vsel %vm245, %v850, 0.0
    %v887 = vadd.f32 %v885, %v886
    %v888 = vsel %vm245, %v851, 0.0
    %v889 = vadd.f32 %v887, %v888
    %v890 = vsel %vm245, %v852, 0.0
    %v891 = vadd.f32 %v889, %v890
    %v892 = vsel %vm245, %v853, 0.0
    %v893 = vadd.f32 %v891, %v892
    %v894 = vsel %vm245, %v854, 0.0
    %v895 = vadd.f32 %v893, %v894
    %v896 = vsel %vm245, %v855, 0.0
    %v897 = vadd.f32 %v895, %v896
    %v898 = vsel %vm245, %v856, 0.0
    %v899 = vadd.f32 %v897, %v898
    %v900 = vsel %vm245, %v857, 0.0
    %v901 = vadd.f32 %v899, %v900
    %v902 = vsel %vm245, %v858, 0.0
    %v903 = vadd.f32 %v901, %v902
    %v904 = vsel %vm245, %v859, 0.0
    %v905 = vadd.f32 %v903, %v904
    %v906 = vsel %vm245, %v860, 0.0
    %v907 = vadd.f32 %v905, %v906
    %908 = vadd.xlane.f32.xlu0 %v907
    %v909 = vpop.xlane.xlu0 %908
    %v910 = vrot.slane %v909, 4
    %v911 = vadd.f32 %v909, %v910
    %v912 = vrot.slane %v911, 2
    %v913 = vadd.f32 %v911, %v912
    %v914 = vrot.slane %v913, 1
    %v915 = vadd.f32 %v913, %v914
    %s916 = vtos %v915
    %v917 = vsub.f32 %v759, %v838
    %v918 = vsub.f32 %v760, %v838
    %v919 = vmul.f32 %v917, %v917
    %v920 = vmul.f32 %v918, %v918
    %v923 = vperm.slane %v919, 0
    %v924 = vperm.slane %v919, 1
    %v925 = vperm.slane %v919, 2
    %v926 = vperm.slane %v919, 3
    %v927 = vperm.slane %v919, 4
    %v928 = vperm.slane %v919, 5
    %v929 = vperm.slane %v919, 6
    %v930 = vperm.slane %v919, 7
    %v931 = vperm.slane %v920, 0
    %v932 = vperm.slane %v920, 1
    %v933 = vperm.slane %v920, 2
    %v934 = vperm.slane %v920, 3
    %v935 = vperm.slane %v920, 4
    %v936 = vperm.slane %v920, 5
    %v937 = vperm.slane %v920, 6
    %v938 = vperm.slane %v920, 7
    %v955 = vsel %vm245, %v923, 0.0
    %v956 = vsel %vm245, %v924, 0.0
    %v957 = vadd.f32 %v955, %v956
    %v958 = vsel %vm245, %v925, 0.0
    %v959 = vadd.f32 %v957, %v958
    %v960 = vsel %vm245, %v926, 0.0
    %v961 = vadd.f32 %v959, %v960
    %v962 = vsel %vm245, %v927, 0.0
    %v963 = vadd.f32 %v961, %v962
    %v964 = vsel %vm245, %v928, 0.0
    %v965 = vadd.f32 %v963, %v964
    %v966 = vsel %vm245, %v929, 0.0
    %v967 = vadd.f32 %v965, %v966
    %v968 = vsel %vm245, %v930, 0.0
    %v969 = vadd.f32 %v967, %v968
    %v970 = vsel %vm245, %v931, 0.0
    %v971 = vadd.f32 %v969, %v970
    %v972 = vsel %vm245, %v932, 0.0
    %v973 = vadd.f32 %v971, %v972
    %v974 = vsel %vm245, %v933, 0.0
    %v975 = vadd.f32 %v973, %v974
    %v976 = vsel %vm245, %v934, 0.0
    %v977 = vadd.f32 %v975, %v976
    %v978 = vsel %vm245, %v935, 0.0
    %v979 = vadd.f32 %v977, %v978
    %v980 = vsel %vm245, %v936, 0.0
    %v981 = vadd.f32 %v979, %v980
    %v982 = vsel %vm245, %v937, 0.0
    %v983 = vadd.f32 %v981, %v982
    %v984 = vsel %vm245, %v938, 0.0
    %v985 = vadd.f32 %v983, %v984
    %986 = vadd.xlane.f32.xlu0 %v985
    %v987 = vpop.xlane.xlu0 %986
    %v988 = vrot.slane %v987, 4
    %v989 = vadd.f32 %v987, %v988
    %v990 = vrot.slane %v989, 2
    %v991 = vadd.f32 %v989, %v990
    %v992 = vrot.slane %v991, 1
    %v993 = vadd.f32 %v991, %v992
    %s994 = vtos %v993
    %s995 = sadd.f32 %s916, %s994
    %s996 = smul.f32 %s995, 0.00024414063
    %s997 = sadd.f32 %s996, 1e-05
    %v998 = vstv %s997
    %v999 = vrsqrt.pop %v998
    %v1000 = vmul.f32 %v999, %v998
    %v1001 = vmul.f32 %v1000, %v999
    %v1002 = vmul.f32 0.5, %v1001
    %v1003 = vsub.f32 1.5, %v1002
    %v1004 = vmul.f32 %v999, %v1003
    %vm1005 = vweird.f32 %v998
    %vm1006 = vweird.f32 %v999
    %vm1007 = vmor %vm1005, %vm1006
    %v1008 = vsel %vm1007, %v999, %v1004
    %s1009 = vtos %v1008
    %s1010 = sld [smem:[#allocation4 + $0x2]]
    %s1011 = smul.f32 %s1009, %s1010
    %s1012 = sld [smem:[#allocation6 + $0x2]]
    %s1013 = smul.f32 %s837, %s1011
    %s1014 = ssub.f32 %s1012, %s1013
    %v1015 = vstv %s1011
    %v1016 = vmul.f32 %v757, %v1015
    %v1017 = vmul.f32 %v758, %v1015
    %v1018 = vstv %s1014
    %v1019 = vadd.f32 %v1016, %v1018
    %v1020 = vadd.f32 %v1017, %v1018
    %s1021 = scalar_lea.vmem %s11, 2
    %1022 = vst [vmem:[%s1021] ss:$4 sm:$0xff] %v1019
    %s1023 = scalar_lea.vmem %s11, 34
    %1024 = vst [vmem:[%s1023] ss:$4 sm:$0xff] %v1020
    %v1025 = vmul.f32 %v759, %v1015
    %v1026 = vmul.f32 %v760, %v1015
    %v1027 = vadd.f32 %v1025, %v1018
    %v1028 = vadd.f32 %v1026, %v1018
    %s1029 = scalar_lea.vmem %s477, 2
    %1030 = vst [vmem:[%s1029] ss:$4 sm:$0xff] %v1027
    %s1031 = scalar_lea.vmem %s477, 34
    %1032 = vst [vmem:[%s1031] ss:$4 sm:$0xff] %v1028
    %v1033 = vld [vmem:[%s179] sm:$0xff]
    %v1034 = vld [vmem:[%s179 + $0x8] sm:$0xff]
    %v1035 = vld [vmem:[%s203] sm:$0xff]
    %v1036 = vld [vmem:[%s203 + $0x8] sm:$0xff]
    %v1037 = vadd.f32 %v1033, %v1035
    %v1038 = vadd.f32 %v1034, %v1036
    %v1041 = vperm.slane %v1037, 0
    %v1042 = vperm.slane %v1037, 1
    %v1043 = vperm.slane %v1037, 2
    %v1044 = vperm.slane %v1037, 3
    %v1045 = vperm.slane %v1037, 4
    %v1046 = vperm.slane %v1037, 5
    %v1047 = vperm.slane %v1037, 6
    %v1048 = vperm.slane %v1037, 7
    %v1049 = vperm.slane %v1038, 0
    %v1050 = vperm.slane %v1038, 1
    %v1051 = vperm.slane %v1038, 2
    %v1052 = vperm.slane %v1038, 3
    %v1053 = vperm.slane %v1038, 4
    %v1054 = vperm.slane %v1038, 5
    %v1055 = vperm.slane %v1038, 6
    %v1056 = vperm.slane %v1038, 7
    %v1073 = vsel %vm245, %v1041, 0.0
    %v1074 = vsel %vm245, %v1042, 0.0
    %v1075 = vadd.f32 %v1073, %v1074
    %v1076 = vsel %vm245, %v1043, 0.0
    %v1077 = vadd.f32 %v1075, %v1076
    %v1078 = vsel %vm245, %v1044, 0.0
    %v1079 = vadd.f32 %v1077, %v1078
    %v1080 = vsel %vm245, %v1045, 0.0
    %v1081 = vadd.f32 %v1079, %v1080
    %v1082 = vsel %vm245, %v1046, 0.0
    %v1083 = vadd.f32 %v1081, %v1082
    %v1084 = vsel %vm245, %v1047, 0.0
    %v1085 = vadd.f32 %v1083, %v1084
    %v1086 = vsel %vm245, %v1048, 0.0
    %v1087 = vadd.f32 %v1085, %v1086
    %v1088 = vsel %vm245, %v1049, 0.0
    %v1089 = vadd.f32 %v1087, %v1088
    %v1090 = vsel %vm245, %v1050, 0.0
    %v1091 = vadd.f32 %v1089, %v1090
    %v1092 = vsel %vm245, %v1051, 0.0
    %v1093 = vadd.f32 %v1091, %v1092
    %v1094 = vsel %vm245, %v1052, 0.0
    %v1095 = vadd.f32 %v1093, %v1094
    %v1096 = vsel %vm245, %v1053, 0.0
    %v1097 = vadd.f32 %v1095, %v1096
    %v1098 = vsel %vm245, %v1054, 0.0
    %v1099 = vadd.f32 %v1097, %v1098
    %v1100 = vsel %vm245, %v1055, 0.0
    %v1101 = vadd.f32 %v1099, %v1100
    %v1102 = vsel %vm245, %v1056, 0.0
    %v1103 = vadd.f32 %v1101, %v1102
    %1104 = vadd.xlane.f32.xlu0 %v1103
    %v1105 = vpop.xlane.xlu0 %1104
    %v1106 = vrot.slane %v1105, 4
    %v1107 = vadd.f32 %v1105, %v1106
    %v1108 = vrot.slane %v1107, 2
    %v1109 = vadd.f32 %v1107, %v1108
    %v1110 = vrot.slane %v1109, 1
    %v1111 = vadd.f32 %v1109, %v1110
    %s1112 = vtos %v1111
    %s1113 = smul.f32 %s1112, 0.00024414063
    %v1114 = vstv %s1113
    %v1115 = vsub.f32 %v1033, %v1114
    %v1116 = vsub.f32 %v1034, %v1114
    %v1117 = vmul.f32 %v1115, %v1115
    %v1118 = vmul.f32 %v1116, %v1116
    %v1121 = vperm.slane %v1117, 0
    %v1122 = vperm.slane %v1117, 1
    %v1123 = vperm.slane %v1117, 2
    %v1124 = vperm.slane %v1117, 3
    %v1125 = vperm.slane %v1117, 4
    %v1126 = vperm.slane %v1117, 5
    %v1127 = vperm.slane %v1117, 6
    %v1128 = vperm.slane %v1117, 7
    %v1129 = vperm.slane %v1118, 0
    %v1130 = vperm.slane %v1118, 1
    %v1131 = vperm.slane %v1118, 2
    %v1132 = vperm.slane %v1118, 3
    %v1133 = vperm.slane %v1118, 4
    %v1134 = vperm.slane %v1118, 5
    %v1135 = vperm.slane %v1118, 6
    %v1136 = vperm.slane %v1118, 7
    %v1153 = vsel %vm245, %v1121, 0.0
    %v1154 = vsel %vm245, %v1122, 0.0
    %v1155 = vadd.f32 %v1153, %v1154
    %v1156 = vsel %vm245, %v1123, 0.0
    %v1157 = vadd.f32 %v1155, %v1156
    %v1158 = vsel %vm245, %v1124, 0.0
    %v1159 = vadd.f32 %v1157, %v1158
    %v1160 = vsel %vm245, %v1125, 0.0
    %v1161 = vadd.f32 %v1159, %v1160
    %v1162 = vsel %vm245, %v1126, 0.0
    %v1163 = vadd.f32 %v1161, %v1162
    %v1164 = vsel %vm245, %v1127, 0.0
    %v1165 = vadd.f32 %v1163, %v1164
    %v1166 = vsel %vm245, %v1128, 0.0
    %v1167 = vadd.f32 %v1165, %v1166
    %v1168 = vsel %vm245, %v1129, 0.0
    %v1169 = vadd.f32 %v1167, %v1168
    %v1170 = vsel %vm245, %v1130, 0.0
    %v1171 = vadd.f32 %v1169, %v1170
    %v1172 = vsel %vm245, %v1131, 0.0
    %v1173 = vadd.f32 %v1171, %v1172
    %v1174 = vsel %vm245, %v1132, 0.0
    %v1175 = vadd.f32 %v1173, %v1174
    %v1176 = vsel %vm245, %v1133, 0.0
    %v1177 = vadd.f32 %v1175, %v1176
    %v1178 = vsel %vm245, %v1134, 0.0
    %v1179 = vadd.f32 %v1177, %v1178
    %v1180 = vsel %vm245, %v1135, 0.0
    %v1181 = vadd.f32 %v1179, %v1180
    %v1182 = vsel %vm245, %v1136, 0.0
    %v1183 = vadd.f32 %v1181, %v1182
    %1184 = vadd.xlane.f32.xlu0 %v1183
    %v1185 = vpop.xlane.xlu0 %1184
    %v1186 = vrot.slane %v1185, 4
    %v1187 = vadd.f32 %v1185, %v1186
    %v1188 = vrot.slane %v1187, 2
    %v1189 = vadd.f32 %v1187, %v1188
    %v1190 = vrot.slane %v1189, 1
    %v1191 = vadd.f32 %v1189, %v1190
    %s1192 = vtos %v1191
    %v1193 = vsub.f32 %v1035, %v1114
    %v1194 = vsub.f32 %v1036, %v1114
    %v1195 = vmul.f32 %v1193, %v1193
    %v1196 = vmul.f32 %v1194, %v1194
    %v1199 = vperm.slane %v1195, 0
    %v1200 = vperm.slane %v1195, 1
    %v1201 = vperm.slane %v1195, 2
    %v1202 = vperm.slane %v1195, 3
    %v1203 = vperm.slane %v1195, 4
    %v1204 = vperm.slane %v1195, 5
    %v1205 = vperm.slane %v1195, 6
    %v1206 = vperm.slane %v1195, 7
    %v1207 = vperm.slane %v1196, 0
    %v1208 = vperm.slane %v1196, 1
    %v1209 = vperm.slane %v1196, 2
    %v1210 = vperm.slane %v1196, 3
    %v1211 = vperm.slane %v1196, 4
    %v1212 = vperm.slane %v1196, 5
    %v1213 = vperm.slane %v1196, 6
    %v1214 = vperm.slane %v1196, 7
    %v1231 = vsel %vm245, %v1199, 0.0
    %v1232 = vsel %vm245, %v1200, 0.0
    %v1233 = vadd.f32 %v1231, %v1232
    %v1234 = vsel %vm245, %v1201, 0.0
    %v1235 = vadd.f32 %v1233, %v1234
    %v1236 = vsel %vm245, %v1202, 0.0
    %v1237 = vadd.f32 %v1235, %v1236
    %v1238 = vsel %vm245, %v1203, 0.0
    %v1239 = vadd.f32 %v1237, %v1238
    %v1240 = vsel %vm245, %v1204, 0.0
    %v1241 = vadd.f32 %v1239, %v1240
    %v1242 = vsel %vm245, %v1205, 0.0
    %v1243 = vadd.f32 %v1241, %v1242
    %v1244 = vsel %vm245, %v1206, 0.0
    %v1245 = vadd.f32 %v1243, %v1244
    %v1246 = vsel %vm245, %v1207, 0.0
    %v1247 = vadd.f32 %v1245, %v1246
    %v1248 = vsel %vm245, %v1208, 0.0
    %v1249 = vadd.f32 %v1247, %v1248
    %v1250 = vsel %vm245, %v1209, 0.0
    %v1251 = vadd.f32 %v1249, %v1250
    %v1252 = vsel %vm245, %v1210, 0.0
    %v1253 = vadd.f32 %v1251, %v1252
    %v1254 = vsel %vm245, %v1211, 0.0
    %v1255 = vadd.f32 %v1253, %v1254
    %v1256 = vsel %vm245, %v1212, 0.0
    %v1257 = vadd.f32 %v1255, %v1256
    %v1258 = vsel %vm245, %v1213, 0.0
    %v1259 = vadd.f32 %v1257, %v1258
    %v1260 = vsel %vm245, %v1214, 0.0
    %v1261 = vadd.f32 %v1259, %v1260
    %1262 = vadd.xlane.f32.xlu0 %v1261
    %v1263 = vpop.xlane.xlu0 %1262
    %v1264 = vrot.slane %v1263, 4
    %v1265 = vadd.f32 %v1263, %v1264
    %v1266 = vrot.slane %v1265, 2
    %v1267 = vadd.f32 %v1265, %v1266
    %v1268 = vrot.slane %v1267, 1
    %v1269 = vadd.f32 %v1267, %v1268
    %s1270 = vtos %v1269
    %s1271 = sadd.f32 %s1192, %s1270
    %s1272 = smul.f32 %s1271, 0.00024414063
    %s1273 = sadd.f32 %s1272, 1e-05
    %v1274 = vstv %s1273
    %v1275 = vrsqrt.pop %v1274
    %v1276 = vmul.f32 %v1275, %v1274
    %v1277 = vmul.f32 %v1276, %v1275
    %v1278 = vmul.f32 0.5, %v1277
    %v1279 = vsub.f32 1.5, %v1278
    %v1280 = vmul.f32 %v1275, %v1279
    %vm1281 = vweird.f32 %v1274
    %vm1282 = vweird.f32 %v1275
    %vm1283 = vmor %vm1281, %vm1282
    %v1284 = vsel %vm1283, %v1275, %v1280
    %s1285 = vtos %v1284
    %s1286 = sld [smem:[#allocation4 + $0x3]]
    %s1287 = smul.f32 %s1285, %s1286
    %s1288 = sld [smem:[#allocation6 + $0x3]]
    %s1289 = smul.f32 %s1113, %s1287
    %s1290 = ssub.f32 %s1288, %s1289
    %v1291 = vstv %s1287
    %v1292 = vmul.f32 %v1033, %v1291
    %v1293 = vmul.f32 %v1034, %v1291
    %v1294 = vstv %s1290
    %v1295 = vadd.f32 %v1292, %v1294
    %v1296 = vadd.f32 %v1293, %v1294
    %s1297 = scalar_lea.vmem %s11, 3
    %1298 = vst [vmem:[%s1297] ss:$4 sm:$0xff] %v1295
    %s1299 = scalar_lea.vmem %s11, 35
    %1300 = vst [vmem:[%s1299] ss:$4 sm:$0xff] %v1296
    %v1301 = vmul.f32 %v1035, %v1291
    %v1302 = vmul.f32 %v1036, %v1291
    %v1303 = vadd.f32 %v1301, %v1294
    %v1304 = vadd.f32 %v1302, %v1294
    %s1305 = scalar_lea.vmem %s477, 3
    %1306 = vst [vmem:[%s1305] ss:$4 sm:$0xff] %v1303
    %s1307 = scalar_lea.vmem %s477, 35
    %1308 = vst [vmem:[%s1307] ss:$4 sm:$0xff] %v1304
    // Predicated region
    $region50: #{edge_enhancement_forward.3} parent=1 // pred_check
      _
    $region51: #{edge_enhancement_forward.3} parent=1 // pred_check_branch
      %1310 = sbr.rel (0) target = $region53
    $region52: #{edge_enhancement_forward.3} parent=1 // pred_region
      _
    $region53: #{edge_enhancement_forward.3} parent=1 // pred_fallthru
      _
    // Predicated region
    $region54: #{edge_enhancement_forward.3} parent=1 // pred_check
      _
    $region55: #{edge_enhancement_forward.3} parent=1 // pred_check_branch
      %1312 = sbr.rel (0) target = $region57
    $region56: #{edge_enhancement_forward.3} parent=1 // pred_region
      _
    $region57: #{edge_enhancement_forward.3} parent=1 // pred_fallthru
      _
    %1313 = vsyncpa [#allocation5], 1
    %1314 = vsyncpa [#allocation7], 1

// kernel: edge_enhancement_forward.2
$region0: #{edge_enhancement_forward.2}
  #allocation0 [shape = 'u32[]', space=smem, size = 0x4, offset = 0x4, fixed_abs, tag = 'smem constant byte address 0x4 - core index']
  #allocation1 [shape = 'u32[72,128]{1,0:T(1,128)}', space=vmem, size = 0x9000, scoped, tag = 'internal scratch']
  %s0 = inlined_call_operand.vmem [shape: f32[2,4,8,256], index: 0, kind: input, shape index: {}]
  %s1 = inlined_call_operand.vmem [shape: f32[2,2,4], index: 1, kind: output, shape index: {}]
  %s2 = sld [smem:[#allocation0]]
  $region37: #{edge_enhancement_forward.2} parent=0
    _
  %s4 = ssub.s32 1, %s2
  %s5 = scalar_select 0, %s4, %s2
  loop: start=0, step=1, limit=4
  $region2: #{edge_enhancement_forward.2} parent=0 // loop_pre_header
    _
  $region3: #{edge_enhancement_forward.2} parent=0 // loop_header
    %s7 = sphi 0, %s11
    %p8 = scmp.ge.s32.totalorder %s7, 4
    %s17 = sphi 0, %s19
    %s20 = sphi 0, %s17
    %s21 = sphi 0, %s20
    %s37 = sphi 0, %s21
    %s43 = sphi 0, %s45
    %s46 = sphi 0, %s43
    %s47 = sphi 0, %s46
    %s63 = sphi 0, %s47
  $region4: #{edge_enhancement_forward.2} parent=0 // loop_header_branch
    %10 = sbr.rel (%p8) target = $region8
  $region5: #{edge_enhancement_forward.2} parent=0 // loop_body
    %s12 = ssub.s32 %s7, 1
    %s13 = ssub.s32 %s7, 2
    %s14 = sadd.s32 %s7, 1
    %s15 = ssub.s32 %s7, %s14
    %p16 = scmp.eq.s32.totalorder %s15, 0
    %s18 = sadd.s32 %s17, 1
    %s19 = scalar_select %p16, %s17, %s18
    %p22 = pneg %p16
    %p23 = scmp.eq.s32.totalorder %s7, 1
    %p24 = por %p22, %p23
    %p25 = scmp.ne.s32.totalorder %s17, %s20
    %p26 = scmp.eq.s32.totalorder %s7, 0
    %p27 = por %p25, %p26
    %p28 = scmp.ne.s32.totalorder %s17, %s20
    %p29 = scmp.eq.s32.totalorder %s12, 1
    %p30 = por %p28, %p29
    %p31 = scmp.ne.s32.totalorder %s20, %s21
    %p32 = scmp.eq.s32.totalorder %s12, 0
    %p33 = por %p31, %p32
    %p34 = scmp.ne.s32.totalorder %s20, %s21
    %p35 = scmp.eq.s32.totalorder %s13, 1
    %p36 = por %p34, %p35
    %p38 = scmp.ne.s32.totalorder %s21, %s37
    %p39 = scmp.eq.s32.totalorder %s13, 0
    %p40 = por %p38, %p39
    %s41 = ssub.s32 %s7, %s14
    %p42 = scmp.eq.s32.totalorder %s41, 0
    %s44 = sadd.s32 %s43, 1
    %s45 = scalar_select %p42, %s43, %s44
    %p48 = pneg %p42
    %p49 = scmp.eq.s32.totalorder %s7, 1
    %p50 = por %p48, %p49
    %p51 = scmp.ne.s32.totalorder %s43, %s46
    %p52 = scmp.eq.s32.totalorder %s7, 0
    %p53 = por %p51, %p52
    %p54 = scmp.ne.s32.totalorder %s43, %s46
    %p55 = scmp.eq.s32.totalorder %s12, 1
    %p56 = por %p54, %p55
    %p57 = scmp.ne.s32.totalorder %s46, %s47
    %p58 = scmp.eq.s32.totalorder %s12, 0
    %p59 = por %p57, %p58
    %p60 = scmp.ne.s32.totalorder %s46, %s47
    %p61 = scmp.eq.s32.totalorder %s13, 1
    %p62 = por %p60, %p61
    %p64 = scmp.ne.s32.totalorder %s47, %s63
    %p65 = scmp.eq.s32.totalorder %s13, 0
    %p66 = por %p64, %p65
    %p67 = scmp.le.s32.totalorder 1, %s7
    %p68 = scmp.lt.s32.totalorder %s7, 3
    %p69 = pnand %p67, %p68
    %p70 = pneg %p69
    // Predicated region
    $region9: #{edge_enhancement_forward.2} parent=5 // pred_check
      _
    $region10: #{edge_enhancement_forward.2} parent=5 // pred_check_branch
      %72 = sbr.rel (%p69) target = $region12
    $region11: #{edge_enhancement_forward.2} parent=5 // pred_region
      %s73 = ssub.s32 %s7, 1
    $region12: #{edge_enhancement_forward.2} parent=5 // pred_fallthru
      _
    %p74 = scmp.lt.s32.totalorder %s7, 2
    // Predicated region
    $region13: #{edge_enhancement_forward.2} parent=5 // pred_check
      %p75 = pneg %p74
    $region14: #{edge_enhancement_forward.2} parent=5 // pred_check_branch
      %77 = sbr.rel (%p75) target = $region16
    $region15: #{edge_enhancement_forward.2} parent=5 // pred_region
      // Predicated region
      $region17: #{edge_enhancement_forward.2} parent=15 // pred_check
        %p78 = pneg %p27
      $region18: #{edge_enhancement_forward.2} parent=15 // pred_check_branch
        %80 = sbr.rel (%p78) target = $region20
      $region19: #{edge_enhancement_forward.2} parent=15 // pred_region
        %p81 = scmp.lt.s32.totalorder %s7, 1
        %s82 = scalar_select %p81, %s7, 1
        %s83 = smul.addr %s82, 8
        %s84 = smul.addr %s83, 8
        %s85 = scalar_lea.vmem %s0, %s84
      $region20: #{edge_enhancement_forward.2} parent=15 // pred_fallthru
        _
    $region16: #{edge_enhancement_forward.2} parent=5 // pred_fallthru
      _
    %p86 = scmp.le.s32.totalorder 1, %s7
    %p87 = scmp.lt.s32.totalorder %s7, 3
    %p88 = pnand %p86, %p87
    %p89 = pneg %p88
    // Predicated region
    $region21: #{edge_enhancement_forward.2} parent=5 // pred_check
      _
    $region22: #{edge_enhancement_forward.2} parent=5 // pred_check_branch
      %91 = sbr.rel (%p88) target = $region24
    $region23: #{edge_enhancement_forward.2} parent=5 // pred_region
      %s92 = ssub.s32 %s7, 1
      %p93 = scmp.lt.s32.totalorder %s12, 1
      %s94 = scalar_select %p93, %s12, 1
      %s95 = smul.addr %s94, 8
      %s96 = smul.addr %s95, 8
      %s97 = scalar_lea.vmem %s0, %s96
      %p98 = pneg %p33
      %p99 = pneg %p30
      %p100 = pneg %p59
      %p101 = pneg %p56
      %p102 = scmp.lt.s32.totalorder %s12, 1
      %s103 = scalar_select %p102, %s12, 1
      %s104 = smul.addr %s103, 2
      %s105 = scalar_lea.vmem %s1, %s104
      %p106 = scmp.lt.s32.totalorder %s12, 1
      %s107 = scalar_select %p106, %s12, 1
      %s108 = smul.addr %s107, 8
      %s109 = smul.addr %s108, 8
      %s110 = scalar_lea.vmem %s0, %s109
      %p111 = scmp.lt.s32.totalorder %s12, 1
      %s112 = scalar_select %p111, %s12, 1
      %s113 = smul.addr %s112, 2
      %s114 = scalar_lea.vmem %s1, %s113
      %v115 = vlaneseq
      %v116 = vand.u32 %v115, 127
      %v117 = vadd.s32 %v116, 128
      %v118 = vand.u32 %v116, 15
      %v119 = vand.u32 %v117, 15
      %vm120 = vcmp.lt.s32.totalorder %v118, 15
      %vm121 = vcmp.lt.s32.totalorder %v119, 15
      %vm122 = vcmp.gt.s32.totalorder %v118, 0
      %vm123 = vcmp.gt.s32.totalorder %v119, 0
      %vm124 = vcmp.lt.s32.totalorder %v116, 240
      %vm125 = vcmp.lt.s32.totalorder %v117, 240
      %vm126 = vcmp.ge.s32.totalorder %v116, 16
      %vm127 = vcmp.ge.s32.totalorder %v117, 16
      %v128 = vld [vmem:[%s110] sm:$0xff]
      %v129 = vld [vmem:[%s110 + $0x8] sm:$0xff]
      %130 = vrot.lane.b32.xlu0 %v128, 127
      %v131 = vpop.permute.xlu0 %130
      %132 = vrot.lane.b32.xlu0 %v129, 127
      %v133 = vpop.permute.xlu0 %132
      %vm134 = vcmp.lt.s32.totalorder %v116, 127
      %v135 = vsel %vm134, %v131, %v133
      %v136 = vsel %vm134, %v133, %v131
      %v137 = vsel %vm120, %v135, 0.0
      %v138 = vsel %vm121, %v136, 0.0
      %139 = vrot.lane.b32.xlu0 %v128, 1
      %v140 = vpop.permute.xlu0 %139
      %141 = vrot.lane.b32.xlu0 %v129, 1
      %v142 = vpop.permute.xlu0 %141
      %vm143 = vcmp.lt.s32.totalorder %v116, 1
      %v144 = vsel %vm143, %v140, %v142
      %v145 = vsel %vm143, %v142, %v140
      %v146 = vsel %vm122, %v145, 0.0
      %v147 = vsel %vm123, %v144, 0.0
      %v148 = vadd.f32 %v137, %v146
      %v149 = vadd.f32 %v138, %v147
      %150 = vrot.lane.b32.xlu0 %v128, 112
      %v151 = vpop.permute.xlu0 %150
      %152 = vrot.lane.b32.xlu0 %v129, 112
      %v153 = vpop.permute.xlu0 %152
      %vm154 = vcmp.lt.s32.totalorder %v116, 112
      %v155 = vsel %vm154, %v151, %v153
      %v156 = vsel %vm154, %v153, %v151
      %v157 = vsel %vm124, %v155, 0.0
      %v158 = vsel %vm125, %v156, 0.0
      %159 = vrot.lane.b32.xlu0 %v128, 16
      %v160 = vpop.permute.xlu0 %159
      %161 = vrot.lane.b32.xlu0 %v129, 16
      %v162 = vpop.permute.xlu0 %161
      %vm163 = vcmp.lt.s32.totalorder %v116, 16
      %v164 = vsel %vm163, %v160, %v162
      %v165 = vsel %vm163, %v162, %v160
      %v166 = vsel %vm126, %v165, 0.0
      %v167 = vsel %vm127, %v164, 0.0
      %v168 = vadd.f32 %v157, %v166
      %v169 = vadd.f32 %v158, %v167
      %v172 = vrot.slane %v128, 1
      %v173 = vrot.slane %v129, 1
      %vm176 = vcmask 1046528
      %v177 = vsel %vm176, %v172, 0.0
      %v178 = vsel %vm176, %v173, 0.0
      %v179 = vrot.slane %v128, 7
      %v180 = vrot.slane %v129, 7
      %vm183 = vcmask 1040384
      %v184 = vsel %vm183, 0.0, %v179
      %v185 = vsel %vm183, 0.0, %v180
      %v186 = vadd.f32 %v177, %v184
      %v187 = vadd.f32 %v178, %v185
      %188 = vrot.lane.b32.xlu0 %v148, 112
      %v189 = vpop.permute.xlu0 %188
      %190 = vrot.lane.b32.xlu0 %v149, 112
      %v191 = vpop.permute.xlu0 %190
      %v192 = vsel %vm154, %v189, %v191
      %v193 = vsel %vm154, %v191, %v189
      %v194 = vsel %vm124, %v192, 0.0
      %v195 = vsel %vm125, %v193, 0.0
      %196 = vrot.lane.b32.xlu0 %v148, 16
      %v197 = vpop.permute.xlu0 %196
      %198 = vrot.lane.b32.xlu0 %v149, 16
      %v199 = vpop.permute.xlu0 %198
      %v200 = vsel %vm163, %v197, %v199
      %v201 = vsel %vm163, %v199, %v197
      %v202 = vsel %vm126, %v201, 0.0
      %v203 = vsel %vm127, %v200, 0.0
      %v204 = vadd.f32 %v194, %v202
      %v205 = vadd.f32 %v195, %v203
      %v206 = vadd.f32 %v168, %v148
      %v207 = vadd.f32 %v169, %v149
      %v208 = vmul.f32 %v128, 6.0
      %v209 = vmul.f32 %v129, 6.0
      %v210 = vsub.f32 %v206, %v208
      %v211 = vsub.f32 %v207, %v209
      %v214 = vrot.slane %v210, 1
      %v215 = vrot.slane %v211, 1
      %v218 = vsel %vm176, %v214, 0.0
      %v219 = vsel %vm176, %v215, 0.0
      %v220 = vrot.slane %v210, 7
      %v221 = vrot.slane %v211, 7
      %v224 = vsel %vm183, 0.0, %v220
      %v225 = vsel %vm183, 0.0, %v221
      %v226 = vadd.f32 %v218, %v224
      %v227 = vadd.f32 %v219, %v225
      %v228 = vadd.f32 %v226, %v204
      %v229 = vadd.f32 %v227, %v205
      %v230 = vmul.f32 %v168, 6.0
      %v231 = vmul.f32 %v169, 6.0
      %v232 = vsub.f32 %v228, %v230
      %v233 = vsub.f32 %v229, %v231
      %v234 = vmul.f32 %v148, 6.0
      %v235 = vmul.f32 %v149, 6.0
      %v236 = vsub.f32 %v232, %v234
      %v237 = vsub.f32 %v233, %v235
      %v238 = vmul.f32 %v128, 24.0
      %v239 = vmul.f32 %v129, 24.0
      %v240 = vadd.f32 %v236, %v238
      %v241 = vadd.f32 %v237, %v239
      %v242 = vand.u32 2147483647, %v240
      %v243 = vand.u32 2147483647, %v241
      %v244 = vadd.f32 %v242, %v243
      %245 = vadd.xlane.f32.xlu0 %v244
      %v246 = vpop.xlane.xlu0 %245
      %v247 = vrot.slane %v246, 4
      %v248 = vadd.f32 %v246, %v247
      %v249 = vrot.slane %v248, 2
      %v250 = vadd.f32 %v248, %v249
      %v251 = vrot.slane %v250, 1
      %v252 = vadd.f32 %v250, %v251
      %s253 = vtos %v252
      %v254 = vadd.f32 %v186, %v128
      %v255 = vadd.f32 %v187, %v129
      %256 = vrot.lane.b32.xlu0 %v254, 112
      %v257 = vpop.permute.xlu0 %256
      %258 = vrot.lane.b32.xlu0 %v255, 112
      %v259 = vpop.permute.xlu0 %258
      %v260 = vsel %vm154, %v257, %v259
      %v261 = vsel %vm154, %v259, %v257
      %v262 = vsel %vm124, %v260, 0.0
      %v263 = vsel %vm125, %v261, 0.0
      %264 = vrot.lane.b32.xlu0 %v254, 16
      %v265 = vpop.permute.xlu0 %264
      %266 = vrot.lane.b32.xlu0 %v255, 16
      %v267 = vpop.permute.xlu0 %266
      %v268 = vsel %vm163, %v265, %v267
      %v269 = vsel %vm163, %v267, %v265
      %v270 = vsel %vm126, %v269, 0.0
      %v271 = vsel %vm127, %v268, 0.0
      %v272 = vadd.f32 %v262, %v270
      %v273 = vadd.f32 %v263, %v271
      %v274 = vmul.f32 %v254, 2.0
      %v275 = vmul.f32 %v255, 2.0
      %v276 = vadd.f32 %v272, %v274
      %v277 = vadd.f32 %v273, %v275
      %278 = vrot.lane.b32.xlu0 %v276, 127
      %v279 = vpop.permute.xlu0 %278
      %280 = vrot.lane.b32.xlu0 %v277, 127
      %v281 = vpop.permute.xlu0 %280
      %v282 = vsel %vm134, %v279, %v281
      %v283 = vsel %vm134, %v281, %v279
      %v284 = vsel %vm120, %v282, 0.0
      %v285 = vsel %vm121, %v283, 0.0
      %286 = vrot.lane.b32.xlu0 %v276, 1
      %v287 = vpop.permute.xlu0 %286
      %288 = vrot.lane.b32.xlu0 %v277, 1
      %v289 = vpop.permute.xlu0 %288
      %v290 = vsel %vm143, %v287, %v289
      %v291 = vsel %vm143, %v289, %v287
      %v292 = vsel %vm122, %v291, 0.0
      %v293 = vsel %vm123, %v290, 0.0
      %v294 = vsub.f32 %v284, %v292
      %v295 = vsub.f32 %v285, %v293
      %296 = vrot.lane.b32.xlu0 %v254, 127
      %v297 = vpop.permute.xlu0 %296
      %298 = vrot.lane.b32.xlu0 %v255, 127
      %v299 = vpop.permute.xlu0 %298
      %v300 = vsel %vm134, %v297, %v299
      %v301 = vsel %vm134, %v299, %v297
      %v302 = vsel %vm120, %v300, 0.0
      %v303 = vsel %vm121, %v301, 0.0
      %304 = vrot.lane.b32.xlu0 %v254, 1
      %v305 = vpop.permute.xlu0 %304
      %306 = vrot.lane.b32.xlu0 %v255, 1
      %v307 = vpop.permute.xlu0 %306
      %v308 = vsel %vm143, %v305, %v307
      %v309 = vsel %vm143, %v307, %v305
      %v310 = vsel %vm122, %v309, 0.0
      %v311 = vsel %vm123, %v308, 0.0
      %v312 = vadd.f32 %v302, %v310
      %v313 = vadd.f32 %v303, %v311
      %v314 = vadd.f32 %v312, %v274
      %v315 = vadd.f32 %v313, %v275
      %316 = vrot.lane.b32.xlu0 %v314, 112
      %v317 = vpop.permute.xlu0 %316
      %318 = vrot.lane.b32.xlu0 %v315, 112
      %v319 = vpop.permute.xlu0 %318
      %v320 = vsel %vm154, %v317, %v319
      %v321 = vsel %vm154, %v319, %v317
      %v322 = vsel %vm124, %v320, 0.0
      %v323 = vsel %vm125, %v321, 0.0
      %324 = vrot.lane.b32.xlu0 %v314, 16
      %v325 = vpop.permute.xlu0 %324
      %326 = vrot.lane.b32.xlu0 %v315, 16
      %v327 = vpop.permute.xlu0 %326
      %v328 = vsel %vm163, %v325, %v327
      %v329 = vsel %vm163, %v327, %v325
      %v330 = vsel %vm126, %v329, 0.0
      %v331 = vsel %vm127, %v328, 0.0
      %v332 = vsub.f32 %v322, %v330
      %v333 = vsub.f32 %v323, %v331
      %v334 = vadd.f32 %v204, %v168
      %v335 = vadd.f32 %v205, %v169
      %v336 = vadd.f32 %v334, %v148
      %v337 = vadd.f32 %v335, %v149
      %v338 = vadd.f32 %v336, %v128
      %v339 = vadd.f32 %v337, %v129
      %v342 = vrot.slane %v338, 1
      %v343 = vrot.slane %v339, 1
      %v346 = vsel %vm176, %v342, 0.0
      %v347 = vsel %vm176, %v343, 0.0
      %v348 = vrot.slane %v338, 7
      %v349 = vrot.slane %v339, 7
      %v352 = vsel %vm183, 0.0, %v348
      %v353 = vsel %vm183, 0.0, %v349
      %v354 = vsub.f32 %v346, %v352
      %v355 = vsub.f32 %v347, %v353
      %v356 = vmul.f32 %v294, %v294
      %v357 = vmul.f32 %v295, %v295
      %358 = vrot.lane.b32.xlu0 %v356, 127
      %v359 = vpop.permute.xlu0 %358
      %360 = vrot.lane.b32.xlu0 %v357, 127
      %v361 = vpop.permute.xlu0 %360
      %v362 = vsel %vm134, %v359, %v361
      %v363 = vsel %vm134, %v361, %v359
      %v364 = vsel %vm120, %v362, 0.0
      %v365 = vsel %vm121, %v363, 0.0
      %366 = vrot.lane.b32.xlu0 %v356, 1
      %v367 = vpop.permute.xlu0 %366
      %368 = vrot.lane.b32.xlu0 %v357, 1
      %v369 = vpop.permute.xlu0 %368
      %v370 = vsel %vm143, %v367, %v369
      %v371 = vsel %vm143, %v369, %v367
      %v372 = vsel %vm122, %v371, 0.0
      %v373 = vsel %vm123, %v370, 0.0
      %v374 = vadd.f32 %v364, %v372
      %v375 = vadd.f32 %v365, %v373
      %v376 = vadd.f32 %v374, %v356
      %v377 = vadd.f32 %v375, %v357
      %378 = vrot.lane.b32.xlu0 %v376, 112
      %v379 = vpop.permute.xlu0 %378
      %380 = vrot.lane.b32.xlu0 %v377, 112
      %v381 = vpop.permute.xlu0 %380
      %v382 = vsel %vm154, %v379, %v381
      %v383 = vsel %vm154, %v381, %v379
      %v384 = vsel %vm124, %v382, 0.0
      %v385 = vsel %vm125, %v383, 0.0
      %386 = vrot.lane.b32.xlu0 %v376, 16
      %v387 = vpop.permute.xlu0 %386
      %388 = vrot.lane.b32.xlu0 %v377, 16
      %v389 = vpop.permute.xlu0 %388
      %v390 = vsel %vm163, %v387, %v389
      %v391 = vsel %vm163, %v389, %v387
      %v392 = vsel %vm126, %v391, 0.0
      %v393 = vsel %vm127, %v390, 0.0
      %v394 = vadd.f32 %v384, %v392
      %v395 = vadd.f32 %v385, %v393
      %v396 = vadd.f32 %v394, %v376
      %v397 = vadd.f32 %v395, %v377
      %v400 = vrot.slane %v396, 1
      %v401 = vrot.slane %v397, 1
      %v404 = vsel %vm176, %v400, 0.0
      %v405 = vsel %vm176, %v401, 0.0
      %v406 = vrot.slane %v396, 7
      %v407 = vrot.slane %v397, 7
      %v410 = vsel %vm183, 0.0, %v406
      %v411 = vsel %vm183, 0.0, %v407
      %v412 = vadd.f32 %v404, %v410
      %v413 = vadd.f32 %v405, %v411
      %v414 = vadd.f32 %v412, %v396
      %v415 = vadd.f32 %v413, %v397
      %v416 = vmul.f32 %v414, 0.037037037
      %v417 = vmul.f32 %v415, 0.037037037
      %v418 = vmul.f32 %v332, %v332
      %v419 = vmul.f32 %v333, %v333
      %420 = vrot.lane.b32.xlu0 %v418, 127
      %v421 = vpop.permute.xlu0 %420
      %422 = vrot.lane.b32.xlu0 %v419, 127
      %v423 = vpop.permute.xlu0 %422
      %v424 = vsel %vm134, %v421, %v423
      %v425 = vsel %vm134, %v423, %v421
      %v426 = vsel %vm120, %v424, 0.0
      %v427 = vsel %vm121, %v425, 0.0
      %428 = vrot.lane.b32.xlu0 %v418, 1
      %v429 = vpop.permute.xlu0 %428
      %430 = vrot.lane.b32.xlu0 %v419, 1
      %v431 = vpop.permute.xlu0 %430
      %v432 = vsel %vm143, %v429, %v431
      %v433 = vsel %vm143, %v431, %v429
      %v434 = vsel %vm122, %v433, 0.0
      %v435 = vsel %vm123, %v432, 0.0
      %v436 = vadd.f32 %v426, %v434
      %v437 = vadd.f32 %v427, %v435
      %v438 = vadd.f32 %v436, %v418
      %v439 = vadd.f32 %v437, %v419
      %440 = vrot.lane.b32.xlu0 %v438, 112
      %v441 = vpop.permute.xlu0 %440
      %442 = vrot.lane.b32.xlu0 %v439, 112
      %v443 = vpop.permute.xlu0 %442
      %v444 = vsel %vm154, %v441, %v443
      %v445 = vsel %vm154, %v443, %v441
      %v446 = vsel %vm124, %v444, 0.0
      %v447 = vsel %vm125, %v445, 0.0
      %448 = vrot.lane.b32.xlu0 %v438, 16
      %v449 = vpop.permute.xlu0 %448
      %450 = vrot.lane.b32.xlu0 %v439, 16
      %v451 = vpop.permute.xlu0 %450
      %v452 = vsel %vm163, %v449, %v451
      %v453 = vsel %vm163, %v451, %v449
      %v454 = vsel %vm126, %v453, 0.0
      %v455 = vsel %vm127, %v452, 0.0
      %v456 = vadd.f32 %v446, %v454
      %v457 = vadd.f32 %v447, %v455
      %v458 = vadd.f32 %v456, %v438
      %v459 = vadd.f32 %v457, %v439
      %v462 = vrot.slane %v458, 1
      %v463 = vrot.slane %v459, 1
      %v466 = vsel %vm176, %v462, 0.0
      %v467 = vsel %vm176, %v463, 0.0
      %v468 = vrot.slane %v458, 7
      %v469 = vrot.slane %v459, 7
      %v472 = vsel %vm183, 0.0, %v468
      %v473 = vsel %vm183, 0.0, %v469
      %v474 = vadd.f32 %v466, %v472
      %v475 = vadd.f32 %v467, %v473
      %v476 = vadd.f32 %v474, %v458
      %v477 = vadd.f32 %v475, %v459
      %v478 = vmul.f32 %v476, 0.037037037
      %v479 = vmul.f32 %v477, 0.037037037
      %v480 = vmul.f32 %v354, %v354
      %v481 = vmul.f32 %v355, %v355
      %482 = vrot.lane.b32.xlu0 %v480, 127
      %v483 = vpop.permute.xlu0 %482
      %484 = vrot.lane.b32.xlu0 %v481, 127
      %v485 = vpop.permute.xlu0 %484
      %v486 = vsel %vm134, %v483, %v485
      %v487 = vsel %vm134, %v485, %v483
      %v488 = vsel %vm120, %v486, 0.0
      %v489 = vsel %vm121, %v487, 0.0
      %490 = vrot.lane.b32.xlu0 %v480, 1
      %v491 = vpop.permute.xlu0 %490
      %492 = vrot.lane.b32.xlu0 %v481, 1
      %v493 = vpop.permute.xlu0 %492
      %v494 = vsel %vm143, %v491, %v493
      %v495 = vsel %vm143, %v493, %v491
      %v496 = vsel %vm122, %v495, 0.0
      %v497 = vsel %vm123, %v494, 0.0
      %v498 = vadd.f32 %v488, %v496
      %v499 = vadd.f32 %v489, %v497
      %v500 = vadd.f32 %v498, %v480
      %v501 = vadd.f32 %v499, %v481
      %502 = vrot.lane.b32.xlu0 %v500, 112
      %v503 = vpop.permute.xlu0 %502
      %504 = vrot.lane.b32.xlu0 %v501, 112
      %v505 = vpop.permute.xlu0 %504
      %v506 = vsel %vm154, %v503, %v505
      %v507 = vsel %vm154, %v505, %v503
      %v508 = vsel %vm124, %v506, 0.0
      %v509 = vsel %vm125, %v507, 0.0
      %510 = vrot.lane.b32.xlu0 %v500, 16
      %v511 = vpop.permute.xlu0 %510
      %512 = vrot.lane.b32.xlu0 %v501, 16
      %v513 = vpop.permute.xlu0 %512
      %v514 = vsel %vm163, %v511, %v513
      %v515 = vsel %vm163, %v513, %v511
      %v516 = vsel %vm126, %v515, 0.0
      %v517 = vsel %vm127, %v514, 0.0
      %v518 = vadd.f32 %v508, %v516
      %v519 = vadd.f32 %v509, %v517
      %v520 = vadd.f32 %v518, %v500
      %v521 = vadd.f32 %v519, %v501
      %v524 = vrot.slane %v520, 1
      %v525 = vrot.slane %v521, 1
      %v528 = vsel %vm176, %v524, 0.0
      %v529 = vsel %vm176, %v525, 0.0
      %v530 = vrot.slane %v520, 7
      %v531 = vrot.slane %v521, 7
      %v534 = vsel %vm183, 0.0, %v530
      %v535 = vsel %vm183, 0.0, %v531
      %v536 = vadd.f32 %v528, %v534
      %v537 = vadd.f32 %v529, %v535
      %v538 = vadd.f32 %v536, %v520
      %v539 = vadd.f32 %v537, %v521
      %v540 = vmul.f32 %v538, 0.037037037
      %v541 = vmul.f32 %v539, 0.037037037
      %v542 = vmul.f32 %v294, %v332
      %v543 = vmul.f32 %v295, %v333
      %544 = vrot.lane.b32.xlu0 %v542, 127
      %v545 = vpop.permute.xlu0 %544
      %546 = vrot.lane.b32.xlu0 %v543, 127
      %v547 = vpop.permute.xlu0 %546
      %v548 = vsel %vm134, %v545, %v547
      %v549 = vsel %vm134, %v547, %v545
      %v550 = vsel %vm120, %v548, 0.0
      %v551 = vsel %vm121, %v549, 0.0
      %552 = vrot.lane.b32.xlu0 %v542, 1
      %v553 = vpop.permute.xlu0 %552
      %554 = vrot.lane.b32.xlu0 %v543, 1
      %v555 = vpop.permute.xlu0 %554
      %v556 = vsel %vm143, %v553, %v555
      %v557 = vsel %vm143, %v555, %v553
      %v558 = vsel %vm122, %v557, 0.0
      %v559 = vsel %vm123, %v556, 0.0
      %v560 = vadd.f32 %v550, %v558
      %v561 = vadd.f32 %v551, %v559
      %v562 = vadd.f32 %v560, %v542
      %v563 = vadd.f32 %v561, %v543
      %564 = vrot.lane.b32.xlu0 %v562, 112
      %v565 = vpop.permute.xlu0 %564
      %566 = vrot.lane.b32.xlu0 %v563, 112
      %v567 = vpop.permute.xlu0 %566
      %v568 = vsel %vm154, %v565, %v567
      %v569 = vsel %vm154, %v567, %v565
      %v570 = vsel %vm124, %v568, 0.0
      %v571 = vsel %vm125, %v569, 0.0
      %572 = vrot.lane.b32.xlu0 %v562, 16
      %v573 = vpop.permute.xlu0 %572
      %574 = vrot.lane.b32.xlu0 %v563, 16
      %v575 = vpop.permute.xlu0 %574
      %v576 = vsel %vm163, %v573, %v575
      %v577 = vsel %vm163, %v575, %v573
      %v578 = vsel %vm126, %v577, 0.0
      %v579 = vsel %vm127, %v576, 0.0
      %v580 = vadd.f32 %v570, %v578
      %v581 = vadd.f32 %v571, %v579
      %v582 = vadd.f32 %v580, %v562
      %v583 = vadd.f32 %v581, %v563
      %v586 = vrot.slane %v582, 1
      %v587 = vrot.slane %v583, 1
      %v590 = vsel %vm176, %v586, 0.0
      %v591 = vsel %vm176, %v587, 0.0
      %v592 = vrot.slane %v582, 7
      %v593 = vrot.slane %v583, 7
      %v596 = vsel %vm183, 0.0, %v592
      %v597 = vsel %vm183, 0.0, %v593
      %v598 = vadd.f32 %v590, %v596
      %v599 = vadd.f32 %v591, %v597
      %v600 = vadd.f32 %v598, %v582
      %v601 = vadd.f32 %v599, %v583
      %v602 = vmul.f32 %v600, 0.037037037
      %v603 = vmul.f32 %v601, 0.037037037
      %v604 = vmul.f32 %v294, %v354
      %v605 = vmul.f32 %v295, %v355
      %606 = vrot.lane.b32.xlu0 %v604, 127
      %v607 = vpop.permute.xlu0 %606
      %608 = vrot.lane.b32.xlu0 %v605, 127
      %v609 = vpop.permute.xlu0 %608
      %v610 = vsel %vm134, %v607, %v609
      %v611 = vsel %vm134, %v609, %v607
      %v612 = vsel %vm120, %v610, 0.0
      %v613 = vsel %vm121, %v611, 0.0
      %614 = vrot.lane.b32.xlu0 %v604, 1
      %v615 = vpop.permute.xlu0 %614
      %616 = vrot.lane.b32.xlu0 %v605, 1
      %v617 = vpop.permute.xlu0 %616
      %v618 = vsel %vm143, %v615, %v617
      %v619 = vsel %vm143, %v617, %v615
      %v620 = vsel %vm122, %v619, 0.0
      %v621 = vsel %vm123, %v618, 0.0
      %v622 = vadd.f32 %v612, %v620
      %v623 = vadd.f32 %v613, %v621
      %v624 = vadd.f32 %v622, %v604
      %v625 = vadd.f32 %v623, %v605
      %626 = vrot.lane.b32.xlu0 %v624, 112
      %v627 = vpop.permute.xlu0 %626
      %628 = vrot.lane.b32.xlu0 %v625, 112
      %v629 = vpop.permute.xlu0 %628
      %v630 = vsel %vm154, %v627, %v629
      %v631 = vsel %vm154, %v629, %v627
      %v632 = vsel %vm124, %v630, 0.0
      %v633 = vsel %vm125, %v631, 0.0
      %634 = vrot.lane.b32.xlu0 %v624, 16
      %v635 = vpop.permute.xlu0 %634
      %636 = vrot.lane.b32.xlu0 %v625, 16
      %v637 = vpop.permute.xlu0 %636
      %v638 = vsel %vm163, %v635, %v637
      %v639 = vsel %vm163, %v637, %v635
      %v640 = vsel %vm126, %v639, 0.0
      %v641 = vsel %vm127, %v638, 0.0
      %v642 = vadd.f32 %v632, %v640
      %v643 = vadd.f32 %v633, %v641
      %v644 = vadd.f32 %v642, %v624
      %v645 = vadd.f32 %v643, %v625
      %v648 = vrot.slane %v644, 1
      %v649 = vrot.slane %v645, 1
      %v652 = vsel %vm176, %v648, 0.0
      %v653 = vsel %vm176, %v649, 0.0
      %v654 = vrot.slane %v644, 7
      %v655 = vrot.slane %v645, 7
      %v658 = vsel %vm183, 0.0, %v654
      %v659 = vsel %vm183, 0.0, %v655
      %v660 = vadd.f32 %v652, %v658
      %v661 = vadd.f32 %v653, %v659
      %v662 = vadd.f32 %v660, %v644
      %v663 = vadd.f32 %v661, %v645
      %v664 = vmul.f32 %v662, 0.037037037
      %v665 = vmul.f32 %v663, 0.037037037
      %v666 = vmul.f32 %v332, %v354
      %v667 = vmul.f32 %v333, %v355
      %668 = vrot.lane.b32.xlu0 %v666, 127
      %v669 = vpop.permute.xlu0 %668
      %670 = vrot.lane.b32.xlu0 %v667, 127
      %v671 = vpop.permute.xlu0 %670
      %v672 = vsel %vm134, %v669, %v671
      %v673 = vsel %vm134, %v671, %v669
      %v674 = vsel %vm120, %v672, 0.0
      %v675 = vsel %vm121, %v673, 0.0
      %676 = vrot.lane.b32.xlu0 %v666, 1
      %v677 = vpop.permute.xlu0 %676
      %678 = vrot.lane.b32.xlu0 %v667, 1
      %v679 = vpop.permute.xlu0 %678
      %v680 = vsel %vm143, %v677, %v679
      %v681 = vsel %vm143, %v679, %v677
      %v682 = vsel %vm122, %v681, 0.0
      %v683 = vsel %vm123, %v680, 0.0
      %v684 = vadd.f32 %v674, %v682
      %v685 = vadd.f32 %v675, %v683
      %v686 = vadd.f32 %v684, %v666
      %v687 = vadd.f32 %v685, %v667
      %688 = vrot.lane.b32.xlu0 %v686, 112
      %v689 = vpop.permute.xlu0 %688
      %690 = vrot.lane.b32.xlu0 %v687, 112
      %v691 = vpop.permute.xlu0 %690
      %v692 = vsel %vm154, %v689, %v691
      %v693 = vsel %vm154, %v691, %v689
      %v694 = vsel %vm124, %v692, 0.0
      %v695 = vsel %vm125, %v693, 0.0
      %696 = vrot.lane.b32.xlu0 %v686, 16
      %v697 = vpop.permute.xlu0 %696
      %698 = vrot.lane.b32.xlu0 %v687, 16
      %v699 = vpop.permute.xlu0 %698
      %v700 = vsel %vm163, %v697, %v699
      %v701 = vsel %vm163, %v699, %v697
      %v702 = vsel %vm126, %v701, 0.0
      %v703 = vsel %vm127, %v700, 0.0
      %v704 = vadd.f32 %v694, %v702
      %v705 = vadd.f32 %v695, %v703
      %v706 = vadd.f32 %v704, %v686
      %v707 = vadd.f32 %v705, %v687
      %v710 = vrot.slane %v706, 1
      %v711 = vrot.slane %v707, 1
      %v714 = vsel %vm176, %v710, 0.0
      %v715 = vsel %vm176, %v711, 0.0
      %v716 = vrot.slane %v706, 7
      %v717 = vrot.slane %v707, 7
      %v720 = vsel %vm183, 0.0, %v716
      %v721 = vsel %vm183, 0.0, %v717
      %v722 = vadd.f32 %v714, %v720
      %v723 = vadd.f32 %v715, %v721
      %v724 = vadd.f32 %v722, %v706
      %v725 = vadd.f32 %v723, %v707
      %v726 = vmul.f32 %v724, 0.037037037
      %v727 = vmul.f32 %v725, 0.037037037
      %v728 = vmul.f32 %v478, %v540
      %v729 = vmul.f32 %v479, %v541
      %v730 = vmul.f32 %v726, %v726
      %v731 = vmul.f32 %v727, %v727
      %v732 = vsub.f32 %v728, %v730
      %v733 = vsub.f32 %v729, %v731
      %v734 = vmul.f32 %v416, %v732
      %v735 = vmul.f32 %v417, %v733
      %v736 = vmul.f32 %v602, %v540
      %v737 = vmul.f32 %v603, %v541
      %v738 = vmul.f32 %v726, %v664
      %v739 = vmul.f32 %v727, %v665
      %v740 = vsub.f32 %v736, %v738
      %v741 = vsub.f32 %v737, %v739
      %v742 = vmul.f32 %v602, %v740
      %v743 = vmul.f32 %v603, %v741
      %v744 = vsub.f32 %v734, %v742
      %v745 = vsub.f32 %v735, %v743
      %v746 = vmul.f32 %v602, %v726
      %v747 = vmul.f32 %v603, %v727
      %v748 = vmul.f32 %v478, %v664
      %v749 = vmul.f32 %v479, %v665
      %v750 = vsub.f32 %v746, %v748
      %v751 = vsub.f32 %v747, %v749
      %v752 = vmul.f32 %v664, %v750
      %v753 = vmul.f32 %v665, %v751
      %v754 = vadd.f32 %v744, %v752
      %v755 = vadd.f32 %v745, %v753
      %v756 = vadd.f32 %v416, %v478
      %v757 = vadd.f32 %v417, %v479
      %v758 = vadd.f32 %v756, %v540
      %v759 = vadd.f32 %v757, %v541
      %v760 = vmul.f32 %v758, 0.04
      %v761 = vmul.f32 %v759, 0.04
      %v762 = vmul.f32 %v760, %v758
      %v763 = vmul.f32 %v761, %v759
      %v764 = vsub.f32 %v754, %v762
      %v765 = vsub.f32 %v755, %v763
      %v766 = vadd.f32 %v764, %v765
      %767 = vadd.xlane.f32.xlu0 %v766
      %v768 = vpop.xlane.xlu0 %767
      %v769 = vrot.slane %v768, 4
      %v770 = vadd.f32 %v768, %v769
      %v771 = vrot.slane %v770, 2
      %v772 = vadd.f32 %v770, %v771
      %v773 = vrot.slane %v772, 1
      %v774 = vadd.f32 %v772, %v773
      %s775 = vtos %v774
      %v776 = vstv %s775
      %vm777 = vcmask 0
      %778 = vst.msk [vmem:[%s114] sm:$0x1] %vm777, %v776
      %v779 = vstv %s253
      %780 = vst.msk [vmem:[%s114 + $0x1] sm:$0x1] %vm777, %v779
      %s781 = scalar_lea.vmem %s110, 16
      %v782 = vld [vmem:[%s781] sm:$0xff]
      %v783 = vld [vmem:[%s781 + $0x8] sm:$0xff]
      %784 = vrot.lane.b32.xlu0 %v782, 127
      %v785 = vpop.permute.xlu0 %784
      %786 = vrot.lane.b32.xlu0 %v783, 127
      %v787 = vpop.permute.xlu0 %786
      %v788 = vsel %vm134, %v785, %v787
      %v789 = vsel %vm134, %v787, %v785
      %v790 = vsel %vm120, %v788, 0.0
      %v791 = vsel %vm121, %v789, 0.0
      %792 = vrot.lane.b32.xlu0 %v782, 1
      %v793 = vpop.permute.xlu0 %792
      %794 = vrot.lane.b32.xlu0 %v783, 1
      %v795 = vpop.permute.xlu0 %794
      %v796 = vsel %vm143, %v793, %v795
      %v797 = vsel %vm143, %v795, %v793
      %v798 = vsel %vm122, %v797, 0.0
      %v799 = vsel %vm123, %v796, 0.0
      %v800 = vadd.f32 %v790, %v798
      %v801 = vadd.f32 %v791, %v799
      %802 = vrot.lane.b32.xlu0 %v782, 112
      %v803 = vpop.permute.xlu0 %802
      %804 = vrot.lane.b32.xlu0 %v783, 112
      %v805 = vpop.permute.xlu0 %804
      %v806 = vsel %vm154, %v803, %v805
      %v807 = vsel %vm154, %v805, %v803
      %v808 = vsel %vm124, %v806, 0.0
      %v809 = vsel %vm125, %v807, 0.0
      %810 = vrot.lane.b32.xlu0 %v782, 16
      %v811 = vpop.permute.xlu0 %810
      %812 = vrot.lane.b32.xlu0 %v783, 16
      %v813 = vpop.permute.xlu0 %812
      %v814 = vsel %vm163, %v811, %v813
      %v815 = vsel %vm163, %v813, %v811
      %v816 = vsel %vm126, %v815, 0.0
      %v817 = vsel %vm127, %v814, 0.0
      %v818 = vadd.f32 %v808, %v816
      %v819 = vadd.f32 %v809, %v817
      %v822 = vrot.slane %v782, 1
      %v823 = vrot.slane %v783, 1
      %v826 = vsel %vm176, %v822, 0.0
      %v827 = vsel %vm176, %v823, 0.0
      %v828 = vrot.slane %v782, 7
      %v829 = vrot.slane %v783, 7
      %v832 = vsel %vm183, 0.0, %v828
      %v833 = vsel %vm183, 0.0, %v829
      %v834 = vadd.f32 %v826, %v832
      %v835 = vadd.f32 %v827, %v833
      %836 = vrot.lane.b32.xlu0 %v800, 112
      %v837 = vpop.permute.xlu0 %836
      %838 = vrot.lane.b32.xlu0 %v801, 112
      %v839 = vpop.permute.xlu0 %838
      %v840 = vsel %vm154, %v837, %v839
      %v841 = vsel %vm154, %v839, %v837
      %v842 = vsel %vm124, %v840, 0.0
      %v843 = vsel %vm125, %v841, 0.0
      %844 = vrot.lane.b32.xlu0 %v800, 16
      %v845 = vpop.permute.xlu0 %844
      %846 = vrot.lane.b32.xlu0 %v801, 16
      %v847 = vpop.permute.xlu0 %846
      %v848 = vsel %vm163, %v845, %v847
      %v849 = vsel %vm163, %v847, %v845
      %v850 = vsel %vm126, %v849, 0.0
      %v851 = vsel %vm127, %v848, 0.0
      %v852 = vadd.f32 %v842, %v850
      %v853 = vadd.f32 %v843, %v851
      %v854 = vadd.f32 %v818, %v800
      %v855 = vadd.f32 %v819, %v801
      %v856 = vmul.f32 %v782, 6.0
      %v857 = vmul.f32 %v783, 6.0
      %v858 = vsub.f32 %v854, %v856
      %v859 = vsub.f32 %v855, %v857
      %v862 = vrot.slane %v858, 1
      %v863 = vrot.slane %v859, 1
      %v866 = vsel %vm176, %v862, 0.0
      %v867 = vsel %vm176, %v863, 0.0
      %v868 = vrot.slane %v858, 7
      %v869 = vrot.slane %v859, 7
      %v872 = vsel %vm183, 0.0, %v868
      %v873 = vsel %vm183, 0.0, %v869
      %v874 = vadd.f32 %v866, %v872
      %v875 = vadd.f32 %v867, %v873
      %v876 = vadd.f32 %v874, %v852
      %v877 = vadd.f32 %v875, %v853
      %v878 = vmul.f32 %v818, 6.0
      %v879 = vmul.f32 %v819, 6.0
      %v880 = vsub.f32 %v876, %v878
      %v881 = vsub.f32 %v877, %v879
      %v882 = vmul.f32 %v800, 6.0
      %v883 = vmul.f32 %v801, 6.0
      %v884 = vsub.f32 %v880, %v882
      %v885 = vsub.f32 %v881, %v883
      %v886 = vmul.f32 %v782, 24.0
      %v887 = vmul.f32 %v783, 24.0
      %v888 = vadd.f32 %v884, %v886
      %v889 = vadd.f32 %v885, %v887
      %v890 = vand.u32 2147483647, %v888
      %v891 = vand.u32 2147483647, %v889
      %v892 = vadd.f32 %v890, %v891
      %893 = vadd.xlane.f32.xlu0 %v892
      %v894 = vpop.xlane.xlu0 %893
      %v895 = vrot.slane %v894, 4
      %v896 = vadd.f32 %v894, %v895
      %v897 = vrot.slane %v896, 2
      %v898 = vadd.f32 %v896, %v897
      %v899 = vrot.slane %v898, 1
      %v900 = vadd.f32 %v898, %v899
      %s901 = vtos %v900
      %v902 = vadd.f32 %v834, %v782
      %v903 = vadd.f32 %v835, %v783
      %904 = vrot.lane.b32.xlu0 %v902, 112
      %v905 = vpop.permute.xlu0 %904
      %906 = vrot.lane.b32.xlu0 %v903, 112
      %v907 = vpop.permute.xlu0 %906
      %v908 = vsel %vm154, %v905, %v907
      %v909 = vsel %vm154, %v907, %v905
      %v910 = vsel %vm124, %v908, 0.0
      %v911 = vsel %vm125, %v909, 0.0
      %912 = vrot.lane.b32.xlu0 %v902, 16
      %v913 = vpop.permute.xlu0 %912
      %914 = vrot.lane.b32.xlu0 %v903, 16
      %v915 = vpop.permute.xlu0 %914
      %v916 = vsel %vm163, %v913, %v915
      %v917 = vsel %vm163, %v915, %v913
      %v918 = vsel %vm126, %v917, 0.0
      %v919 = vsel %vm127, %v916, 0.0
      %v920 = vadd.f32 %v910, %v918
      %v921 = vadd.f32 %v911, %v919
      %v922 = vmul.f32 %v902, 2.0
      %v923 = vmul.f32 %v903, 2.0
      %v924 = vadd.f32 %v920, %v922
      %v925 = vadd.f32 %v921, %v923
      %926 = vrot.lane.b32.xlu0 %v924, 127
      %v927 = vpop.permute.xlu0 %926
      %928 = vrot.lane.b32.xlu0 %v925, 127
      %v929 = vpop.permute.xlu0 %928
      %v930 = vsel %vm134, %v927, %v929
      %v931 = vsel %vm134, %v929, %v927
      %v932 = vsel %vm120, %v930, 0.0
      %v933 = vsel %vm121, %v931, 0.0
      %934 = vrot.lane.b32.xlu0 %v924, 1
      %v935 = vpop.permute.xlu0 %934
      %936 = vrot.lane.b32.xlu0 %v925, 1
      %v937 = vpop.permute.xlu0 %936
      %v938 = vsel %vm143, %v935, %v937
      %v939 = vsel %vm143, %v937, %v935
      %v940 = vsel %vm122, %v939, 0.0
      %v941 = vsel %vm123, %v938, 0.0
      %v942 = vsub.f32 %v932, %v940
      %v943 = vsub.f32 %v933, %v941
      %944 = vrot.lane.b32.xlu0 %v902, 127
      %v945 = vpop.permute.xlu0 %944
      %946 = vrot.lane.b32.xlu0 %v903, 127
      %v947 = vpop.permute.xlu0 %946
      %v948 = vsel %vm134, %v945, %v947
      %v949 = vsel %vm134, %v947, %v945
      %v950 = vsel %vm120, %v948, 0.0
      %v951 = vsel %vm121, %v949, 0.0
      %952 = vrot.lane.b32.xlu0 %v902, 1
      %v953 = vpop.permute.xlu0 %952
      %954 = vrot.lane.b32.xlu0 %v903, 1
      %v955 = vpop.permute.xlu0 %954
      %v956 = vsel %vm143, %v953, %v955
      %v957 = vsel %vm143, %v955, %v953
      %v958 = vsel %vm122, %v957, 0.0
      %v959 = vsel %vm123, %v956, 0.0
      %v960 = vadd.f32 %v950, %v958
      %v961 = vadd.f32 %v951, %v959
      %v962 = vadd.f32 %v960, %v922
      %v963 = vadd.f32 %v961, %v923
      %964 = vrot.lane.b32.xlu0 %v962, 112
      %v965 = vpop.permute.xlu0 %964
      %966 = vrot.lane.b32.xlu0 %v963, 112
      %v967 = vpop.permute.xlu0 %966
      %v968 = vsel %vm154, %v965, %v967
      %v969 = vsel %vm154, %v967, %v965
      %v970 = vsel %vm124, %v968, 0.0
      %v971 = vsel %vm125, %v969, 0.0
      %972 = vrot.lane.b32.xlu0 %v962, 16
      %v973 = vpop.permute.xlu0 %972
      %974 = vrot.lane.b32.xlu0 %v963, 16
      %v975 = vpop.permute.xlu0 %974
      %v976 = vsel %vm163, %v973, %v975
      %v977 = vsel %vm163, %v975, %v973
      %v978 = vsel %vm126, %v977, 0.0
      %v979 = vsel %vm127, %v976, 0.0
      %v980 = vsub.f32 %v970, %v978
      %v981 = vsub.f32 %v971, %v979
      %v982 = vadd.f32 %v852, %v818
      %v983 = vadd.f32 %v853, %v819
      %v984 = vadd.f32 %v982, %v800
      %v985 = vadd.f32 %v983, %v801
      %v986 = vadd.f32 %v984, %v782
      %v987 = vadd.f32 %v985, %v783
      %v990 = vrot.slane %v986, 1
      %v991 = vrot.slane %v987, 1
      %v994 = vsel %vm176, %v990, 0.0
      %v995 = vsel %vm176, %v991, 0.0
      %v996 = vrot.slane %v986, 7
      %v997 = vrot.slane %v987, 7
      %v1000 = vsel %vm183, 0.0, %v996
      %v1001 = vsel %vm183, 0.0, %v997
      %v1002 = vsub.f32 %v994, %v1000
      %v1003 = vsub.f32 %v995, %v1001
      %v1004 = vmul.f32 %v942, %v942
      %v1005 = vmul.f32 %v943, %v943
      %1006 = vrot.lane.b32.xlu0 %v1004, 127
      %v1007 = vpop.permute.xlu0 %1006
      %1008 = vrot.lane.b32.xlu0 %v1005, 127
      %v1009 = vpop.permute.xlu0 %1008
      %v1010 = vsel %vm134, %v1007, %v1009
      %v1011 = vsel %vm134, %v1009, %v1007
      %v1012 = vsel %vm120, %v1010, 0.0
      %v1013 = vsel %vm121, %v1011, 0.0
      %1014 = vrot.lane.b32.xlu0 %v1004, 1
      %v1015 = vpop.permute.xlu0 %1014
      %1016 = vrot.lane.b32.xlu0 %v1005, 1
      %v1017 = vpop.permute.xlu0 %1016
      %v1018 = vsel %vm143, %v1015, %v1017
      %v1019 = vsel %vm143, %v1017, %v1015
      %v1020 = vsel %vm122, %v1019, 0.0
      %v1021 = vsel %vm123, %v1018, 0.0
      %v1022 = vadd.f32 %v1012, %v1020
      %v1023 = vadd.f32 %v1013, %v1021
      %v1024 = vadd.f32 %v1022, %v1004
      %v1025 = vadd.f32 %v1023, %v1005
      %1026 = vrot.lane.b32.xlu0 %v1024, 112
      %v1027 = vpop.permute.xlu0 %1026
      %1028 = vrot.lane.b32.xlu0 %v1025, 112
      %v1029 = vpop.permute.xlu0 %1028
      %v1030 = vsel %vm154, %v1027, %v1029
      %v1031 = vsel %vm154, %v1029, %v1027
      %v1032 = vsel %vm124, %v1030, 0.0
      %v1033 = vsel %vm125, %v1031, 0.0
      %1034 = vrot.lane.b32.xlu0 %v1024, 16
      %v1035 = vpop.permute.xlu0 %1034
      %1036 = vrot.lane.b32.xlu0 %v1025, 16
      %v1037 = vpop.permute.xlu0 %1036
      %v1038 = vsel %vm163, %v1035, %v1037
      %v1039 = vsel %vm163, %v1037, %v1035
      %v1040 = vsel %vm126, %v1039, 0.0
      %v1041 = vsel %vm127, %v1038, 0.0
      %v1042 = vadd.f32 %v1032, %v1040
      %v1043 = vadd.f32 %v1033, %v1041
      %v1044 = vadd.f32 %v1042, %v1024
      %v1045 = vadd.f32 %v1043, %v1025
      %v1048 = vrot.slane %v1044, 1
      %v1049 = vrot.slane %v1045, 1
      %v1052 = vsel %vm176, %v1048, 0.0
      %v1053 = vsel %vm176, %v1049, 0.0
      %v1054 = vrot.slane %v1044, 7
      %v1055 = vrot.slane %v1045, 7
      %v1058 = vsel %vm183, 0.0, %v1054
      %v1059 = vsel %vm183, 0.0, %v1055
      %v1060 = vadd.f32 %v1052, %v1058
      %v1061 = vadd.f32 %v1053, %v1059
      %v1062 = vadd.f32 %v1060, %v1044
      %v1063 = vadd.f32 %v1061, %v1045
      %v1064 = vmul.f32 %v1062, 0.037037037
      %v1065 = vmul.f32 %v1063, 0.037037037
      %v1066 = vmul.f32 %v980, %v980
      %v1067 = vmul.f32 %v981, %v981
      %1068 = vrot.lane.b32.xlu0 %v1066, 127
      %v1069 = vpop.permute.xlu0 %1068
      %1070 = vrot.lane.b32.xlu0 %v1067, 127
      %v1071 = vpop.permute.xlu0 %1070
      %v1072 = vsel %vm134, %v1069, %v1071
      %v1073 = vsel %vm134, %v1071, %v1069
      %v1074 = vsel %vm120, %v1072, 0.0
      %v1075 = vsel %vm121, %v1073, 0.0
      %1076 = vrot.lane.b32.xlu0 %v1066, 1
      %v1077 = vpop.permute.xlu0 %1076
      %1078 = vrot.lane.b32.xlu0 %v1067, 1
      %v1079 = vpop.permute.xlu0 %1078
      %v1080 = vsel %vm143, %v1077, %v1079
      %v1081 = vsel %vm143, %v1079, %v1077
      %v1082 = vsel %vm122, %v1081, 0.0
      %v1083 = vsel %vm123, %v1080, 0.0
      %v1084 = vadd.f32 %v1074, %v1082
      %v1085 = vadd.f32 %v1075, %v1083
      %v1086 = vadd.f32 %v1084, %v1066
      %v1087 = vadd.f32 %v1085, %v1067
      %1088 = vrot.lane.b32.xlu0 %v1086, 112
      %v1089 = vpop.permute.xlu0 %1088
      %1090 = vrot.lane.b32.xlu0 %v1087, 112
      %v1091 = vpop.permute.xlu0 %1090
      %v1092 = vsel %vm154, %v1089, %v1091
      %v1093 = vsel %vm154, %v1091, %v1089
      %v1094 = vsel %vm124, %v1092, 0.0
      %v1095 = vsel %vm125, %v1093, 0.0
      %1096 = vrot.lane.b32.xlu0 %v1086, 16
      %v1097 = vpop.permute.xlu0 %1096
      %1098 = vrot.lane.b32.xlu0 %v1087, 16
      %v1099 = vpop.permute.xlu0 %1098
      %v1100 = vsel %vm163, %v1097, %v1099
      %v1101 = vsel %vm163, %v1099, %v1097
      %v1102 = vsel %vm126, %v1101, 0.0
      %v1103 = vsel %vm127, %v1100, 0.0
      %v1104 = vadd.f32 %v1094, %v1102
      %v1105 = vadd.f32 %v1095, %v1103
      %v1106 = vadd.f32 %v1104, %v1086
      %v1107 = vadd.f32 %v1105, %v1087
      %v1110 = vrot.slane %v1106, 1
      %v1111 = vrot.slane %v1107, 1
      %v1114 = vsel %vm176, %v1110, 0.0
      %v1115 = vsel %vm176, %v1111, 0.0
      %v1116 = vrot.slane %v1106, 7
      %v1117 = vrot.slane %v1107, 7
      %v1120 = vsel %vm183, 0.0, %v1116
      %v1121 = vsel %vm183, 0.0, %v1117
      %v1122 = vadd.f32 %v1114, %v1120
      %v1123 = vadd.f32 %v1115, %v1121
      %v1124 = vadd.f32 %v1122, %v1106
      %v1125 = vadd.f32 %v1123, %v1107
      %v1126 = vmul.f32 %v1124, 0.037037037
      %v1127 = vmul.f32 %v1125, 0.037037037
      %v1128 = vmul.f32 %v1002, %v1002
      %v1129 = vmul.f32 %v1003, %v1003
      %1130 = vrot.lane.b32.xlu0 %v1128, 127
      %v1131 = vpop.permute.xlu0 %1130
      %1132 = vrot.lane.b32.xlu0 %v1129, 127
      %v1133 = vpop.permute.xlu0 %1132
      %v1134 = vsel %vm134, %v1131, %v1133
      %v1135 = vsel %vm134, %v1133, %v1131
      %v1136 = vsel %vm120, %v1134, 0.0
      %v1137 = vsel %vm121, %v1135, 0.0
      %1138 = vrot.lane.b32.xlu0 %v1128, 1
      %v1139 = vpop.permute.xlu0 %1138
      %1140 = vrot.lane.b32.xlu0 %v1129, 1
      %v1141 = vpop.permute.xlu0 %1140
      %v1142 = vsel %vm143, %v1139, %v1141
      %v1143 = vsel %vm143, %v1141, %v1139
      %v1144 = vsel %vm122, %v1143, 0.0
      %v1145 = vsel %vm123, %v1142, 0.0
      %v1146 = vadd.f32 %v1136, %v1144
      %v1147 = vadd.f32 %v1137, %v1145
      %v1148 = vadd.f32 %v1146, %v1128
      %v1149 = vadd.f32 %v1147, %v1129
      %1150 = vrot.lane.b32.xlu0 %v1148, 112
      %v1151 = vpop.permute.xlu0 %1150
      %1152 = vrot.lane.b32.xlu0 %v1149, 112
      %v1153 = vpop.permute.xlu0 %1152
      %v1154 = vsel %vm154, %v1151, %v1153
      %v1155 = vsel %vm154, %v1153, %v1151
      %v1156 = vsel %vm124, %v1154, 0.0
      %v1157 = vsel %vm125, %v1155, 0.0
      %1158 = vrot.lane.b32.xlu0 %v1148, 16
      %v1159 = vpop.permute.xlu0 %1158
      %1160 = vrot.lane.b32.xlu0 %v1149, 16
      %v1161 = vpop.permute.xlu0 %1160
      %v1162 = vsel %vm163, %v1159, %v1161
      %v1163 = vsel %vm163, %v1161, %v1159
      %v1164 = vsel %vm126, %v1163, 0.0
      %v1165 = vsel %vm127, %v1162, 0.0
      %v1166 = vadd.f32 %v1156, %v1164
      %v1167 = vadd.f32 %v1157, %v1165
      %v1168 = vadd.f32 %v1166, %v1148
      %v1169 = vadd.f32 %v1167, %v1149
      %v1172 = vrot.slane %v1168, 1
      %v1173 = vrot.slane %v1169, 1
      %v1176 = vsel %vm176, %v1172, 0.0
      %v1177 = vsel %vm176, %v1173, 0.0
      %v1178 = vrot.slane %v1168, 7
      %v1179 = vrot.slane %v1169, 7
      %v1182 = vsel %vm183, 0.0, %v1178
      %v1183 = vsel %vm183, 0.0, %v1179
      %v1184 = vadd.f32 %v1176, %v1182
      %v1185 = vadd.f32 %v1177, %v1183
      %v1186 = vadd.f32 %v1184, %v1168
      %v1187 = vadd.f32 %v1185, %v1169
      %v1188 = vmul.f32 %v1186, 0.037037037
      %v1189 = vmul.f32 %v1187, 0.037037037
      %v1190 = vmul.f32 %v942, %v980
      %v1191 = vmul.f32 %v943, %v981
      %1192 = vrot.lane.b32.xlu0 %v1190, 127
      %v1193 = vpop.permute.xlu0 %1192
      %1194 = vrot.lane.b32.xlu0 %v1191, 127
      %v1195 = vpop.permute.xlu0 %1194
      %v1196 = vsel %vm134, %v1193, %v1195
      %v1197 = vsel %vm134, %v1195, %v1193
      %v1198 = vsel %vm120, %v1196, 0.0
      %v1199 = vsel %vm121, %v1197, 0.0
      %1200 = vrot.lane.b32.xlu0 %v1190, 1
      %v1201 = vpop.permute.xlu0 %1200
      %1202 = vrot.lane.b32.xlu0 %v1191, 1
      %v1203 = vpop.permute.xlu0 %1202
      %v1204 = vsel %vm143, %v1201, %v1203
      %v1205 = vsel %vm143, %v1203, %v1201
      %v1206 = vsel %vm122, %v1205, 0.0
      %v1207 = vsel %vm123, %v1204, 0.0
      %v1208 = vadd.f32 %v1198, %v1206
      %v1209 = vadd.f32 %v1199, %v1207
      %v1210 = vadd.f32 %v1208, %v1190
      %v1211 = vadd.f32 %v1209, %v1191
      %1212 = vrot.lane.b32.xlu0 %v1210, 112
      %v1213 = vpop.permute.xlu0 %1212
      %1214 = vrot.lane.b32.xlu0 %v1211, 112
      %v1215 = vpop.permute.xlu0 %1214
      %v1216 = vsel %vm154, %v1213, %v1215
      %v1217 = vsel %vm154, %v1215, %v1213
      %v1218 = vsel %vm124, %v1216, 0.0
      %v1219 = vsel %vm125, %v1217, 0.0
      %1220 = vrot.lane.b32.xlu0 %v1210, 16
      %v1221 = vpop.permute.xlu0 %1220
      %1222 = vrot.lane.b32.xlu0 %v1211, 16
      %v1223 = vpop.permute.xlu0 %1222
      %v1224 = vsel %vm163, %v1221, %v1223
      %v1225 = vsel %vm163, %v1223, %v1221
      %v1226 = vsel %vm126, %v1225, 0.0
      %v1227 = vsel %vm127, %v1224, 0.0
      %v1228 = vadd.f32 %v1218, %v1226
      %v1229 = vadd.f32 %v1219, %v1227
      %v1230 = vadd.f32 %v1228, %v1210
      %v1231 = vadd.f32 %v1229, %v1211
      %v1234 = vrot.slane %v1230, 1
      %v1235 = vrot.slane %v1231, 1
      %v1238 = vsel %vm176, %v1234, 0.0
      %v1239 = vsel %vm176, %v1235, 0.0
      %v1240 = vrot.slane %v1230, 7
      %v1241 = vrot.slane %v1231, 7
      %v1244 = vsel %vm183, 0.0, %v1240
      %v1245 = vsel %vm183, 0.0, %v1241
      %v1246 = vadd.f32 %v1238, %v1244
      %v1247 = vadd.f32 %v1239, %v1245
      %v1248 = vadd.f32 %v1246, %v1230
      %v1249 = vadd.f32 %v1247, %v1231
      %v1250 = vmul.f32 %v1248, 0.037037037
      %v1251 = vmul.f32 %v1249, 0.037037037
      %v1252 = vmul.f32 %v942, %v1002
      %v1253 = vmul.f32 %v943, %v1003
      %1254 = vrot.lane.b32.xlu0 %v1252, 127
      %v1255 = vpop.permute.xlu0 %1254
      %1256 = vrot.lane.b32.xlu0 %v1253, 127
      %v1257 = vpop.permute.xlu0 %1256
      %v1258 = vsel %vm134, %v1255, %v1257
      %v1259 = vsel %vm134, %v1257, %v1255
      %v1260 = vsel %vm120, %v1258, 0.0
      %v1261 = vsel %vm121, %v1259, 0.0
      %1262 = vrot.lane.b32.xlu0 %v1252, 1
      %v1263 = vpop.permute.xlu0 %1262
      %1264 = vrot.lane.b32.xlu0 %v1253, 1
      %v1265 = vpop.permute.xlu0 %1264
      %v1266 = vsel %vm143, %v1263, %v1265
      %v1267 = vsel %vm143, %v1265, %v1263
      %v1268 = vsel %vm122, %v1267, 0.0
      %v1269 = vsel %vm123, %v1266, 0.0
      %v1270 = vadd.f32 %v1260, %v1268
      %v1271 = vadd.f32 %v1261, %v1269
      %v1272 = vadd.f32 %v1270, %v1252
      %v1273 = vadd.f32 %v1271, %v1253
      %1274 = vrot.lane.b32.xlu0 %v1272, 112
      %v1275 = vpop.permute.xlu0 %1274
      %1276 = vrot.lane.b32.xlu0 %v1273, 112
      %v1277 = vpop.permute.xlu0 %1276
      %v1278 = vsel %vm154, %v1275, %v1277
      %v1279 = vsel %vm154, %v1277, %v1275
      %v1280 = vsel %vm124, %v1278, 0.0
      %v1281 = vsel %vm125, %v1279, 0.0
      %1282 = vrot.lane.b32.xlu0 %v1272, 16
      %v1283 = vpop.permute.xlu0 %1282
      %1284 = vrot.lane.b32.xlu0 %v1273, 16
      %v1285 = vpop.permute.xlu0 %1284
      %v1286 = vsel %vm163, %v1283, %v1285
      %v1287 = vsel %vm163, %v1285, %v1283
      %v1288 = vsel %vm126, %v1287, 0.0
      %v1289 = vsel %vm127, %v1286, 0.0
      %v1290 = vadd.f32 %v1280, %v1288
      %v1291 = vadd.f32 %v1281, %v1289
      %v1292 = vadd.f32 %v1290, %v1272
      %v1293 = vadd.f32 %v1291, %v1273
      %v1296 = vrot.slane %v1292, 1
      %v1297 = vrot.slane %v1293, 1
      %v1300 = vsel %vm176, %v1296, 0.0
      %v1301 = vsel %vm176, %v1297, 0.0
      %v1302 = vrot.slane %v1292, 7
      %v1303 = vrot.slane %v1293, 7
      %v1306 = vsel %vm183, 0.0, %v1302
      %v1307 = vsel %vm183, 0.0, %v1303
      %v1308 = vadd.f32 %v1300, %v1306
      %v1309 = vadd.f32 %v1301, %v1307
      %v1310 = vadd.f32 %v1308, %v1292
      %v1311 = vadd.f32 %v1309, %v1293
      %v1312 = vmul.f32 %v1310, 0.037037037
      %v1313 = vmul.f32 %v1311, 0.037037037
      %v1314 = vmul.f32 %v980, %v1002
      %v1315 = vmul.f32 %v981, %v1003
      %1316 = vrot.lane.b32.xlu0 %v1314, 127
      %v1317 = vpop.permute.xlu0 %1316
      %1318 = vrot.lane.b32.xlu0 %v1315, 127
      %v1319 = vpop.permute.xlu0 %1318
      %v1320 = vsel %vm134, %v1317, %v1319
      %v1321 = vsel %vm134, %v1319, %v1317
      %v1322 = vsel %vm120, %v1320, 0.0
      %v1323 = vsel %vm121, %v1321, 0.0
      %1324 = vrot.lane.b32.xlu0 %v1314, 1
      %v1325 = vpop.permute.xlu0 %1324
      %1326 = vrot.lane.b32.xlu0 %v1315, 1
      %v1327 = vpop.permute.xlu0 %1326
      %v1328 = vsel %vm143, %v1325, %v1327
      %v1329 = vsel %vm143, %v1327, %v1325
      %v1330 = vsel %vm122, %v1329, 0.0
      %v1331 = vsel %vm123, %v1328, 0.0
      %v1332 = vadd.f32 %v1322, %v1330
      %v1333 = vadd.f32 %v1323, %v1331
      %v1334 = vadd.f32 %v1332, %v1314
      %v1335 = vadd.f32 %v1333, %v1315
      %1336 = vrot.lane.b32.xlu0 %v1334, 112
      %v1337 = vpop.permute.xlu0 %1336
      %1338 = vrot.lane.b32.xlu0 %v1335, 112
      %v1339 = vpop.permute.xlu0 %1338
      %v1340 = vsel %vm154, %v1337, %v1339
      %v1341 = vsel %vm154, %v1339, %v1337
      %v1342 = vsel %vm124, %v1340, 0.0
      %v1343 = vsel %vm125, %v1341, 0.0
      %1344 = vrot.lane.b32.xlu0 %v1334, 16
      %v1345 = vpop.permute.xlu0 %1344
      %1346 = vrot.lane.b32.xlu0 %v1335, 16
      %v1347 = vpop.permute.xlu0 %1346
      %v1348 = vsel %vm163, %v1345, %v1347
      %v1349 = vsel %vm163, %v1347, %v1345
      %v1350 = vsel %vm126, %v1349, 0.0
      %v1351 = vsel %vm127, %v1348, 0.0
      %v1352 = vadd.f32 %v1342, %v1350
      %v1353 = vadd.f32 %v1343, %v1351
      %v1354 = vadd.f32 %v1352, %v1334
      %v1355 = vadd.f32 %v1353, %v1335
      %v1358 = vrot.slane %v1354, 1
      %v1359 = vrot.slane %v1355, 1
      %v1362 = vsel %vm176, %v1358, 0.0
      %v1363 = vsel %vm176, %v1359, 0.0
      %v1364 = vrot.slane %v1354, 7
      %v1365 = vrot.slane %v1355, 7
      %v1368 = vsel %vm183, 0.0, %v1364
      %v1369 = vsel %vm183, 0.0, %v1365
      %v1370 = vadd.f32 %v1362, %v1368
      %v1371 = vadd.f32 %v1363, %v1369
      %v1372 = vadd.f32 %v1370, %v1354
      %v1373 = vadd.f32 %v1371, %v1355
      %v1374 = vmul.f32 %v1372, 0.037037037
      %v1375 = vmul.f32 %v1373, 0.037037037
      %v1376 = vmul.f32 %v1126, %v1188
      %v1377 = vmul.f32 %v1127, %v1189
      %v1378 = vmul.f32 %v1374, %v1374
      %v1379 = vmul.f32 %v1375, %v1375
      %v1380 = vsub.f32 %v1376, %v1378
      %v1381 = vsub.f32 %v1377, %v1379
      %v1382 = vmul.f32 %v1064, %v1380
      %v1383 = vmul.f32 %v1065, %v1381
      %v1384 = vmul.f32 %v1250, %v1188
      %v1385 = vmul.f32 %v1251, %v1189
      %v1386 = vmul.f32 %v1374, %v1312
      %v1387 = vmul.f32 %v1375, %v1313
      %v1388 = vsub.f32 %v1384, %v1386
      %v1389 = vsub.f32 %v1385, %v1387
      %v1390 = vmul.f32 %v1250, %v1388
      %v1391 = vmul.f32 %v1251, %v1389
      %v1392 = vsub.f32 %v1382, %v1390
      %v1393 = vsub.f32 %v1383, %v1391
      %v1394 = vmul.f32 %v1250, %v1374
      %v1395 = vmul.f32 %v1251, %v1375
      %v1396 = vmul.f32 %v1126, %v1312
      %v1397 = vmul.f32 %v1127, %v1313
      %v1398 = vsub.f32 %v1394, %v1396
      %v1399 = vsub.f32 %v1395, %v1397
      %v1400 = vmul.f32 %v1312, %v1398
      %v1401 = vmul.f32 %v1313, %v1399
      %v1402 = vadd.f32 %v1392, %v1400
      %v1403 = vadd.f32 %v1393, %v1401
      %v1404 = vadd.f32 %v1064, %v1126
      %v1405 = vadd.f32 %v1065, %v1127
      %v1406 = vadd.f32 %v1404, %v1188
      %v1407 = vadd.f32 %v1405, %v1189
      %v1408 = vmul.f32 %v1406, 0.04
      %v1409 = vmul.f32 %v1407, 0.04
      %v1410 = vmul.f32 %v1408, %v1406
      %v1411 = vmul.f32 %v1409, %v1407
      %v1412 = vsub.f32 %v1402, %v1410
      %v1413 = vsub.f32 %v1403, %v1411
      %v1414 = vadd.f32 %v1412, %v1413
      %1415 = vadd.xlane.f32.xlu0 %v1414
      %v1416 = vpop.xlane.xlu0 %1415
      %v1417 = vrot.slane %v1416, 4
      %v1418 = vadd.f32 %v1416, %v1417
      %v1419 = vrot.slane %v1418, 2
      %v1420 = vadd.f32 %v1418, %v1419
      %v1421 = vrot.slane %v1420, 1
      %v1422 = vadd.f32 %v1420, %v1421
      %s1423 = vtos %v1422
      %v1424 = vstv %s1423
      %vm1425 = vcmask 8200
      %1426 = vst.msk [vmem:[%s114] sm:$0x1] %vm1425, %v1424
      %v1427 = vstv %s901
      %1428 = vst.msk [vmem:[%s114 + $0x1] sm:$0x1] %vm1425, %v1427
      %s1429 = scalar_lea.vmem %s110, 32
      %v1430 = vld [vmem:[%s1429] sm:$0xff]
      %v1431 = vld [vmem:[%s1429 + $0x8] sm:$0xff]
      %1432 = vrot.lane.b32.xlu0 %v1430, 127
      %v1433 = vpop.permute.xlu0 %1432
      %1434 = vrot.lane.b32.xlu0 %v1431, 127
      %v1435 = vpop.permute.xlu0 %1434
      %v1436 = vsel %vm134, %v1433, %v1435
      %v1437 = vsel %vm134, %v1435, %v1433
      %v1438 = vsel %vm120, %v1436, 0.0
      %v1439 = vsel %vm121, %v1437, 0.0
      %1440 = vrot.lane.b32.xlu0 %v1430, 1
      %v1441 = vpop.permute.xlu0 %1440
      %1442 = vrot.lane.b32.xlu0 %v1431, 1
      %v1443 = vpop.permute.xlu0 %1442
      %v1444 = vsel %vm143, %v1441, %v1443
      %v1445 = vsel %vm143, %v1443, %v1441
      %v1446 = vsel %vm122, %v1445, 0.0
      %v1447 = vsel %vm123, %v1444, 0.0
      %v1448 = vadd.f32 %v1438, %v1446
      %v1449 = vadd.f32 %v1439, %v1447
      %1450 = vrot.lane.b32.xlu0 %v1430, 112
      %v1451 = vpop.permute.xlu0 %1450
      %1452 = vrot.lane.b32.xlu0 %v1431, 112
      %v1453 = vpop.permute.xlu0 %1452
      %v1454 = vsel %vm154, %v1451, %v1453
      %v1455 = vsel %vm154, %v1453, %v1451
      %v1456 = vsel %vm124, %v1454, 0.0
      %v1457 = vsel %vm125, %v1455, 0.0
      %1458 = vrot.lane.b32.xlu0 %v1430, 16
      %v1459 = vpop.permute.xlu0 %1458
      %1460 = vrot.lane.b32.xlu0 %v1431, 16
      %v1461 = vpop.permute.xlu0 %1460
      %v1462 = vsel %vm163, %v1459, %v1461
      %v1463 = vsel %vm163, %v1461, %v1459
      %v1464 = vsel %vm126, %v1463, 0.0
      %v1465 = vsel %vm127, %v1462, 0.0
      %v1466 = vadd.f32 %v1456, %v1464
      %v1467 = vadd.f32 %v1457, %v1465
      %v1470 = vrot.slane %v1430, 1
      %v1471 = vrot.slane %v1431, 1
      %v1474 = vsel %vm176, %v1470, 0.0
      %v1475 = vsel %vm176, %v1471, 0.0
      %v1476 = vrot.slane %v1430, 7
      %v1477 = vrot.slane %v1431, 7
      %v1480 = vsel %vm183, 0.0, %v1476
      %v1481 = vsel %vm183, 0.0, %v1477
      %v1482 = vadd.f32 %v1474, %v1480
      %v1483 = vadd.f32 %v1475, %v1481
      %1484 = vrot.lane.b32.xlu0 %v1448, 112
      %v1485 = vpop.permute.xlu0 %1484
      %1486 = vrot.lane.b32.xlu0 %v1449, 112
      %v1487 = vpop.permute.xlu0 %1486
      %v1488 = vsel %vm154, %v1485, %v1487
      %v1489 = vsel %vm154, %v1487, %v1485
      %v1490 = vsel %vm124, %v1488, 0.0
      %v1491 = vsel %vm125, %v1489, 0.0
      %1492 = vrot.lane.b32.xlu0 %v1448, 16
      %v1493 = vpop.permute.xlu0 %1492
      %1494 = vrot.lane.b32.xlu0 %v1449, 16
      %v1495 = vpop.permute.xlu0 %1494
      %v1496 = vsel %vm163, %v1493, %v1495
      %v1497 = vsel %vm163, %v1495, %v1493
      %v1498 = vsel %vm126, %v1497, 0.0
      %v1499 = vsel %vm127, %v1496, 0.0
      %v1500 = vadd.f32 %v1490, %v1498
      %v1501 = vadd.f32 %v1491, %v1499
      %v1502 = vadd.f32 %v1466, %v1448
      %v1503 = vadd.f32 %v1467, %v1449
      %v1504 = vmul.f32 %v1430, 6.0
      %v1505 = vmul.f32 %v1431, 6.0
      %v1506 = vsub.f32 %v1502, %v1504
      %v1507 = vsub.f32 %v1503, %v1505
      %v1510 = vrot.slane %v1506, 1
      %v1511 = vrot.slane %v1507, 1
      %v1514 = vsel %vm176, %v1510, 0.0
      %v1515 = vsel %vm176, %v1511, 0.0
      %v1516 = vrot.slane %v1506, 7
      %v1517 = vrot.slane %v1507, 7
      %v1520 = vsel %vm183, 0.0, %v1516
      %v1521 = vsel %vm183, 0.0, %v1517
      %v1522 = vadd.f32 %v1514, %v1520
      %v1523 = vadd.f32 %v1515, %v1521
      %v1524 = vadd.f32 %v1522, %v1500
      %v1525 = vadd.f32 %v1523, %v1501
      %v1526 = vmul.f32 %v1466, 6.0
      %v1527 = vmul.f32 %v1467, 6.0
      %v1528 = vsub.f32 %v1524, %v1526
      %v1529 = vsub.f32 %v1525, %v1527
      %v1530 = vmul.f32 %v1448, 6.0
      %v1531 = vmul.f32 %v1449, 6.0
      %v1532 = vsub.f32 %v1528, %v1530
      %v1533 = vsub.f32 %v1529, %v1531
      %v1534 = vmul.f32 %v1430, 24.0
      %v1535 = vmul.f32 %v1431, 24.0
      %v1536 = vadd.f32 %v1532, %v1534
      %v1537 = vadd.f32 %v1533, %v1535
      %v1538 = vand.u32 2147483647, %v1536
      %v1539 = vand.u32 2147483647, %v1537
      %v1540 = vadd.f32 %v1538, %v1539
      %1541 = vadd.xlane.f32.xlu0 %v1540
      %v1542 = vpop.xlane.xlu0 %1541
      %v1543 = vrot.slane %v1542, 4
      %v1544 = vadd.f32 %v1542, %v1543
      %v1545 = vrot.slane %v1544, 2
      %v1546 = vadd.f32 %v1544, %v1545
      %v1547 = vrot.slane %v1546, 1
      %v1548 = vadd.f32 %v1546, %v1547
      %s1549 = vtos %v1548
      %v1550 = vadd.f32 %v1482, %v1430
      %v1551 = vadd.f32 %v1483, %v1431
      %1552 = vrot.lane.b32.xlu0 %v1550, 112
      %v1553 = vpop.permute.xlu0 %1552
      %1554 = vrot.lane.b32.xlu0 %v1551, 112
      %v1555 = vpop.permute.xlu0 %1554
      %v1556 = vsel %vm154, %v1553, %v1555
      %v1557 = vsel %vm154, %v1555, %v1553
      %v1558 = vsel %vm124, %v1556, 0.0
      %v1559 = vsel %vm125, %v1557, 0.0
      %1560 = vrot.lane.b32.xlu0 %v1550, 16
      %v1561 = vpop.permute.xlu0 %1560
      %1562 = vrot.lane.b32.xlu0 %v1551, 16
      %v1563 = vpop.permute.xlu0 %1562
      %v1564 = vsel %vm163, %v1561, %v1563
      %v1565 = vsel %vm163, %v1563, %v1561
      %v1566 = vsel %vm126, %v1565, 0.0
      %v1567 = vsel %vm127, %v1564, 0.0
      %v1568 = vadd.f32 %v1558, %v1566
      %v1569 = vadd.f32 %v1559, %v1567
      %v1570 = vmul.f32 %v1550, 2.0
      %v1571 = vmul.f32 %v1551, 2.0
      %v1572 = vadd.f32 %v1568, %v1570
      %v1573 = vadd.f32 %v1569, %v1571
      %1574 = vrot.lane.b32.xlu0 %v1572, 127
      %v1575 = vpop.permute.xlu0 %1574
      %1576 = vrot.lane.b32.xlu0 %v1573, 127
      %v1577 = vpop.permute.xlu0 %1576
      %v1578 = vsel %vm134, %v1575, %v1577
      %v1579 = vsel %vm134, %v1577, %v1575
      %v1580 = vsel %vm120, %v1578, 0.0
      %v1581 = vsel %vm121, %v1579, 0.0
      %1582 = vrot.lane.b32.xlu0 %v1572, 1
      %v1583 = vpop.permute.xlu0 %1582
      %1584 = vrot.lane.b32.xlu0 %v1573, 1
      %v1585 = vpop.permute.xlu0 %1584
      %v1586 = vsel %vm143, %v1583, %v1585
      %v1587 = vsel %vm143, %v1585, %v1583
      %v1588 = vsel %vm122, %v1587, 0.0
      %v1589 = vsel %vm123, %v1586, 0.0
      %v1590 = vsub.f32 %v1580, %v1588
      %v1591 = vsub.f32 %v1581, %v1589
      %1592 = vrot.lane.b32.xlu0 %v1550, 127
      %v1593 = vpop.permute.xlu0 %1592
      %1594 = vrot.lane.b32.xlu0 %v1551, 127
      %v1595 = vpop.permute.xlu0 %1594
      %v1596 = vsel %vm134, %v1593, %v1595
      %v1597 = vsel %vm134, %v1595, %v1593
      %v1598 = vsel %vm120, %v1596, 0.0
      %v1599 = vsel %vm121, %v1597, 0.0
      %1600 = vrot.lane.b32.xlu0 %v1550, 1
      %v1601 = vpop.permute.xlu0 %1600
      %1602 = vrot.lane.b32.xlu0 %v1551, 1
      %v1603 = vpop.permute.xlu0 %1602
      %v1604 = vsel %vm143, %v1601, %v1603
      %v1605 = vsel %vm143, %v1603, %v1601
      %v1606 = vsel %vm122, %v1605, 0.0
      %v1607 = vsel %vm123, %v1604, 0.0
      %v1608 = vadd.f32 %v1598, %v1606
      %v1609 = vadd.f32 %v1599, %v1607
      %v1610 = vadd.f32 %v1608, %v1570
      %v1611 = vadd.f32 %v1609, %v1571
      %1612 = vrot.lane.b32.xlu0 %v1610, 112
      %v1613 = vpop.permute.xlu0 %1612
      %1614 = vrot.lane.b32.xlu0 %v1611, 112
      %v1615 = vpop.permute.xlu0 %1614
      %v1616 = vsel %vm154, %v1613, %v1615
      %v1617 = vsel %vm154, %v1615, %v1613
      %v1618 = vsel %vm124, %v1616, 0.0
      %v1619 = vsel %vm125, %v1617, 0.0
      %1620 = vrot.lane.b32.xlu0 %v1610, 16
      %v1621 = vpop.permute.xlu0 %1620
      %1622 = vrot.lane.b32.xlu0 %v1611, 16
      %v1623 = vpop.permute.xlu0 %1622
      %v1624 = vsel %vm163, %v1621, %v1623
      %v1625 = vsel %vm163, %v1623, %v1621
      %v1626 = vsel %vm126, %v1625, 0.0
      %v1627 = vsel %vm127, %v1624, 0.0
      %v1628 = vsub.f32 %v1618, %v1626
      %v1629 = vsub.f32 %v1619, %v1627
      %v1630 = vadd.f32 %v1500, %v1466
      %v1631 = vadd.f32 %v1501, %v1467
      %v1632 = vadd.f32 %v1630, %v1448
      %v1633 = vadd.f32 %v1631, %v1449
      %v1634 = vadd.f32 %v1632, %v1430
      %v1635 = vadd.f32 %v1633, %v1431
      %v1638 = vrot.slane %v1634, 1
      %v1639 = vrot.slane %v1635, 1
      %v1642 = vsel %vm176, %v1638, 0.0
      %v1643 = vsel %vm176, %v1639, 0.0
      %v1644 = vrot.slane %v1634, 7
      %v1645 = vrot.slane %v1635, 7
      %v1648 = vsel %vm183, 0.0, %v1644
      %v1649 = vsel %vm183, 0.0, %v1645
      %v1650 = vsub.f32 %v1642, %v1648
      %v1651 = vsub.f32 %v1643, %v1649
      %v1652 = vmul.f32 %v1590, %v1590
      %v1653 = vmul.f32 %v1591, %v1591
      %1654 = vrot.lane.b32.xlu0 %v1652, 127
      %v1655 = vpop.permute.xlu0 %1654
      %1656 = vrot.lane.b32.xlu0 %v1653, 127
      %v1657 = vpop.permute.xlu0 %1656
      %v1658 = vsel %vm134, %v1655, %v1657
      %v1659 = vsel %vm134, %v1657, %v1655
      %v1660 = vsel %vm120, %v1658, 0.0
      %v1661 = vsel %vm121, %v1659, 0.0
      %1662 = vrot.lane.b32.xlu0 %v1652, 1
      %v1663 = vpop.permute.xlu0 %1662
      %1664 = vrot.lane.b32.xlu0 %v1653, 1
      %v1665 = vpop.permute.xlu0 %1664
      %v1666 = vsel %vm143, %v1663, %v1665
      %v1667 = vsel %vm143, %v1665, %v1663
      %v1668 = vsel %vm122, %v1667, 0.0
      %v1669 = vsel %vm123, %v1666, 0.0
      %v1670 = vadd.f32 %v1660, %v1668
      %v1671 = vadd.f32 %v1661, %v1669
      %v1672 = vadd.f32 %v1670, %v1652
      %v1673 = vadd.f32 %v1671, %v1653
      %1674 = vrot.lane.b32.xlu0 %v1672, 112
      %v1675 = vpop.permute.xlu0 %1674
      %1676 = vrot.lane.b32.xlu0 %v1673, 112
      %v1677 = vpop.permute.xlu0 %1676
      %v1678 = vsel %vm154, %v1675, %v1677
      %v1679 = vsel %vm154, %v1677, %v1675
      %v1680 = vsel %vm124, %v1678, 0.0
      %v1681 = vsel %vm125, %v1679, 0.0
      %1682 = vrot.lane.b32.xlu0 %v1672, 16
      %v1683 = vpop.permute.xlu0 %1682
      %1684 = vrot.lane.b32.xlu0 %v1673, 16
      %v1685 = vpop.permute.xlu0 %1684
      %v1686 = vsel %vm163, %v1683, %v1685
      %v1687 = vsel %vm163, %v1685, %v1683
      %v1688 = vsel %vm126, %v1687, 0.0
      %v1689 = vsel %vm127, %v1686, 0.0
      %v1690 = vadd.f32 %v1680, %v1688
      %v1691 = vadd.f32 %v1681, %v1689
      %v1692 = vadd.f32 %v1690, %v1672
      %v1693 = vadd.f32 %v1691, %v1673
      %v1696 = vrot.slane %v1692, 1
      %v1697 = vrot.slane %v1693, 1
      %v1700 = vsel %vm176, %v1696, 0.0
      %v1701 = vsel %vm176, %v1697, 0.0
      %v1702 = vrot.slane %v1692, 7
      %v1703 = vrot.slane %v1693, 7
      %v1706 = vsel %vm183, 0.0, %v1702
      %v1707 = vsel %vm183, 0.0, %v1703
      %v1708 = vadd.f32 %v1700, %v1706
      %v1709 = vadd.f32 %v1701, %v1707
      %v1710 = vadd.f32 %v1708, %v1692
      %v1711 = vadd.f32 %v1709, %v1693
      %v1712 = vmul.f32 %v1710, 0.037037037
      %v1713 = vmul.f32 %v1711, 0.037037037
      %v1714 = vmul.f32 %v1628, %v1628
      %v1715 = vmul.f32 %v1629, %v1629
      %1716 = vrot.lane.b32.xlu0 %v1714, 127
      %v1717 = vpop.permute.xlu0 %1716
      %1718 = vrot.lane.b32.xlu0 %v1715, 127
      %v1719 = vpop.permute.xlu0 %1718
      %v1720 = vsel %vm134, %v1717, %v1719
      %v1721 = vsel %vm134, %v1719, %v1717
      %v1722 = vsel %vm120, %v1720, 0.0
      %v1723 = vsel %vm121, %v1721, 0.0
      %1724 = vrot.lane.b32.xlu0 %v1714, 1
      %v1725 = vpop.permute.xlu0 %1724
      %1726 = vrot.lane.b32.xlu0 %v1715, 1
      %v1727 = vpop.permute.xlu0 %1726
      %v1728 = vsel %vm143, %v1725, %v1727
      %v1729 = vsel %vm143, %v1727, %v1725
      %v1730 = vsel %vm122, %v1729, 0.0
      %v1731 = vsel %vm123, %v1728, 0.0
      %v1732 = vadd.f32 %v1722, %v1730
      %v1733 = vadd.f32 %v1723, %v1731
      %v1734 = vadd.f32 %v1732, %v1714
      %v1735 = vadd.f32 %v1733, %v1715
      %1736 = vrot.lane.b32.xlu0 %v1734, 112
      %v1737 = vpop.permute.xlu0 %1736
      %1738 = vrot.lane.b32.xlu0 %v1735, 112
      %v1739 = vpop.permute.xlu0 %1738
      %v1740 = vsel %vm154, %v1737, %v1739
      %v1741 = vsel %vm154, %v1739, %v1737
      %v1742 = vsel %vm124, %v1740, 0.0
      %v1743 = vsel %vm125, %v1741, 0.0
      %1744 = vrot.lane.b32.xlu0 %v1734, 16
      %v1745 = vpop.permute.xlu0 %1744
      %1746 = vrot.lane.b32.xlu0 %v1735, 16
      %v1747 = vpop.permute.xlu0 %1746
      %v1748 = vsel %vm163, %v1745, %v1747
      %v1749 = vsel %vm163, %v1747, %v1745
      %v1750 = vsel %vm126, %v1749, 0.0
      %v1751 = vsel %vm127, %v1748, 0.0
      %v1752 = vadd.f32 %v1742, %v1750
      %v1753 = vadd.f32 %v1743, %v1751
      %v1754 = vadd.f32 %v1752, %v1734
      %v1755 = vadd.f32 %v1753, %v1735
      %v1758 = vrot.slane %v1754, 1
      %v1759 = vrot.slane %v1755, 1
      %v1762 = vsel %vm176, %v1758, 0.0
      %v1763 = vsel %vm176, %v1759, 0.0
      %v1764 = vrot.slane %v1754, 7
      %v1765 = vrot.slane %v1755, 7
      %v1768 = vsel %vm183, 0.0, %v1764
      %v1769 = vsel %vm183, 0.0, %v1765
      %v1770 = vadd.f32 %v1762, %v1768
      %v1771 = vadd.f32 %v1763, %v1769
      %v1772 = vadd.f32 %v1770, %v1754
      %v1773 = vadd.f32 %v1771, %v1755
      %v1774 = vmul.f32 %v1772, 0.037037037
      %v1775 = vmul.f32 %v1773, 0.037037037
      %v1776 = vmul.f32 %v1650, %v1650
      %v1777 = vmul.f32 %v1651, %v1651
      %1778 = vrot.lane.b32.xlu0 %v1776, 127
      %v1779 = vpop.permute.xlu0 %1778
      %1780 = vrot.lane.b32.xlu0 %v1777, 127
      %v1781 = vpop.permute.xlu0 %1780
      %v1782 = vsel %vm134, %v1779, %v1781
      %v1783 = vsel %vm134, %v1781, %v1779
      %v1784 = vsel %vm120, %v1782, 0.0
      %v1785 = vsel %vm121, %v1783, 0.0
      %1786 = vrot.lane.b32.xlu0 %v1776, 1
      %v1787 = vpop.permute.xlu0 %1786
      %1788 = vrot.lane.b32.xlu0 %v1777, 1
      %v1789 = vpop.permute.xlu0 %1788
      %v1790 = vsel %vm143, %v1787, %v1789
      %v1791 = vsel %vm143, %v1789, %v1787
      %v1792 = vsel %vm122, %v1791, 0.0
      %v1793 = vsel %vm123, %v1790, 0.0
      %v1794 = vadd.f32 %v1784, %v1792
      %v1795 = vadd.f32 %v1785, %v1793
      %v1796 = vadd.f32 %v1794, %v1776
      %v1797 = vadd.f32 %v1795, %v1777
      %1798 = vrot.lane.b32.xlu0 %v1796, 112
      %v1799 = vpop.permute.xlu0 %1798
      %1800 = vrot.lane.b32.xlu0 %v1797, 112
      %v1801 = vpop.permute.xlu0 %1800
      %v1802 = vsel %vm154, %v1799, %v1801
      %v1803 = vsel %vm154, %v1801, %v1799
      %v1804 = vsel %vm124, %v1802, 0.0
      %v1805 = vsel %vm125, %v1803, 0.0
      %1806 = vrot.lane.b32.xlu0 %v1796, 16
      %v1807 = vpop.permute.xlu0 %1806
      %1808 = vrot.lane.b32.xlu0 %v1797, 16
      %v1809 = vpop.permute.xlu0 %1808
      %v1810 = vsel %vm163, %v1807, %v1809
      %v1811 = vsel %vm163, %v1809, %v1807
      %v1812 = vsel %vm126, %v1811, 0.0
      %v1813 = vsel %vm127, %v1810, 0.0
      %v1814 = vadd.f32 %v1804, %v1812
      %v1815 = vadd.f32 %v1805, %v1813
      %v1816 = vadd.f32 %v1814, %v1796
      %v1817 = vadd.f32 %v1815, %v1797
      %v1820 = vrot.slane %v1816, 1
      %v1821 = vrot.slane %v1817, 1
      %v1824 = vsel %vm176, %v1820, 0.0
      %v1825 = vsel %vm176, %v1821, 0.0
      %v1826 = vrot.slane %v1816, 7
      %v1827 = vrot.slane %v1817, 7
      %v1830 = vsel %vm183, 0.0, %v1826
      %v1831 = vsel %vm183, 0.0, %v1827
      %v1832 = vadd.f32 %v1824, %v1830
      %v1833 = vadd.f32 %v1825, %v1831
      %v1834 = vadd.f32 %v1832, %v1816
      %v1835 = vadd.f32 %v1833, %v1817
      %v1836 = vmul.f32 %v1834, 0.037037037
      %v1837 = vmul.f32 %v1835, 0.037037037
      %v1838 = vmul.f32 %v1590, %v1628
      %v1839 = vmul.f32 %v1591, %v1629
      %1840 = vrot.lane.b32.xlu0 %v1838, 127
      %v1841 = vpop.permute.xlu0 %1840
      %1842 = vrot.lane.b32.xlu0 %v1839, 127
      %v1843 = vpop.permute.xlu0 %1842
      %v1844 = vsel %vm134, %v1841, %v1843
      %v1845 = vsel %vm134, %v1843, %v1841
      %v1846 = vsel %vm120, %v1844, 0.0
      %v1847 = vsel %vm121, %v1845, 0.0
      %1848 = vrot.lane.b32.xlu0 %v1838, 1
      %v1849 = vpop.permute.xlu0 %1848
      %1850 = vrot.lane.b32.xlu0 %v1839, 1
      %v1851 = vpop.permute.xlu0 %1850
      %v1852 = vsel %vm143, %v1849, %v1851
      %v1853 = vsel %vm143, %v1851, %v1849
      %v1854 = vsel %vm122, %v1853, 0.0
      %v1855 = vsel %vm123, %v1852, 0.0
      %v1856 = vadd.f32 %v1846, %v1854
      %v1857 = vadd.f32 %v1847, %v1855
      %v1858 = vadd.f32 %v1856, %v1838
      %v1859 = vadd.f32 %v1857, %v1839
      %1860 = vrot.lane.b32.xlu0 %v1858, 112
      %v1861 = vpop.permute.xlu0 %1860
      %1862 = vrot.lane.b32.xlu0 %v1859, 112
      %v1863 = vpop.permute.xlu0 %1862
      %v1864 = vsel %vm154, %v1861, %v1863
      %v1865 = vsel %vm154, %v1863, %v1861
      %v1866 = vsel %vm124, %v1864, 0.0
      %v1867 = vsel %vm125, %v1865, 0.0
      %1868 = vrot.lane.b32.xlu0 %v1858, 16
      %v1869 = vpop.permute.xlu0 %1868
      %1870 = vrot.lane.b32.xlu0 %v1859, 16
      %v1871 = vpop.permute.xlu0 %1870
      %v1872 = vsel %vm163, %v1869, %v1871
      %v1873 = vsel %vm163, %v1871, %v1869
      %v1874 = vsel %vm126, %v1873, 0.0
      %v1875 = vsel %vm127, %v1872, 0.0
      %v1876 = vadd.f32 %v1866, %v1874
      %v1877 = vadd.f32 %v1867, %v1875
      %v1878 = vadd.f32 %v1876, %v1858
      %v1879 = vadd.f32 %v1877, %v1859
      %v1882 = vrot.slane %v1878, 1
      %v1883 = vrot.slane %v1879, 1
      %v1886 = vsel %vm176, %v1882, 0.0
      %v1887 = vsel %vm176, %v1883, 0.0
      %v1888 = vrot.slane %v1878, 7
      %v1889 = vrot.slane %v1879, 7
      %v1892 = vsel %vm183, 0.0, %v1888
      %v1893 = vsel %vm183, 0.0, %v1889
      %v1894 = vadd.f32 %v1886, %v1892
      %v1895 = vadd.f32 %v1887, %v1893
      %v1896 = vadd.f32 %v1894, %v1878
      %v1897 = vadd.f32 %v1895, %v1879
      %v1898 = vmul.f32 %v1896, 0.037037037
      %v1899 = vmul.f32 %v1897, 0.037037037
      %v1900 = vmul.f32 %v1590, %v1650
      %v1901 = vmul.f32 %v1591, %v1651
      %1902 = vrot.lane.b32.xlu0 %v1900, 127
      %v1903 = vpop.permute.xlu0 %1902
      %1904 = vrot.lane.b32.xlu0 %v1901, 127
      %v1905 = vpop.permute.xlu0 %1904
      %v1906 = vsel %vm134, %v1903, %v1905
      %v1907 = vsel %vm134, %v1905, %v1903
      %v1908 = vsel %vm120, %v1906, 0.0
      %v1909 = vsel %vm121, %v1907, 0.0
      %1910 = vrot.lane.b32.xlu0 %v1900, 1
      %v1911 = vpop.permute.xlu0 %1910
      %1912 = vrot.lane.b32.xlu0 %v1901, 1
      %v1913 = vpop.permute.xlu0 %1912
      %v1914 = vsel %vm143, %v1911, %v1913
      %v1915 = vsel %vm143, %v1913, %v1911
      %v1916 = vsel %vm122, %v1915, 0.0
      %v1917 = vsel %vm123, %v1914, 0.0
      %v1918 = vadd.f32 %v1908, %v1916
      %v1919 = vadd.f32 %v1909, %v1917
      %v1920 = vadd.f32 %v1918, %v1900
      %v1921 = vadd.f32 %v1919, %v1901
      %1922 = vrot.lane.b32.xlu0 %v1920, 112
      %v1923 = vpop.permute.xlu0 %1922
      %1924 = vrot.lane.b32.xlu0 %v1921, 112
      %v1925 = vpop.permute.xlu0 %1924
      %v1926 = vsel %vm154, %v1923, %v1925
      %v1927 = vsel %vm154, %v1925, %v1923
      %v1928 = vsel %vm124, %v1926, 0.0
      %v1929 = vsel %vm125, %v1927, 0.0
      %1930 = vrot.lane.b32.xlu0 %v1920, 16
      %v1931 = vpop.permute.xlu0 %1930
      %1932 = vrot.lane.b32.xlu0 %v1921, 16
      %v1933 = vpop.permute.xlu0 %1932
      %v1934 = vsel %vm163, %v1931, %v1933
      %v1935 = vsel %vm163, %v1933, %v1931
      %v1936 = vsel %vm126, %v1935, 0.0
      %v1937 = vsel %vm127, %v1934, 0.0
      %v1938 = vadd.f32 %v1928, %v1936
      %v1939 = vadd.f32 %v1929, %v1937
      %v1940 = vadd.f32 %v1938, %v1920
      %v1941 = vadd.f32 %v1939, %v1921
      %v1944 = vrot.slane %v1940, 1
      %v1945 = vrot.slane %v1941, 1
      %v1948 = vsel %vm176, %v1944, 0.0
      %v1949 = vsel %vm176, %v1945, 0.0
      %v1950 = vrot.slane %v1940, 7
      %v1951 = vrot.slane %v1941, 7
      %v1954 = vsel %vm183, 0.0, %v1950
      %v1955 = vsel %vm183, 0.0, %v1951
      %v1956 = vadd.f32 %v1948, %v1954
      %v1957 = vadd.f32 %v1949, %v1955
      %v1958 = vadd.f32 %v1956, %v1940
      %v1959 = vadd.f32 %v1957, %v1941
      %v1960 = vmul.f32 %v1958, 0.037037037
      %v1961 = vmul.f32 %v1959, 0.037037037
      %v1962 = vmul.f32 %v1628, %v1650
      %v1963 = vmul.f32 %v1629, %v1651
      %1964 = vrot.lane.b32.xlu0 %v1962, 127
      %v1965 = vpop.permute.xlu0 %1964
      %1966 = vrot.lane.b32.xlu0 %v1963, 127
      %v1967 = vpop.permute.xlu0 %1966
      %v1968 = vsel %vm134, %v1965, %v1967
      %v1969 = vsel %vm134, %v1967, %v1965
      %v1970 = vsel %vm120, %v1968, 0.0
      %v1971 = vsel %vm121, %v1969, 0.0
      %1972 = vrot.lane.b32.xlu0 %v1962, 1
      %v1973 = vpop.permute.xlu0 %1972
      %1974 = vrot.lane.b32.xlu0 %v1963, 1
      %v1975 = vpop.permute.xlu0 %1974
      %v1976 = vsel %vm143, %v1973, %v1975
      %v1977 = vsel %vm143, %v1975, %v1973
      %v1978 = vsel %vm122, %v1977, 0.0
      %v1979 = vsel %vm123, %v1976, 0.0
      %v1980 = vadd.f32 %v1970, %v1978
      %v1981 = vadd.f32 %v1971, %v1979
      %v1982 = vadd.f32 %v1980, %v1962
      %v1983 = vadd.f32 %v1981, %v1963
      %1984 = vrot.lane.b32.xlu0 %v1982, 112
      %v1985 = vpop.permute.xlu0 %1984
      %1986 = vrot.lane.b32.xlu0 %v1983, 112
      %v1987 = vpop.permute.xlu0 %1986
      %v1988 = vsel %vm154, %v1985, %v1987
      %v1989 = vsel %vm154, %v1987, %v1985
      %v1990 = vsel %vm124, %v1988, 0.0
      %v1991 = vsel %vm125, %v1989, 0.0
      %1992 = vrot.lane.b32.xlu0 %v1982, 16
      %v1993 = vpop.permute.xlu0 %1992
      %1994 = vrot.lane.b32.xlu0 %v1983, 16
      %v1995 = vpop.permute.xlu0 %1994
      %v1996 = vsel %vm163, %v1993, %v1995
      %v1997 = vsel %vm163, %v1995, %v1993
      %v1998 = vsel %vm126, %v1997, 0.0
      %v1999 = vsel %vm127, %v1996, 0.0
      %v2000 = vadd.f32 %v1990, %v1998
      %v2001 = vadd.f32 %v1991, %v1999
      %v2002 = vadd.f32 %v2000, %v1982
      %v2003 = vadd.f32 %v2001, %v1983
      %v2006 = vrot.slane %v2002, 1
      %v2007 = vrot.slane %v2003, 1
      %v2010 = vsel %vm176, %v2006, 0.0
      %v2011 = vsel %vm176, %v2007, 0.0
      %v2012 = vrot.slane %v2002, 7
      %v2013 = vrot.slane %v2003, 7
      %v2016 = vsel %vm183, 0.0, %v2012
      %v2017 = vsel %vm183, 0.0, %v2013
      %v2018 = vadd.f32 %v2010, %v2016
      %v2019 = vadd.f32 %v2011, %v2017
      %v2020 = vadd.f32 %v2018, %v2002
      %v2021 = vadd.f32 %v2019, %v2003
      %v2022 = vmul.f32 %v2020, 0.037037037
      %v2023 = vmul.f32 %v2021, 0.037037037
      %v2024 = vmul.f32 %v1774, %v1836
      %v2025 = vmul.f32 %v1775, %v1837
      %v2026 = vmul.f32 %v2022, %v2022
      %v2027 = vmul.f32 %v2023, %v2023
      %v2028 = vsub.f32 %v2024, %v2026
      %v2029 = vsub.f32 %v2025, %v2027
      %v2030 = vmul.f32 %v1712, %v2028
      %v2031 = vmul.f32 %v1713, %v2029
      %v2032 = vmul.f32 %v1898, %v1836
      %v2033 = vmul.f32 %v1899, %v1837
      %v2034 = vmul.f32 %v2022, %v1960
      %v2035 = vmul.f32 %v2023, %v1961
      %v2036 = vsub.f32 %v2032, %v2034
      %v2037 = vsub.f32 %v2033, %v2035
      %v2038 = vmul.f32 %v1898, %v2036
      %v2039 = vmul.f32 %v1899, %v2037
      %v2040 = vsub.f32 %v2030, %v2038
      %v2041 = vsub.f32 %v2031, %v2039
      %v2042 = vmul.f32 %v1898, %v2022
      %v2043 = vmul.f32 %v1899, %v2023
      %v2044 = vmul.f32 %v1774, %v1960
      %v2045 = vmul.f32 %v1775, %v1961
      %v2046 = vsub.f32 %v2042, %v2044
      %v2047 = vsub.f32 %v2043, %v2045
      %v2048 = vmul.f32 %v1960, %v2046
      %v2049 = vmul.f32 %v1961, %v2047
      %v2050 = vadd.f32 %v2040, %v2048
      %v2051 = vadd.f32 %v2041, %v2049
      %v2052 = vadd.f32 %v1712, %v1774
      %v2053 = vadd.f32 %v1713, %v1775
      %v2054 = vadd.f32 %v2052, %v1836
      %v2055 = vadd.f32 %v2053, %v1837
      %v2056 = vmul.f32 %v2054, 0.04
      %v2057 = vmul.f32 %v2055, 0.04
      %v2058 = vmul.f32 %v2056, %v2054
      %v2059 = vmul.f32 %v2057, %v2055
      %v2060 = vsub.f32 %v2050, %v2058
      %v2061 = vsub.f32 %v2051, %v2059
      %v2062 = vadd.f32 %v2060, %v2061
      %2063 = vadd.xlane.f32.xlu0 %v2062
      %v2064 = vpop.xlane.xlu0 %2063
      %v2065 = vrot.slane %v2064, 4
      %v2066 = vadd.f32 %v2064, %v2065
      %v2067 = vrot.slane %v2066, 2
      %v2068 = vadd.f32 %v2066, %v2067
      %v2069 = vrot.slane %v2068, 1
      %v2070 = vadd.f32 %v2068, %v2069
      %s2071 = vtos %v2070
      %v2072 = vstv %s2071
      %vm2073 = vcmask 16400
      %2074 = vst.msk [vmem:[%s114] sm:$0x1] %vm2073, %v2072
      %v2075 = vstv %s1549
      %2076 = vst.msk [vmem:[%s114 + $0x1] sm:$0x1] %vm2073, %v2075
      %s2077 = scalar_lea.vmem %s110, 48
      %v2078 = vld [vmem:[%s2077] sm:$0xff]
      %v2079 = vld [vmem:[%s2077 + $0x8] sm:$0xff]
      %2080 = vrot.lane.b32.xlu0 %v2078, 127
      %v2081 = vpop.permute.xlu0 %2080
      %2082 = vrot.lane.b32.xlu0 %v2079, 127
      %v2083 = vpop.permute.xlu0 %2082
      %v2084 = vsel %vm134, %v2081, %v2083
      %v2085 = vsel %vm134, %v2083, %v2081
      %v2086 = vsel %vm120, %v2084, 0.0
      %v2087 = vsel %vm121, %v2085, 0.0
      %2088 = vrot.lane.b32.xlu0 %v2078, 1
      %v2089 = vpop.permute.xlu0 %2088
      %2090 = vrot.lane.b32.xlu0 %v2079, 1
      %v2091 = vpop.permute.xlu0 %2090
      %v2092 = vsel %vm143, %v2089, %v2091
      %v2093 = vsel %vm143, %v2091, %v2089
      %v2094 = vsel %vm122, %v2093, 0.0
      %v2095 = vsel %vm123, %v2092, 0.0
      %v2096 = vadd.f32 %v2086, %v2094
      %v2097 = vadd.f32 %v2087, %v2095
      %2098 = vrot.lane.b32.xlu0 %v2078, 112
      %v2099 = vpop.permute.xlu0 %2098
      %2100 = vrot.lane.b32.xlu0 %v2079, 112
      %v2101 = vpop.permute.xlu0 %2100
      %v2102 = vsel %vm154, %v2099, %v2101
      %v2103 = vsel %vm154, %v2101, %v2099
      %v2104 = vsel %vm124, %v2102, 0.0
      %v2105 = vsel %vm125, %v2103, 0.0
      %2106 = vrot.lane.b32.xlu0 %v2078, 16
      %v2107 = vpop.permute.xlu0 %2106
      %2108 = vrot.lane.b32.xlu0 %v2079, 16
      %v2109 = vpop.permute.xlu0 %2108
      %v2110 = vsel %vm163, %v2107, %v2109
      %v2111 = vsel %vm163, %v2109, %v2107
      %v2112 = vsel %vm126, %v2111, 0.0
      %v2113 = vsel %vm127, %v2110, 0.0
      %v2114 = vadd.f32 %v2104, %v2112
      %v2115 = vadd.f32 %v2105, %v2113
      %v2118 = vrot.slane %v2078, 1
      %v2119 = vrot.slane %v2079, 1
      %v2122 = vsel %vm176, %v2118, 0.0
      %v2123 = vsel %vm176, %v2119, 0.0
      %v2124 = vrot.slane %v2078, 7
      %v2125 = vrot.slane %v2079, 7
      %v2128 = vsel %vm183, 0.0, %v2124
      %v2129 = vsel %vm183, 0.0, %v2125
      %v2130 = vadd.f32 %v2122, %v2128
      %v2131 = vadd.f32 %v2123, %v2129
      %2132 = vrot.lane.b32.xlu0 %v2096, 112
      %v2133 = vpop.permute.xlu0 %2132
      %2134 = vrot.lane.b32.xlu0 %v2097, 112
      %v2135 = vpop.permute.xlu0 %2134
      %v2136 = vsel %vm154, %v2133, %v2135
      %v2137 = vsel %vm154, %v2135, %v2133
      %v2138 = vsel %vm124, %v2136, 0.0
      %v2139 = vsel %vm125, %v2137, 0.0
      %2140 = vrot.lane.b32.xlu0 %v2096, 16
      %v2141 = vpop.permute.xlu0 %2140
      %2142 = vrot.lane.b32.xlu0 %v2097, 16
      %v2143 = vpop.permute.xlu0 %2142
      %v2144 = vsel %vm163, %v2141, %v2143
      %v2145 = vsel %vm163, %v2143, %v2141
      %v2146 = vsel %vm126, %v2145, 0.0
      %v2147 = vsel %vm127, %v2144, 0.0
      %v2148 = vadd.f32 %v2138, %v2146
      %v2149 = vadd.f32 %v2139, %v2147
      %v2150 = vadd.f32 %v2114, %v2096
      %v2151 = vadd.f32 %v2115, %v2097
      %v2152 = vmul.f32 %v2078, 6.0
      %v2153 = vmul.f32 %v2079, 6.0
      %v2154 = vsub.f32 %v2150, %v2152
      %v2155 = vsub.f32 %v2151, %v2153
      %v2158 = vrot.slane %v2154, 1
      %v2159 = vrot.slane %v2155, 1
      %v2162 = vsel %vm176, %v2158, 0.0
      %v2163 = vsel %vm176, %v2159, 0.0
      %v2164 = vrot.slane %v2154, 7
      %v2165 = vrot.slane %v2155, 7
      %v2168 = vsel %vm183, 0.0, %v2164
      %v2169 = vsel %vm183, 0.0, %v2165
      %v2170 = vadd.f32 %v2162, %v2168
      %v2171 = vadd.f32 %v2163, %v2169
      %v2172 = vadd.f32 %v2170, %v2148
      %v2173 = vadd.f32 %v2171, %v2149
      %v2174 = vmul.f32 %v2114, 6.0
      %v2175 = vmul.f32 %v2115, 6.0
      %v2176 = vsub.f32 %v2172, %v2174
      %v2177 = vsub.f32 %v2173, %v2175
      %v2178 = vmul.f32 %v2096, 6.0
      %v2179 = vmul.f32 %v2097, 6.0
      %v2180 = vsub.f32 %v2176, %v2178
      %v2181 = vsub.f32 %v2177, %v2179
      %v2182 = vmul.f32 %v2078, 24.0
      %v2183 = vmul.f32 %v2079, 24.0
      %v2184 = vadd.f32 %v2180, %v2182
      %v2185 = vadd.f32 %v2181, %v2183
      %v2186 = vand.u32 2147483647, %v2184
      %v2187 = vand.u32 2147483647, %v2185
      %v2188 = vadd.f32 %v2186, %v2187
      %2189 = vadd.xlane.f32.xlu0 %v2188
      %v2190 = vpop.xlane.xlu0 %2189
      %v2191 = vrot.slane %v2190, 4
      %v2192 = vadd.f32 %v2190, %v2191
      %v2193 = vrot.slane %v2192, 2
      %v2194 = vadd.f32 %v2192, %v2193
      %v2195 = vrot.slane %v2194, 1
      %v2196 = vadd.f32 %v2194, %v2195
      %s2197 = vtos %v2196
      %v2198 = vadd.f32 %v2130, %v2078
      %v2199 = vadd.f32 %v2131, %v2079
      %2200 = vrot.lane.b32.xlu0 %v2198, 112
      %v2201 = vpop.permute.xlu0 %2200
      %2202 = vrot.lane.b32.xlu0 %v2199, 112
      %v2203 = vpop.permute.xlu0 %2202
      %v2204 = vsel %vm154, %v2201, %v2203
      %v2205 = vsel %vm154, %v2203, %v2201
      %v2206 = vsel %vm124, %v2204, 0.0
      %v2207 = vsel %vm125, %v2205, 0.0
      %2208 = vrot.lane.b32.xlu0 %v2198, 16
      %v2209 = vpop.permute.xlu0 %2208
      %2210 = vrot.lane.b32.xlu0 %v2199, 16
      %v2211 = vpop.permute.xlu0 %2210
      %v2212 = vsel %vm163, %v2209, %v2211
      %v2213 = vsel %vm163, %v2211, %v2209
      %v2214 = vsel %vm126, %v2213, 0.0
      %v2215 = vsel %vm127, %v2212, 0.0
      %v2216 = vadd.f32 %v2206, %v2214
      %v2217 = vadd.f32 %v2207, %v2215
      %v2218 = vmul.f32 %v2198, 2.0
      %v2219 = vmul.f32 %v2199, 2.0
      %v2220 = vadd.f32 %v2216, %v2218
      %v2221 = vadd.f32 %v2217, %v2219
      %2222 = vrot.lane.b32.xlu0 %v2220, 127
      %v2223 = vpop.permute.xlu0 %2222
      %2224 = vrot.lane.b32.xlu0 %v2221, 127
      %v2225 = vpop.permute.xlu0 %2224
      %v2226 = vsel %vm134, %v2223, %v2225
      %v2227 = vsel %vm134, %v2225, %v2223
      %v2228 = vsel %vm120, %v2226, 0.0
      %v2229 = vsel %vm121, %v2227, 0.0
      %2230 = vrot.lane.b32.xlu0 %v2220, 1
      %v2231 = vpop.permute.xlu0 %2230
      %2232 = vrot.lane.b32.xlu0 %v2221, 1
      %v2233 = vpop.permute.xlu0 %2232
      %v2234 = vsel %vm143, %v2231, %v2233
      %v2235 = vsel %vm143, %v2233, %v2231
      %v2236 = vsel %vm122, %v2235, 0.0
      %v2237 = vsel %vm123, %v2234, 0.0
      %v2238 = vsub.f32 %v2228, %v2236
      %v2239 = vsub.f32 %v2229, %v2237
      %2240 = vrot.lane.b32.xlu0 %v2198, 127
      %v2241 = vpop.permute.xlu0 %2240
      %2242 = vrot.lane.b32.xlu0 %v2199, 127
      %v2243 = vpop.permute.xlu0 %2242
      %v2244 = vsel %vm134, %v2241, %v2243
      %v2245 = vsel %vm134, %v2243, %v2241
      %v2246 = vsel %vm120, %v2244, 0.0
      %v2247 = vsel %vm121, %v2245, 0.0
      %2248 = vrot.lane.b32.xlu0 %v2198, 1
      %v2249 = vpop.permute.xlu0 %2248
      %2250 = vrot.lane.b32.xlu0 %v2199, 1
      %v2251 = vpop.permute.xlu0 %2250
      %v2252 = vsel %vm143, %v2249, %v2251
      %v2253 = vsel %vm143, %v2251, %v2249
      %v2254 = vsel %vm122, %v2253, 0.0
      %v2255 = vsel %vm123, %v2252, 0.0
      %v2256 = vadd.f32 %v2246, %v2254
      %v2257 = vadd.f32 %v2247, %v2255
      %v2258 = vadd.f32 %v2256, %v2218
      %v2259 = vadd.f32 %v2257, %v2219
      %2260 = vrot.lane.b32.xlu0 %v2258, 112
      %v2261 = vpop.permute.xlu0 %2260
      %2262 = vrot.lane.b32.xlu0 %v2259, 112
      %v2263 = vpop.permute.xlu0 %2262
      %v2264 = vsel %vm154, %v2261, %v2263
      %v2265 = vsel %vm154, %v2263, %v2261
      %v2266 = vsel %vm124, %v2264, 0.0
      %v2267 = vsel %vm125, %v2265, 0.0
      %2268 = vrot.lane.b32.xlu0 %v2258, 16
      %v2269 = vpop.permute.xlu0 %2268
      %2270 = vrot.lane.b32.xlu0 %v2259, 16
      %v2271 = vpop.permute.xlu0 %2270
      %v2272 = vsel %vm163, %v2269, %v2271
      %v2273 = vsel %vm163, %v2271, %v2269
      %v2274 = vsel %vm126, %v2273, 0.0
      %v2275 = vsel %vm127, %v2272, 0.0
      %v2276 = vsub.f32 %v2266, %v2274
      %v2277 = vsub.f32 %v2267, %v2275
      %v2278 = vadd.f32 %v2148, %v2114
      %v2279 = vadd.f32 %v2149, %v2115
      %v2280 = vadd.f32 %v2278, %v2096
      %v2281 = vadd.f32 %v2279, %v2097
      %v2282 = vadd.f32 %v2280, %v2078
      %v2283 = vadd.f32 %v2281, %v2079
      %v2286 = vrot.slane %v2282, 1
      %v2287 = vrot.slane %v2283, 1
      %v2290 = vsel %vm176, %v2286, 0.0
      %v2291 = vsel %vm176, %v2287, 0.0
      %v2292 = vrot.slane %v2282, 7
      %v2293 = vrot.slane %v2283, 7
      %v2296 = vsel %vm183, 0.0, %v2292
      %v2297 = vsel %vm183, 0.0, %v2293
      %v2298 = vsub.f32 %v2290, %v2296
      %v2299 = vsub.f32 %v2291, %v2297
      %v2300 = vmul.f32 %v2238, %v2238
      %v2301 = vmul.f32 %v2239, %v2239
      %2302 = vrot.lane.b32.xlu0 %v2300, 127
      %v2303 = vpop.permute.xlu0 %2302
      %2304 = vrot.lane.b32.xlu0 %v2301, 127
      %v2305 = vpop.permute.xlu0 %2304
      %v2306 = vsel %vm134, %v2303, %v2305
      %v2307 = vsel %vm134, %v2305, %v2303
      %v2308 = vsel %vm120, %v2306, 0.0
      %v2309 = vsel %vm121, %v2307, 0.0
      %2310 = vrot.lane.b32.xlu0 %v2300, 1
      %v2311 = vpop.permute.xlu0 %2310
      %2312 = vrot.lane.b32.xlu0 %v2301, 1
      %v2313 = vpop.permute.xlu0 %2312
      %v2314 = vsel %vm143, %v2311, %v2313
      %v2315 = vsel %vm143, %v2313, %v2311
      %v2316 = vsel %vm122, %v2315, 0.0
      %v2317 = vsel %vm123, %v2314, 0.0
      %v2318 = vadd.f32 %v2308, %v2316
      %v2319 = vadd.f32 %v2309, %v2317
      %v2320 = vadd.f32 %v2318, %v2300
      %v2321 = vadd.f32 %v2319, %v2301
      %2322 = vrot.lane.b32.xlu0 %v2320, 112
      %v2323 = vpop.permute.xlu0 %2322
      %2324 = vrot.lane.b32.xlu0 %v2321, 112
      %v2325 = vpop.permute.xlu0 %2324
      %v2326 = vsel %vm154, %v2323, %v2325
      %v2327 = vsel %vm154, %v2325, %v2323
      %v2328 = vsel %vm124, %v2326, 0.0
      %v2329 = vsel %vm125, %v2327, 0.0
      %2330 = vrot.lane.b32.xlu0 %v2320, 16
      %v2331 = vpop.permute.xlu0 %2330
      %2332 = vrot.lane.b32.xlu0 %v2321, 16
      %v2333 = vpop.permute.xlu0 %2332
      %v2334 = vsel %vm163, %v2331, %v2333
      %v2335 = vsel %vm163, %v2333, %v2331
      %v2336 = vsel %vm126, %v2335, 0.0
      %v2337 = vsel %vm127, %v2334, 0.0
      %v2338 = vadd.f32 %v2328, %v2336
      %v2339 = vadd.f32 %v2329, %v2337
      %v2340 = vadd.f32 %v2338, %v2320
      %v2341 = vadd.f32 %v2339, %v2321
      %v2344 = vrot.slane %v2340, 1
      %v2345 = vrot.slane %v2341, 1
      %v2348 = vsel %vm176, %v2344, 0.0
      %v2349 = vsel %vm176, %v2345, 0.0
      %v2350 = vrot.slane %v2340, 7
      %v2351 = vrot.slane %v2341, 7
      %v2354 = vsel %vm183, 0.0, %v2350
      %v2355 = vsel %vm183, 0.0, %v2351
      %v2356 = vadd.f32 %v2348, %v2354
      %v2357 = vadd.f32 %v2349, %v2355
      %v2358 = vadd.f32 %v2356, %v2340
      %v2359 = vadd.f32 %v2357, %v2341
      %v2360 = vmul.f32 %v2358, 0.037037037
      %v2361 = vmul.f32 %v2359, 0.037037037
      %v2362 = vmul.f32 %v2276, %v2276
      %v2363 = vmul.f32 %v2277, %v2277
      %2364 = vrot.lane.b32.xlu0 %v2362, 127
      %v2365 = vpop.permute.xlu0 %2364
      %2366 = vrot.lane.b32.xlu0 %v2363, 127
      %v2367 = vpop.permute.xlu0 %2366
      %v2368 = vsel %vm134, %v2365, %v2367
      %v2369 = vsel %vm134, %v2367, %v2365
      %v2370 = vsel %vm120, %v2368, 0.0
      %v2371 = vsel %vm121, %v2369, 0.0
      %2372 = vrot.lane.b32.xlu0 %v2362, 1
      %v2373 = vpop.permute.xlu0 %2372
      %2374 = vrot.lane.b32.xlu0 %v2363, 1
      %v2375 = vpop.permute.xlu0 %2374
      %v2376 = vsel %vm143, %v2373, %v2375
      %v2377 = vsel %vm143, %v2375, %v2373
      %v2378 = vsel %vm122, %v2377, 0.0
      %v2379 = vsel %vm123, %v2376, 0.0
      %v2380 = vadd.f32 %v2370, %v2378
      %v2381 = vadd.f32 %v2371, %v2379
      %v2382 = vadd.f32 %v2380, %v2362
      %v2383 = vadd.f32 %v2381, %v2363
      %2384 = vrot.lane.b32.xlu0 %v2382, 112
      %v2385 = vpop.permute.xlu0 %2384
      %2386 = vrot.lane.b32.xlu0 %v2383, 112
      %v2387 = vpop.permute.xlu0 %2386
      %v2388 = vsel %vm154, %v2385, %v2387
      %v2389 = vsel %vm154, %v2387, %v2385
      %v2390 = vsel %vm124, %v2388, 0.0
      %v2391 = vsel %vm125, %v2389, 0.0
      %2392 = vrot.lane.b32.xlu0 %v2382, 16
      %v2393 = vpop.permute.xlu0 %2392
      %2394 = vrot.lane.b32.xlu0 %v2383, 16
      %v2395 = vpop.permute.xlu0 %2394
      %v2396 = vsel %vm163, %v2393, %v2395
      %v2397 = vsel %vm163, %v2395, %v2393
      %v2398 = vsel %vm126, %v2397, 0.0
      %v2399 = vsel %vm127, %v2396, 0.0
      %v2400 = vadd.f32 %v2390, %v2398
      %v2401 = vadd.f32 %v2391, %v2399
      %v2402 = vadd.f32 %v2400, %v2382
      %v2403 = vadd.f32 %v2401, %v2383
      %v2406 = vrot.slane %v2402, 1
      %v2407 = vrot.slane %v2403, 1
      %v2410 = vsel %vm176, %v2406, 0.0
      %v2411 = vsel %vm176, %v2407, 0.0
      %v2412 = vrot.slane %v2402, 7
      %v2413 = vrot.slane %v2403, 7
      %v2416 = vsel %vm183, 0.0, %v2412
      %v2417 = vsel %vm183, 0.0, %v2413
      %v2418 = vadd.f32 %v2410, %v2416
      %v2419 = vadd.f32 %v2411, %v2417
      %v2420 = vadd.f32 %v2418, %v2402
      %v2421 = vadd.f32 %v2419, %v2403
      %v2422 = vmul.f32 %v2420, 0.037037037
      %v2423 = vmul.f32 %v2421, 0.037037037
      %v2424 = vmul.f32 %v2298, %v2298
      %v2425 = vmul.f32 %v2299, %v2299
      %2426 = vrot.lane.b32.xlu0 %v2424, 127
      %v2427 = vpop.permute.xlu0 %2426
      %2428 = vrot.lane.b32.xlu0 %v2425, 127
      %v2429 = vpop.permute.xlu0 %2428
      %v2430 = vsel %vm134, %v2427, %v2429
      %v2431 = vsel %vm134, %v2429, %v2427
      %v2432 = vsel %vm120, %v2430, 0.0
      %v2433 = vsel %vm121, %v2431, 0.0
      %2434 = vrot.lane.b32.xlu0 %v2424, 1
      %v2435 = vpop.permute.xlu0 %2434
      %2436 = vrot.lane.b32.xlu0 %v2425, 1
      %v2437 = vpop.permute.xlu0 %2436
      %v2438 = vsel %vm143, %v2435, %v2437
      %v2439 = vsel %vm143, %v2437, %v2435
      %v2440 = vsel %vm122, %v2439, 0.0
      %v2441 = vsel %vm123, %v2438, 0.0
      %v2442 = vadd.f32 %v2432, %v2440
      %v2443 = vadd.f32 %v2433, %v2441
      %v2444 = vadd.f32 %v2442, %v2424
      %v2445 = vadd.f32 %v2443, %v2425
      %2446 = vrot.lane.b32.xlu0 %v2444, 112
      %v2447 = vpop.permute.xlu0 %2446
      %2448 = vrot.lane.b32.xlu0 %v2445, 112
      %v2449 = vpop.permute.xlu0 %2448
      %v2450 = vsel %vm154, %v2447, %v2449
      %v2451 = vsel %vm154, %v2449, %v2447
      %v2452 = vsel %vm124, %v2450, 0.0
      %v2453 = vsel %vm125, %v2451, 0.0
      %2454 = vrot.lane.b32.xlu0 %v2444, 16
      %v2455 = vpop.permute.xlu0 %2454
      %2456 = vrot.lane.b32.xlu0 %v2445, 16
      %v2457 = vpop.permute.xlu0 %2456
      %v2458 = vsel %vm163, %v2455, %v2457
      %v2459 = vsel %vm163, %v2457, %v2455
      %v2460 = vsel %vm126, %v2459, 0.0
      %v2461 = vsel %vm127, %v2458, 0.0
      %v2462 = vadd.f32 %v2452, %v2460
      %v2463 = vadd.f32 %v2453, %v2461
      %v2464 = vadd.f32 %v2462, %v2444
      %v2465 = vadd.f32 %v2463, %v2445
      %v2468 = vrot.slane %v2464, 1
      %v2469 = vrot.slane %v2465, 1
      %v2472 = vsel %vm176, %v2468, 0.0
      %v2473 = vsel %vm176, %v2469, 0.0
      %v2474 = vrot.slane %v2464, 7
      %v2475 = vrot.slane %v2465, 7
      %v2478 = vsel %vm183, 0.0, %v2474
      %v2479 = vsel %vm183, 0.0, %v2475
      %v2480 = vadd.f32 %v2472, %v2478
      %v2481 = vadd.f32 %v2473, %v2479
      %v2482 = vadd.f32 %v2480, %v2464
      %v2483 = vadd.f32 %v2481, %v2465
      %v2484 = vmul.f32 %v2482, 0.037037037
      %v2485 = vmul.f32 %v2483, 0.037037037
      %v2486 = vmul.f32 %v2238, %v2276
      %v2487 = vmul.f32 %v2239, %v2277
      %2488 = vrot.lane.b32.xlu0 %v2486, 127
      %v2489 = vpop.permute.xlu0 %2488
      %2490 = vrot.lane.b32.xlu0 %v2487, 127
      %v2491 = vpop.permute.xlu0 %2490
      %v2492 = vsel %vm134, %v2489, %v2491
      %v2493 = vsel %vm134, %v2491, %v2489
      %v2494 = vsel %vm120, %v2492, 0.0
      %v2495 = vsel %vm121, %v2493, 0.0
      %2496 = vrot.lane.b32.xlu0 %v2486, 1
      %v2497 = vpop.permute.xlu0 %2496
      %2498 = vrot.lane.b32.xlu0 %v2487, 1
      %v2499 = vpop.permute.xlu0 %2498
      %v2500 = vsel %vm143, %v2497, %v2499
      %v2501 = vsel %vm143, %v2499, %v2497
      %v2502 = vsel %vm122, %v2501, 0.0
      %v2503 = vsel %vm123, %v2500, 0.0
      %v2504 = vadd.f32 %v2494, %v2502
      %v2505 = vadd.f32 %v2495, %v2503
      %v2506 = vadd.f32 %v2504, %v2486
      %v2507 = vadd.f32 %v2505, %v2487
      %2508 = vrot.lane.b32.xlu0 %v2506, 112
      %v2509 = vpop.permute.xlu0 %2508
      %2510 = vrot.lane.b32.xlu0 %v2507, 112
      %v2511 = vpop.permute.xlu0 %2510
      %v2512 = vsel %vm154, %v2509, %v2511
      %v2513 = vsel %vm154, %v2511, %v2509
      %v2514 = vsel %vm124, %v2512, 0.0
      %v2515 = vsel %vm125, %v2513, 0.0
      %2516 = vrot.lane.b32.xlu0 %v2506, 16
      %v2517 = vpop.permute.xlu0 %2516
      %2518 = vrot.lane.b32.xlu0 %v2507, 16
      %v2519 = vpop.permute.xlu0 %2518
      %v2520 = vsel %vm163, %v2517, %v2519
      %v2521 = vsel %vm163, %v2519, %v2517
      %v2522 = vsel %vm126, %v2521, 0.0
      %v2523 = vsel %vm127, %v2520, 0.0
      %v2524 = vadd.f32 %v2514, %v2522
      %v2525 = vadd.f32 %v2515, %v2523
      %v2526 = vadd.f32 %v2524, %v2506
      %v2527 = vadd.f32 %v2525, %v2507
      %v2530 = vrot.slane %v2526, 1
      %v2531 = vrot.slane %v2527, 1
      %v2534 = vsel %vm176, %v2530, 0.0
      %v2535 = vsel %vm176, %v2531, 0.0
      %v2536 = vrot.slane %v2526, 7
      %v2537 = vrot.slane %v2527, 7
      %v2540 = vsel %vm183, 0.0, %v2536
      %v2541 = vsel %vm183, 0.0, %v2537
      %v2542 = vadd.f32 %v2534, %v2540
      %v2543 = vadd.f32 %v2535, %v2541
      %v2544 = vadd.f32 %v2542, %v2526
      %v2545 = vadd.f32 %v2543, %v2527
      %v2546 = vmul.f32 %v2544, 0.037037037
      %v2547 = vmul.f32 %v2545, 0.037037037
      %v2548 = vmul.f32 %v2238, %v2298
      %v2549 = vmul.f32 %v2239, %v2299
      %2550 = vrot.lane.b32.xlu0 %v2548, 127
      %v2551 = vpop.permute.xlu0 %2550
      %2552 = vrot.lane.b32.xlu0 %v2549, 127
      %v2553 = vpop.permute.xlu0 %2552
      %v2554 = vsel %vm134, %v2551, %v2553
      %v2555 = vsel %vm134, %v2553, %v2551
      %v2556 = vsel %vm120, %v2554, 0.0
      %v2557 = vsel %vm121, %v2555, 0.0
      %2558 = vrot.lane.b32.xlu0 %v2548, 1
      %v2559 = vpop.permute.xlu0 %2558
      %2560 = vrot.lane.b32.xlu0 %v2549, 1
      %v2561 = vpop.permute.xlu0 %2560
      %v2562 = vsel %vm143, %v2559, %v2561
      %v2563 = vsel %vm143, %v2561, %v2559
      %v2564 = vsel %vm122, %v2563, 0.0
      %v2565 = vsel %vm123, %v2562, 0.0
      %v2566 = vadd.f32 %v2556, %v2564
      %v2567 = vadd.f32 %v2557, %v2565
      %v2568 = vadd.f32 %v2566, %v2548
      %v2569 = vadd.f32 %v2567, %v2549
      %2570 = vrot.lane.b32.xlu0 %v2568, 112
      %v2571 = vpop.permute.xlu0 %2570
      %2572 = vrot.lane.b32.xlu0 %v2569, 112
      %v2573 = vpop.permute.xlu0 %2572
      %v2574 = vsel %vm154, %v2571, %v2573
      %v2575 = vsel %vm154, %v2573, %v2571
      %v2576 = vsel %vm124, %v2574, 0.0
      %v2577 = vsel %vm125, %v2575, 0.0
      %2578 = vrot.lane.b32.xlu0 %v2568, 16
      %v2579 = vpop.permute.xlu0 %2578
      %2580 = vrot.lane.b32.xlu0 %v2569, 16
      %v2581 = vpop.permute.xlu0 %2580
      %v2582 = vsel %vm163, %v2579, %v2581
      %v2583 = vsel %vm163, %v2581, %v2579
      %v2584 = vsel %vm126, %v2583, 0.0
      %v2585 = vsel %vm127, %v2582, 0.0
      %v2586 = vadd.f32 %v2576, %v2584
      %v2587 = vadd.f32 %v2577, %v2585
      %v2588 = vadd.f32 %v2586, %v2568
      %v2589 = vadd.f32 %v2587, %v2569
      %v2592 = vrot.slane %v2588, 1
      %v2593 = vrot.slane %v2589, 1
      %v2596 = vsel %vm176, %v2592, 0.0
      %v2597 = vsel %vm176, %v2593, 0.0
      %v2598 = vrot.slane %v2588, 7
      %v2599 = vrot.slane %v2589, 7
      %v2602 = vsel %vm183, 0.0, %v2598
      %v2603 = vsel %vm183, 0.0, %v2599
      %v2604 = vadd.f32 %v2596, %v2602
      %v2605 = vadd.f32 %v2597, %v2603
      %v2606 = vadd.f32 %v2604, %v2588
      %v2607 = vadd.f32 %v2605, %v2589
      %v2608 = vmul.f32 %v2606, 0.037037037
      %v2609 = vmul.f32 %v2607, 0.037037037
      %v2610 = vmul.f32 %v2276, %v2298
      %v2611 = vmul.f32 %v2277, %v2299
      %2612 = vrot.lane.b32.xlu0 %v2610, 127
      %v2613 = vpop.permute.xlu0 %2612
      %2614 = vrot.lane.b32.xlu0 %v2611, 127
      %v2615 = vpop.permute.xlu0 %2614
      %v2616 = vsel %vm134, %v2613, %v2615
      %v2617 = vsel %vm134, %v2615, %v2613
      %v2618 = vsel %vm120, %v2616, 0.0
      %v2619 = vsel %vm121, %v2617, 0.0
      %2620 = vrot.lane.b32.xlu0 %v2610, 1
      %v2621 = vpop.permute.xlu0 %2620
      %2622 = vrot.lane.b32.xlu0 %v2611, 1
      %v2623 = vpop.permute.xlu0 %2622
      %v2624 = vsel %vm143, %v2621, %v2623
      %v2625 = vsel %vm143, %v2623, %v2621
      %v2626 = vsel %vm122, %v2625, 0.0
      %v2627 = vsel %vm123, %v2624, 0.0
      %v2628 = vadd.f32 %v2618, %v2626
      %v2629 = vadd.f32 %v2619, %v2627
      %v2630 = vadd.f32 %v2628, %v2610
      %v2631 = vadd.f32 %v2629, %v2611
      %2632 = vrot.lane.b32.xlu0 %v2630, 112
      %v2633 = vpop.permute.xlu0 %2632
      %2634 = vrot.lane.b32.xlu0 %v2631, 112
      %v2635 = vpop.permute.xlu0 %2634
      %v2636 = vsel %vm154, %v2633, %v2635
      %v2637 = vsel %vm154, %v2635, %v2633
      %v2638 = vsel %vm124, %v2636, 0.0
      %v2639 = vsel %vm125, %v2637, 0.0
      %2640 = vrot.lane.b32.xlu0 %v2630, 16
      %v2641 = vpop.permute.xlu0 %2640
      %2642 = vrot.lane.b32.xlu0 %v2631, 16
      %v2643 = vpop.permute.xlu0 %2642
      %v2644 = vsel %vm163, %v2641, %v2643
      %v2645 = vsel %vm163, %v2643, %v2641
      %v2646 = vsel %vm126, %v2645, 0.0
      %v2647 = vsel %vm127, %v2644, 0.0
      %v2648 = vadd.f32 %v2638, %v2646
      %v2649 = vadd.f32 %v2639, %v2647
      %v2650 = vadd.f32 %v2648, %v2630
      %v2651 = vadd.f32 %v2649, %v2631
      %v2654 = vrot.slane %v2650, 1
      %v2655 = vrot.slane %v2651, 1
      %v2658 = vsel %vm176, %v2654, 0.0
      %v2659 = vsel %vm176, %v2655, 0.0
      %v2660 = vrot.slane %v2650, 7
      %v2661 = vrot.slane %v2651, 7
      %v2664 = vsel %vm183, 0.0, %v2660
      %v2665 = vsel %vm183, 0.0, %v2661
      %v2666 = vadd.f32 %v2658, %v2664
      %v2667 = vadd.f32 %v2659, %v2665
      %v2668 = vadd.f32 %v2666, %v2650
      %v2669 = vadd.f32 %v2667, %v2651
      %v2670 = vmul.f32 %v2668, 0.037037037
      %v2671 = vmul.f32 %v2669, 0.037037037
      %v2672 = vmul.f32 %v2422, %v2484
      %v2673 = vmul.f32 %v2423, %v2485
      %v2674 = vmul.f32 %v2670, %v2670
      %v2675 = vmul.f32 %v2671, %v2671
      %v2676 = vsub.f32 %v2672, %v2674
      %v2677 = vsub.f32 %v2673, %v2675
      %v2678 = vmul.f32 %v2360, %v2676
      %v2679 = vmul.f32 %v2361, %v2677
      %v2680 = vmul.f32 %v2546, %v2484
      %v2681 = vmul.f32 %v2547, %v2485
      %v2682 = vmul.f32 %v2670, %v2608
      %v2683 = vmul.f32 %v2671, %v2609
      %v2684 = vsub.f32 %v2680, %v2682
      %v2685 = vsub.f32 %v2681, %v2683
      %v2686 = vmul.f32 %v2546, %v2684
      %v2687 = vmul.f32 %v2547, %v2685
      %v2688 = vsub.f32 %v2678, %v2686
      %v2689 = vsub.f32 %v2679, %v2687
      %v2690 = vmul.f32 %v2546, %v2670
      %v2691 = vmul.f32 %v2547, %v2671
      %v2692 = vmul.f32 %v2422, %v2608
      %v2693 = vmul.f32 %v2423, %v2609
      %v2694 = vsub.f32 %v2690, %v2692
      %v2695 = vsub.f32 %v2691, %v2693
      %v2696 = vmul.f32 %v2608, %v2694
      %v2697 = vmul.f32 %v2609, %v2695
      %v2698 = vadd.f32 %v2688, %v2696
      %v2699 = vadd.f32 %v2689, %v2697
      %v2700 = vadd.f32 %v2360, %v2422
      %v2701 = vadd.f32 %v2361, %v2423
      %v2702 = vadd.f32 %v2700, %v2484
      %v2703 = vadd.f32 %v2701, %v2485
      %v2704 = vmul.f32 %v2702, 0.04
      %v2705 = vmul.f32 %v2703, 0.04
      %v2706 = vmul.f32 %v2704, %v2702
      %v2707 = vmul.f32 %v2705, %v2703
      %v2708 = vsub.f32 %v2698, %v2706
      %v2709 = vsub.f32 %v2699, %v2707
      %v2710 = vadd.f32 %v2708, %v2709
      %2711 = vadd.xlane.f32.xlu0 %v2710
      %v2712 = vpop.xlane.xlu0 %2711
      %v2713 = vrot.slane %v2712, 4
      %v2714 = vadd.f32 %v2712, %v2713
      %v2715 = vrot.slane %v2714, 2
      %v2716 = vadd.f32 %v2714, %v2715
      %v2717 = vrot.slane %v2716, 1
      %v2718 = vadd.f32 %v2716, %v2717
      %s2719 = vtos %v2718
      %v2720 = vstv %s2719
      %vm2721 = vcmask 24600
      %2722 = vst.msk [vmem:[%s114] sm:$0x1] %vm2721, %v2720
      %v2723 = vstv %s2197
      %2724 = vst.msk [vmem:[%s114 + $0x1] sm:$0x1] %vm2721, %v2723
      %p2725 = scmp.lt.s32.totalorder %s12, 1
      %s2726 = scalar_select %p2725, %s12, 1
      %s2727 = smul.addr %s2726, 2
      %s2728 = scalar_lea.vmem %s1, %s2727
      // Predicated region
      $region25: #{edge_enhancement_forward.2} parent=23 // pred_check
        %p2729 = pneg %p56
      $region26: #{edge_enhancement_forward.2} parent=23 // pred_check_branch
        %2731 = sbr.rel (%p2729) target = $region28
      $region27: #{edge_enhancement_forward.2} parent=23 // pred_region
        _
      $region28: #{edge_enhancement_forward.2} parent=23 // pred_fallthru
        _
    $region24: #{edge_enhancement_forward.2} parent=5 // pred_fallthru
      _
    %p2732 = scmp.le.s32.totalorder 2, %s7
    // Predicated region
    $region29: #{edge_enhancement_forward.2} parent=5 // pred_check
      %p2733 = pneg %p2732
    $region30: #{edge_enhancement_forward.2} parent=5 // pred_check_branch
      %2735 = sbr.rel (%p2733) target = $region32
    $region31: #{edge_enhancement_forward.2} parent=5 // pred_region
      %s2736 = ssub.s32 %s7, 2
      // Predicated region
      $region33: #{edge_enhancement_forward.2} parent=31 // pred_check
        %p2737 = pneg %p62
      $region34: #{edge_enhancement_forward.2} parent=31 // pred_check_branch
        %2739 = sbr.rel (%p2737) target = $region36
      $region35: #{edge_enhancement_forward.2} parent=31 // pred_region
        %p2740 = scmp.lt.s32.totalorder %s13, 1
        %s2741 = scalar_select %p2740, %s13, 1
        %s2742 = smul.addr %s2741, 2
        %s2743 = scalar_lea.vmem %s1, %s2742
      $region36: #{edge_enhancement_forward.2} parent=31 // pred_fallthru
        _
    $region32: #{edge_enhancement_forward.2} parent=5 // pred_fallthru
      _
  $region6: #{edge_enhancement_forward.2} parent=0 // loop_footer
    %s11 = sadd.s32 1, %s7
  $region7: #{edge_enhancement_forward.2} parent=0 // loop_footer_branch
    %6 = sbr.rel target = $region3
  $region8: #{edge_enhancement_forward.2} parent=0 // loop_exit
    _

</llo_original>
